<compile_context>
chip_gen: v6e
topology: v6e:2x2x1
jax: 0.10.0
libtpu: 0.0.40
codegen_flags: <defaults>
</compile_context>

<pallas_src>
import functools

import numpy as np

import jax
import jax.numpy as jnp
from jax.experimental import pallas as pl
from jax.experimental.pallas import tpu as pltpu


def _round_up(x, m):
    return (x + m - 1) // m * m


def _pick_spatial_tile(C, Np, look, s_total, vmem_budget):
    """Largest multiple-of-16 flattened-row tile TQ whose working set fits."""
    per_row = 2 * (C * 2) + 2 * 4 + 2 * Np * 4       # 2x-buffered x rows + mask + f32 temps
    fixed = (9 * C * Np * 2                          # fused tap weights (single buffered)
             + Np * 4 + 8 * Np * 4                   # conv bias + GAP accumulator
             + 2 * look * C * 2                      # lookahead halo rows (2x buffered)
             + (2 << 20))                            # slack for Mosaic internal scratch
    tq = (vmem_budget - fixed) // per_row
    tq = max(16, min(tq, 2048, _round_up(s_total, 16)))
    return int(tq) // 16 * 16


def _fe_mmoe_kernel(xov_ref, mask_ref, w9_ref, cb_ref, px_ref, gw_ref, gb_ref,
                    out_ref, acc_ref, *, TQ, Wp, Np, E, F, inv_hw):
    """Grid = (batch, spatial row-tiles).

    Per step: 9 accumulated (TQ, C) @ (C, Np) MXU matmuls over row-shifted
    windows of the flattened padded image tile (direct 3x3 conv, all experts
    fused along N), bias + ReLU once, masked partial GAP into VMEM scratch.
    Last tile: gate linear + exact softmax + weighted expert mixture, written
    lane-dense into the (1, 1, OUTW) output block.
    """
    t = pl.program_id(1)
    nt = pl.num_programs(1)

    @pl.when(t == 0)
    def _init():
        acc_ref[...] = jnp.zeros_like(acc_ref)

    xt = xov_ref[0, 0]                                     # (TQ + LOOK, C) bf16
    pre = jnp.zeros((TQ, Np), jnp.float32)
    for dy in range(3):
        for dx in range(3):
            off = dy * Wp + dx                             # tap shift in flattened coords
            pre = pre + jnp.dot(xt[off:off + TQ, :], w9_ref[dy * 3 + dx],
                                preferred_element_type=jnp.float32)
    act = jnp.maximum(pre + cb_ref[...], 0.0) * mask_ref[...]     # bias+ReLU+validity
    acc_ref[...] += act.reshape(TQ // 8, 8, Np).sum(axis=0)       # VALU-only partial GAP

    @pl.when(t == nt - 1)
    def _finalize():
        # ---- gate: GAP(x) @ Wg + bg, exact softmax (once per batch) ----
        logits = jnp.dot(px_ref[0], gw_ref[...],
                         preferred_element_type=jnp.float32) + gb_ref[...]    # (1, E)
        m = jnp.max(logits, axis=1, keepdims=True)
        p = jnp.exp(logits - m)
        wts = p / jnp.sum(p, axis=1, keepdims=True)                           # (1, E)

        # ---- expert GAP features + weighted mixture ----
        pooled = jnp.sum(acc_ref[...], axis=0, keepdims=True) * inv_hw        # (1, Np)
        mix = jnp.zeros((1, F), jnp.float32)
        for e in range(E):                               # E is small: static unroll
            mix = mix + wts[:, e:e + 1] * pooled[:, e * F:(e + 1) * F]

        out_ref[...] = jnp.zeros_like(out_ref)           # lane-dense packed output slab
        out_ref[0, :, 0:F] = mix
        out_ref[0, :, F:F + E] = wts


def fe_mmoe_mcd_forward(x, task_ind, conv_w, conv_b, gate_w, gate_b,
                        *, vmem_budget=32 * 1024 * 1024):
    """x: (B, C, H, W) NCHW.  Returns (features (B, F), task_weight (B, 1, E))."""
    assert task_ind in (1, 2)
    B, C, H, W = x.shape
    E, F = conv_w.shape[0], conv_w.shape[1]
    Hp, Wp = H + 2, W + 2
    S = Hp * Wp                        # flattened spatially-padded positions
    EF = E * F
    Np = _round_up(EF, 128)            # lane-aligned fused expert width
    OUTW = _round_up(F + E, 128)       # lane-dense packed output width
    LOOK = _round_up(2 * Wp + 2, 16)   # max 3x3 tap offset, rounded for layout

    TQ = _pick_spatial_tile(C, Np, LOOK, S, vmem_budget)
    num_t = -(-S // TQ)
    S_pad = num_t * TQ
    S_ext = S_pad + LOOK
    TL = TQ + LOOK

    # --- glue (bf16, no im2col, no K padding): NCHW -> NHWC -> pad(1) -> flatten ---
    x_nhwc = jnp.transpose(x, (0, 2, 3, 1)).astype(jnp.bfloat16)
    xf = jnp.pad(x_nhwc, ((0, 0), (1, 1), (1, 1), (0, 0))).reshape(B, S, C)
    xf = jnp.pad(xf, ((0, 0), (0, S_ext - S), (0, 0)))
    # overlapped row tiles with a LOOK-row lookahead halo (~LOOK/TQ read overhead)
    xov = jnp.stack([xf[:, t * TQ:t * TQ + TL, :] for t in range(num_t)], axis=1)

    # validity mask over flattened padded positions (static constant)
    q = np.arange(S_pad)
    maskv = (((q // Wp) < H) & ((q % Wp) < W)).astype(np.float32).reshape(S_pad, 1)
    maskv = jnp.asarray(maskv)

    # fused per-tap conv weights: (E,F,C,3,3) -> (9, C, E*F), lane-pad to Np
    w9 = jnp.transpose(conv_w, (3, 4, 2, 0, 1)).reshape(9, C, EF)
    w9 = jnp.pad(w9, ((0, 0), (0, 0), (0, Np - EF))).astype(jnp.bfloat16)
    cb = jnp.pad(conv_b.reshape(1, EF), ((0, 0), (0, Np - EF))).astype(jnp.float32)

    # gate GAP stays in the wrapper: tiny (B, 1, C) f32 stream
    pooled_x = x.mean(axis=(2, 3)).reshape(B, 1, C).astype(jnp.float32)
    gw = gate_w[task_ind - 1].astype(jnp.float32)                  # (C, E)
    gb = gate_b[task_ind - 1].reshape(1, E).astype(jnp.float32)    # (1, E)

    kernel = functools.partial(_fe_mmoe_kernel, TQ=TQ, Wp=Wp, Np=Np, E=E, F=F,
                               inv_hw=1.0 / (H * W))

    cost = pl.CostEstimate(
        flops=2 * B * S_pad * C * Np * 9 + 2 * B * C * E + 2 * B * E * F,
        transcendentals=B * E,
        bytes_accessed=int(xov.size * 2 + maskv.size * 4 + w9.size * 2
                           + cb.size * 4 + pooled_x.size * 4 + gw.size * 4
                           + gb.size * 4 + B * OUTW * 4))

    out = pl.pallas_call(
        kernel,
        out_shape=jax.ShapeDtypeStruct((B, 1, OUTW), jnp.float32),
        grid_spec=pltpu.PrefetchScalarGridSpec(
            num_scalar_prefetch=0,
            grid=(B, num_t),
            in_specs=[
                pl.BlockSpec((1, 1, TL, C), lambda b, t: (b, t, 0, 0)),   # x tile + halo
                pl.BlockSpec((TQ, 1), lambda b, t: (t, 0)),               # validity mask
                pl.BlockSpec((9, C, Np), lambda b, t: (0, 0, 0),
                             pipeline_mode=pl.Buffered(1)),               # tap weights
                pl.BlockSpec((1, Np), lambda b, t: (0, 0),
                             pipeline_mode=pl.Buffered(1)),               # conv bias
                pl.BlockSpec((1, 1, C), lambda b, t: (b, 0, 0)),          # gate GAP(x)
                pl.BlockSpec((C, E), lambda b, t: (0, 0),
                             pipeline_mode=pl.Buffered(1)),               # gate W
                pl.BlockSpec((1, E), lambda b, t: (0, 0),
                             pipeline_mode=pl.Buffered(1)),               # gate b
            ],
            out_specs=pl.BlockSpec((1, 1, OUTW), lambda b, t: (b, 0, 0)),
            scratch_shapes=[pltpu.VMEM((8, Np), jnp.float32)],            # partial GAP
        ),
        compiler_params=pltpu.CompilerParams(
            dimension_semantics=("parallel", "arbitrary"),
            vmem_limit_bytes=48 * 1024 * 1024),
        cost_estimate=cost,
    )(xov, maskv, w9, cb, pooled_x, gw, gb)

    features = out[:, 0, :F]                  # (B, F)
    task_weight = out[:, :, F:F + E]          # (B, 1, E) == softmax(...).unsqueeze(1)
    return features, task_weight


def reference(x, task_ind, conv_w, conv_b, gate_w, gate_b):
    """Pure-JAX f32 reference of the same forward (correctness check)."""
    B, C, H, W = x.shape
    E, F = conv_w.shape[0], conv_w.shape[1]
    x_nhwc = jnp.transpose(x, (0, 2, 3, 1))
    x_pad = jnp.pad(x_nhwc, ((0, 0), (1, 1), (1, 1), (0, 0)))
    feats = []
    for e in range(E):
        acc = jnp.zeros((B, H, W, F), jnp.float32)
        for dy in range(3):
            for dx in range(3):
                acc = acc + jnp.einsum('bhwc,cf->bhwf',
                                       x_pad[:, dy:dy + H, dx:dx + W, :],
                                       conv_w[e, :, :, dy, dx].T,
                                       precision='highest')
        acc = jnp.maximum(acc + conv_b[e], 0.0)
        feats.append(acc.mean(axis=(1, 2)))                      # (B, F)
    feats = jnp.stack(feats, axis=1)                             # (B, E, F)
    pooled = x_nhwc.mean(axis=(1, 2))                            # (B, C)
    logits = pooled @ gate_w[task_ind - 1] + gate_b[task_ind - 1]
    w = jax.nn.softmax(logits, axis=1)[:, None, :]               # (B, 1, E)
    features = jnp.matmul(w, feats).squeeze(1)                   # (B, F)
    return features, w


if __name__ == "__main__":
    B, C, H, W = 2, 4, 16, 16      # batch, in_channels, spatial
    E, F = 4, 32                   # num experts, expert feature dim

    key = jax.random.PRNGKey(0)
    kx, kcw, kcb, kgw, kgb = jax.random.split(key, 5)
    x = jax.random.normal(kx, (B, C, H, W), jnp.float32)
    conv_w = 0.1 * jax.random.normal(kcw, (E, F, C, 3, 3), jnp.float32)  # expert convs
    conv_b = 0.1 * jax.random.normal(kcb, (E, F), jnp.float32)
    gate_w = 0.1 * jax.random.normal(kgw, (2, C, E), jnp.float32)        # two task gates
    gate_b = 0.1 * jax.random.normal(kgb, (2, E), jnp.float32)

    ok = True
    for task_ind in (1, 2):
        feats, tw = fe_mmoe_mcd_forward(x, task_ind, conv_w, conv_b, gate_w, gate_b)
        jax.block_until_ready((feats, tw))
        rf, rw = reference(x, task_ind, conv_w, conv_b, gate_w, gate_b)
        assert feats.shape == (B, F) and tw.shape == (B, 1, E)
        ok &= bool(jnp.allclose(feats, rf, rtol=2e-2, atol=5e-3))
        ok &= bool(jnp.allclose(tw, rw, rtol=2e-2, atol=2e-3))
    assert ok
    print("KERNEL_OK")
</pallas_src>

<mosaic_0001>
module attributes {stable_mosaic.version = 11 : i64} {
  func.func @_fe_mmoe_kernel(%arg0: i32, %arg1: i32, %arg2: memref<1x1x384x4xbf16, #tpu.memory_space<vmem>>, %arg3: memref<336x1xf32, #tpu.memory_space<vmem>>, %arg4: memref<9x4x128xbf16, #tpu.memory_space<vmem>>, %arg5: memref<1x128xf32, #tpu.memory_space<vmem>>, %arg6: memref<1x1x4xf32, #tpu.memory_space<vmem>>, %arg7: memref<4x4xf32, #tpu.memory_space<vmem>>, %arg8: memref<1x4xf32, #tpu.memory_space<vmem>>, %arg9: memref<1x1x128xf32, #tpu.memory_space<vmem>>, %arg10: memref<8x128xf32, #tpu.memory_space<vmem>>) attributes {dimension_semantics = [#tpu.dimension_semantics<parallel>, #tpu.dimension_semantics<arbitrary>], iteration_bounds = array<i64: 2, 1>, scalar_prefetch = 0 : i64, scratch_operands = 1 : i64, tpu.core_type = #tpu.core_type<tc>, window_params = [{transform_indices = @transform_0, window_bounds = array<i64: 1, 1, 384, 4>}, {transform_indices = @transform_1, window_bounds = array<i64: 336, 1>}, {pipeline_mode = #tpu.pipeline_mode<synchronous>, transform_indices = @transform_2, window_bounds = array<i64: 9, 4, 128>}, {pipeline_mode = #tpu.pipeline_mode<synchronous>, transform_indices = @transform_3, window_bounds = array<i64: 1, 128>}, {transform_indices = @transform_4, window_bounds = array<i64: 1, 1, 4>}, {pipeline_mode = #tpu.pipeline_mode<synchronous>, transform_indices = @transform_5, window_bounds = array<i64: 4, 4>}, {pipeline_mode = #tpu.pipeline_mode<synchronous>, transform_indices = @transform_6, window_bounds = array<i64: 1, 4>}, {transform_indices = @transform_7, window_bounds = array<i64: 1, 1, 128>}]} {
    %c0_i32 = arith.constant 0 : i32
    %0 = arith.cmpi eq, %arg1, %c0_i32 : i32
    %1 = arith.extui %0 : i1 to i32
    %c0_i32_0 = arith.constant 0 : i32
    %2 = arith.cmpi ne, %1, %c0_i32_0 : i32
    scf.if %2 {
      %cst_44 = arith.constant 0.000000e+00 : f32
      %67 = vector.broadcast %cst_44 : f32 to vector<8x128xf32>
      %c0_45 = arith.constant 0 : index
      %c0_46 = arith.constant 0 : index
      %68 = vector.load %arg10[%c0_45, %c0_46] : memref<8x128xf32, #tpu.memory_space<vmem>>, vector<8x128xf32>
      tpu.vector_store %arg10[%c0_45, %c0_46], %67 {strides = array<i32>} : memref<8x128xf32, #tpu.memory_space<vmem>>, vector<8x128xf32>,
    } else {
    }
    %c0 = arith.constant 0 : index
    %c0_1 = arith.constant 0 : index
    %c0_2 = arith.constant 0 : index
    %c0_3 = arith.constant 0 : index
    %3 = vector.load %arg2[%c0, %c0_1, %c0_2, %c0_3] : memref<1x1x384x4xbf16, #tpu.memory_space<vmem>>, vector<1x1x384x4xbf16>
    %4 = vector.shape_cast %3 : vector<1x1x384x4xbf16> to vector<384x4xbf16>
    %cst = arith.constant 0.000000e+00 : f32
    %5 = vector.broadcast %cst : f32 to vector<336x128xf32>
    %6 = vector.extract_strided_slice %4 {offsets = [0, 0], sizes = [336, 4], strides = [1, 1]} : vector<384x4xbf16> to vector<336x4xbf16>
    %c0_4 = arith.constant 0 : index
    %c0_5 = arith.constant 0 : index
    %c0_6 = arith.constant 0 : index
    %7 = vector.load %arg4[%c0_4, %c0_5, %c0_6] : memref<9x4x128xbf16, #tpu.memory_space<vmem>>, vector<1x4x128xbf16>
    %8 = vector.shape_cast %7 : vector<1x4x128xbf16> to vector<4x128xbf16>
    %cst_7 = arith.constant dense<0.000000e+00> : vector<336x128xf32>
    %9 = tpu.matmul %6, %8, %cst_7 {dimension_numbers = #tpu.dot_dimension_numbers<[1], [0], [0], [1], [0, 0, 1, 1], [], []>} : vector<336x4xbf16>, vector<4x128xbf16>, vector<336x128xf32> -> vector<336x128xf32>
    %10 = arith.addf %5, %9 : vector<336x128xf32>
    %11 = vector.extract_strided_slice %4 {offsets = [1, 0], sizes = [336, 4], strides = [1, 1]} : vector<384x4xbf16> to vector<336x4xbf16>
    %c1 = arith.constant 1 : index
    %c0_8 = arith.constant 0 : index
    %c0_9 = arith.constant 0 : index
    %12 = vector.load %arg4[%c1, %c0_8, %c0_9] : memref<9x4x128xbf16, #tpu.memory_space<vmem>>, vector<1x4x128xbf16>
    %13 = vector.shape_cast %12 : vector<1x4x128xbf16> to vector<4x128xbf16>
    %cst_10 = arith.constant dense<0.000000e+00> : vector<336x128xf32>
    %14 = tpu.matmul %11, %13, %cst_10 {dimension_numbers = #tpu.dot_dimension_numbers<[1], [0], [0], [1], [0, 0, 1, 1], [], []>} : vector<336x4xbf16>, vector<4x128xbf16>, vector<336x128xf32> -> vector<336x128xf32>
    %15 = arith.addf %10, %14 : vector<336x128xf32>
    %16 = vector.extract_strided_slice %4 {offsets = [2, 0], sizes = [336, 4], strides = [1, 1]} : vector<384x4xbf16> to vector<336x4xbf16>
    %c2 = arith.constant 2 : index
    %c0_11 = arith.constant 0 : index
    %c0_12 = arith.constant 0 : index
    %17 = vector.load %arg4[%c2, %c0_11, %c0_12] : memref<9x4x128xbf16, #tpu.memory_space<vmem>>, vector<1x4x128xbf16>
    %18 = vector.shape_cast %17 : vector<1x4x128xbf16> to vector<4x128xbf16>
    %cst_13 = arith.constant dense<0.000000e+00> : vector<336x128xf32>
    %19 = tpu.matmul %16, %18, %cst_13 {dimension_numbers = #tpu.dot_dimension_numbers<[1], [0], [0], [1], [0, 0, 1, 1], [], []>} : vector<336x4xbf16>, vector<4x128xbf16>, vector<336x128xf32> -> vector<336x128xf32>
    %20 = arith.addf %15, %19 : vector<336x128xf32>
    %21 = vector.extract_strided_slice %4 {offsets = [18, 0], sizes = [336, 4], strides = [1, 1]} : vector<384x4xbf16> to vector<336x4xbf16>
    %c3 = arith.constant 3 : index
    %c0_14 = arith.constant 0 : index
    %c0_15 = arith.constant 0 : index
    %22 = vector.load %arg4[%c3, %c0_14, %c0_15] : memref<9x4x128xbf16, #tpu.memory_space<vmem>>, vector<1x4x128xbf16>
    %23 = vector.shape_cast %22 : vector<1x4x128xbf16> to vector<4x128xbf16>
    %cst_16 = arith.constant dense<0.000000e+00> : vector<336x128xf32>
    %24 = tpu.matmul %21, %23, %cst_16 {dimension_numbers = #tpu.dot_dimension_numbers<[1], [0], [0], [1], [0, 0, 1, 1], [], []>} : vector<336x4xbf16>, vector<4x128xbf16>, vector<336x128xf32> -> vector<336x128xf32>
    %25 = arith.addf %20, %24 : vector<336x128xf32>
    %26 = vector.extract_strided_slice %4 {offsets = [19, 0], sizes = [336, 4], strides = [1, 1]} : vector<384x4xbf16> to vector<336x4xbf16>
    %c4 = arith.constant 4 : index
    %c0_17 = arith.constant 0 : index
    %c0_18 = arith.constant 0 : index
    %27 = vector.load %arg4[%c4, %c0_17, %c0_18] : memref<9x4x128xbf16, #tpu.memory_space<vmem>>, vector<1x4x128xbf16>
    %28 = vector.shape_cast %27 : vector<1x4x128xbf16> to vector<4x128xbf16>
    %cst_19 = arith.constant dense<0.000000e+00> : vector<336x128xf32>
    %29 = tpu.matmul %26, %28, %cst_19 {dimension_numbers = #tpu.dot_dimension_numbers<[1], [0], [0], [1], [0, 0, 1, 1], [], []>} : vector<336x4xbf16>, vector<4x128xbf16>, vector<336x128xf32> -> vector<336x128xf32>
    %30 = arith.addf %25, %29 : vector<336x128xf32>
    %31 = vector.extract_strided_slice %4 {offsets = [20, 0], sizes = [336, 4], strides = [1, 1]} : vector<384x4xbf16> to vector<336x4xbf16>
    %c5 = arith.constant 5 : index
    %c0_20 = arith.constant 0 : index
    %c0_21 = arith.constant 0 : index
    %32 = vector.load %arg4[%c5, %c0_20, %c0_21] : memref<9x4x128xbf16, #tpu.memory_space<vmem>>, vector<1x4x128xbf16>
    %33 = vector.shape_cast %32 : vector<1x4x128xbf16> to vector<4x128xbf16>
    %cst_22 = arith.constant dense<0.000000e+00> : vector<336x128xf32>
    %34 = tpu.matmul %31, %33, %cst_22 {dimension_numbers = #tpu.dot_dimension_numbers<[1], [0], [0], [1], [0, 0, 1, 1], [], []>} : vector<336x4xbf16>, vector<4x128xbf16>, vector<336x128xf32> -> vector<336x128xf32>
    %35 = arith.addf %30, %34 : vector<336x128xf32>
    %36 = vector.extract_strided_slice %4 {offsets = [36, 0], sizes = [336, 4], strides = [1, 1]} : vector<384x4xbf16> to vector<336x4xbf16>
    %c6 = arith.constant 6 : index
    %c0_23 = arith.constant 0 : index
    %c0_24 = arith.constant 0 : index
    %37 = vector.load %arg4[%c6, %c0_23, %c0_24] : memref<9x4x128xbf16, #tpu.memory_space<vmem>>, vector<1x4x128xbf16>
    %38 = vector.shape_cast %37 : vector<1x4x128xbf16> to vector<4x128xbf16>
    %cst_25 = arith.constant dense<0.000000e+00> : vector<336x128xf32>
    %39 = tpu.matmul %36, %38, %cst_25 {dimension_numbers = #tpu.dot_dimension_numbers<[1], [0], [0], [1], [0, 0, 1, 1], [], []>} : vector<336x4xbf16>, vector<4x128xbf16>, vector<336x128xf32> -> vector<336x128xf32>
    %40 = arith.addf %35, %39 : vector<336x128xf32>
    %41 = vector.extract_strided_slice %4 {offsets = [37, 0], sizes = [336, 4], strides = [1, 1]} : vector<384x4xbf16> to vector<336x4xbf16>
    %c7 = arith.constant 7 : index
    %c0_26 = arith.constant 0 : index
    %c0_27 = arith.constant 0 : index
    %42 = vector.load %arg4[%c7, %c0_26, %c0_27] : memref<9x4x128xbf16, #tpu.memory_space<vmem>>, vector<1x4x128xbf16>
    %43 = vector.shape_cast %42 : vector<1x4x128xbf16> to vector<4x128xbf16>
    %cst_28 = arith.constant dense<0.000000e+00> : vector<336x128xf32>
    %44 = tpu.matmul %41, %43, %cst_28 {dimension_numbers = #tpu.dot_dimension_numbers<[1], [0], [0], [1], [0, 0, 1, 1], [], []>} : vector<336x4xbf16>, vector<4x128xbf16>, vector<336x128xf32> -> vector<336x128xf32>
    %45 = arith.addf %40, %44 : vector<336x128xf32>
    %46 = vector.extract_strided_slice %4 {offsets = [38, 0], sizes = [336, 4], strides = [1, 1]} : vector<384x4xbf16> to vector<336x4xbf16>
    %c8 = arith.constant 8 : index
    %c0_29 = arith.constant 0 : index
    %c0_30 = arith.constant 0 : index
    %47 = vector.load %arg4[%c8, %c0_29, %c0_30] : memref<9x4x128xbf16, #tpu.memory_space<vmem>>, vector<1x4x128xbf16>
    %48 = vector.shape_cast %47 : vector<1x4x128xbf16> to vector<4x128xbf16>
    %cst_31 = arith.constant dense<0.000000e+00> : vector<336x128xf32>
    %49 = tpu.matmul %46, %48, %cst_31 {dimension_numbers = #tpu.dot_dimension_numbers<[1], [0], [0], [1], [0, 0, 1, 1], [], []>} : vector<336x4xbf16>, vector<4x128xbf16>, vector<336x128xf32> -> vector<336x128xf32>
    %50 = arith.addf %45, %49 : vector<336x128xf32>
    %c0_32 = arith.constant 0 : index
    %c0_33 = arith.constant 0 : index
    %51 = vector.load %arg5[%c0_32, %c0_33] : memref<1x128xf32, #tpu.memory_space<vmem>>, vector<1x128xf32>
    %52 = vector.broadcast %51 : vector<1x128xf32> to vector<336x128xf32>
    %53 = arith.addf %50, %52 : vector<336x128xf32>
    %cst_34 = arith.constant 0.000000e+00 : f32
    %54 = vector.broadcast %cst_34 : f32 to vector<336x128xf32>
    %55 = arith.maximumf %53, %54 : vector<336x128xf32>
    %c0_35 = arith.constant 0 : index
    %c0_36 = arith.constant 0 : index
    %56 = vector.load %arg3[%c0_35, %c0_36] : memref<336x1xf32, #tpu.memory_space<vmem>>, vector<336x1xf32>
    %57 = vector.broadcast %56 : vector<336x1xf32> to vector<336x128xf32>
    %58 = arith.mulf %55, %57 : vector<336x128xf32>
    %c0_37 = arith.constant 0 : index
    %c0_38 = arith.constant 0 : index
    %59 = vector.load %arg10[%c0_37, %c0_38] : memref<8x128xf32, #tpu.memory_space<vmem>>, vector<8x128xf32>
    %60 = vector.shape_cast %58 : vector<336x128xf32> to vector<42x8x128xf32>
    %cst_39 = arith.constant dense<0.000000e+00> : vector<8x128xf32>
    %61 = vector.multi_reduction <add>, %60, %cst_39 [0] : vector<42x8x128xf32> to vector<8x128xf32>
    %62 = arith.addf %59, %61 : vector<8x128xf32>
    %c0_40 = arith.constant 0 : index
    %c0_41 = arith.constant 0 : index
    %63 = vector.load %arg10[%c0_40, %c0_41] : memref<8x128xf32, #tpu.memory_space<vmem>>, vector<8x128xf32>
    tpu.vector_store %arg10[%c0_40, %c0_41], %62 {strides = array<i32>} : memref<8x128xf32, #tpu.memory_space<vmem>>, vector<8x128xf32>,
    %c0_i32_42 = arith.constant 0 : i32
    %64 = arith.cmpi eq, %arg1, %c0_i32_42 : i32
    %65 = arith.extui %64 : i1 to i32
    %c0_i32_43 = arith.constant 0 : i32
    %66 = arith.cmpi ne, %65, %c0_i32_43 : i32
    scf.if %66 {
      %c0_44 = arith.constant 0 : index
      %c0_45 = arith.constant 0 : index
      %c0_46 = arith.constant 0 : index
      %67 = vector.load %arg6[%c0_44, %c0_45, %c0_46] : memref<1x1x4xf32, #tpu.memory_space<vmem>>, vector<1x1x4xf32>
      %68 = vector.shape_cast %67 : vector<1x1x4xf32> to vector<1x4xf32>
      %c0_47 = arith.constant 0 : index
      %c0_48 = arith.constant 0 : index
      %69 = vector.load %arg7[%c0_47, %c0_48] : memref<4x4xf32, #tpu.memory_space<vmem>>, vector<4x4xf32>
      %cst_49 = arith.constant dense<0.000000e+00> : vector<1x4xf32>
      %70 = tpu.matmul %68, %69, %cst_49 {dimension_numbers = #tpu.dot_dimension_numbers<[1], [0], [0], [1], [0, 0, 1, 1], [], []>} : vector<1x4xf32>, vector<4x4xf32>, vector<1x4xf32> -> vector<1x4xf32>
      %c0_50 = arith.constant 0 : index
      %c0_51 = arith.constant 0 : index
      %71 = vector.load %arg8[%c0_50, %c0_51] : memref<1x4xf32, #tpu.memory_space<vmem>>, vector<1x4xf32>
      %72 = arith.addf %70, %71 : vector<1x4xf32>
      %cst_52 = arith.constant dense<0xFF800000> : vector<1xf32>
      %73 = vector.multi_reduction <maximumf>, %72, %cst_52 [1] : vector<1x4xf32> to vector<1xf32>
      %74 = vector.shape_cast %73 : vector<1xf32> to vector<1x1xf32>
      %75 = vector.broadcast %74 : vector<1x1xf32> to vector<1x4xf32>
      %76 = arith.subf %72, %75 : vector<1x4xf32>
      %77 = math.exp %76 : vector<1x4xf32>
      %cst_53 = arith.constant dense<0.000000e+00> : vector<1xf32>
      %78 = vector.multi_reduction <add>, %77, %cst_53 [1] : vector<1x4xf32> to vector<1xf32>
      %79 = vector.shape_cast %78 : vector<1xf32> to vector<1x1xf32>
      %80 = vector.broadcast %79 : vector<1x1xf32> to vector<1x4xf32>
      %81 = arith.divf %77, %80 : vector<1x4xf32>
      %c0_54 = arith.constant 0 : index
      %c0_55 = arith.constant 0 : index
      %82 = vector.load %arg10[%c0_54, %c0_55] : memref<8x128xf32, #tpu.memory_space<vmem>>, vector<8x128xf32>
      %cst_56 = arith.constant dense<0.000000e+00> : vector<128xf32>
      %83 = vector.multi_reduction <add>, %82, %cst_56 [0] : vector<8x128xf32> to vector<128xf32>
      %84 = vector.shape_cast %83 : vector<128xf32> to vector<1x128xf32>
      %cst_57 = arith.constant 3.906250e-03 : f32
      %85 = vector.broadcast %cst_57 : f32 to vector<1x128xf32>
      %86 = arith.mulf %84, %85 : vector<1x128xf32>
      %cst_58 = arith.constant 0.000000e+00 : f32
      %87 = vector.broadcast %cst_58 : f32 to vector<1x32xf32>
      %88 = vector.extract_strided_slice %81 {offsets = [0, 0], sizes = [1, 1], strides = [1, 1]} : vector<1x4xf32> to vector<1x1xf32>
      %89 = vector.extract_strided_slice %86 {offsets = [0, 0], sizes = [1, 32], strides = [1, 1]} : vector<1x128xf32> to vector<1x32xf32>
      %90 = vector.broadcast %88 : vector<1x1xf32> to vector<1x32xf32>
      %91 = arith.mulf %90, %89 : vector<1x32xf32>
      %92 = arith.addf %87, %91 : vector<1x32xf32>
      %93 = vector.extract_strided_slice %81 {offsets = [0, 1], sizes = [1, 1], strides = [1, 1]} : vector<1x4xf32> to vector<1x1xf32>
      %94 = vector.extract_strided_slice %86 {offsets = [0, 32], sizes = [1, 32], strides = [1, 1]} : vector<1x128xf32> to vector<1x32xf32>
      %95 = vector.broadcast %93 : vector<1x1xf32> to vector<1x32xf32>
      %96 = arith.mulf %95, %94 : vector<1x32xf32>
      %97 = arith.addf %92, %96 : vector<1x32xf32>
      %98 = vector.extract_strided_slice %81 {offsets = [0, 2], sizes = [1, 1], strides = [1, 1]} : vector<1x4xf32> to vector<1x1xf32>
      %99 = vector.extract_strided_slice %86 {offsets = [0, 64], sizes = [1, 32], strides = [1, 1]} : vector<1x128xf32> to vector<1x32xf32>
      %100 = vector.broadcast %98 : vector<1x1xf32> to vector<1x32xf32>
      %101 = arith.mulf %100, %99 : vector<1x32xf32>
      %102 = arith.addf %97, %101 : vector<1x32xf32>
      %103 = vector.extract_strided_slice %81 {offsets = [0, 3], sizes = [1, 1], strides = [1, 1]} : vector<1x4xf32> to vector<1x1xf32>
      %104 = vector.extract_strided_slice %86 {offsets = [0, 96], sizes = [1, 32], strides = [1, 1]} : vector<1x128xf32> to vector<1x32xf32>
      %105 = vector.broadcast %103 : vector<1x1xf32> to vector<1x32xf32>
      %106 = arith.mulf %105, %104 : vector<1x32xf32>
      %107 = arith.addf %102, %106 : vector<1x32xf32>
      %cst_59 = arith.constant 0.000000e+00 : f32
      %108 = vector.broadcast %cst_59 : f32 to vector<1x1x128xf32>
      %c0_60 = arith.constant 0 : index
      %c0_61 = arith.constant 0 : index
      %c0_62 = arith.constant 0 : index
      %109 = vector.load %arg9[%c0_60, %c0_61, %c0_62] : memref<1x1x128xf32, #tpu.memory_space<vmem>>, vector<1x1x128xf32>
      tpu.vector_store %arg9[%c0_60, %c0_61, %c0_62], %108 {strides = array<i32>} : memref<1x1x128xf32, #tpu.memory_space<vmem>>, vector<1x1x128xf32>,
      %c0_63 = arith.constant 0 : index
      %c0_64 = arith.constant 0 : index
      %c0_65 = arith.constant 0 : index
      %110 = vector.load %arg9[%c0_63, %c0_64, %c0_65] : memref<1x1x128xf32, #tpu.memory_space<vmem>>, vector<1x1x32xf32>
      %111 = vector.shape_cast %110 : vector<1x1x32xf32> to vector<1x32xf32>
      %112 = vector.shape_cast %107 : vector<1x32xf32> to vector<1x1x32xf32>
      tpu.vector_store %arg9[%c0_63, %c0_64, %c0_65], %112 {strides = array<i32>} : memref<1x1x128xf32, #tpu.memory_space<vmem>>, vector<1x1x32xf32>,
      %c0_66 = arith.constant 0 : index
      %c0_67 = arith.constant 0 : index
      %c32 = arith.constant 32 : index
      %113 = vector.load %arg9[%c0_66, %c0_67, %c32] : memref<1x1x128xf32, #tpu.memory_space<vmem>>, vector<1x1x4xf32>
      %114 = vector.shape_cast %113 : vector<1x1x4xf32> to vector<1x4xf32>
      %115 = vector.shape_cast %81 : vector<1x4xf32> to vector<1x1x4xf32>
      tpu.vector_store %arg9[%c0_66, %c0_67, %c32], %115 {strides = array<i32>} : memref<1x1x128xf32, #tpu.memory_space<vmem>>, vector<1x1x4xf32>,
    } else {
    }
    return
  }
  func.func @transform_0(%arg0: i32, %arg1: i32) -> (i32, i32, i32, i32) {
    %c0_i32 = arith.constant 0 : i32
    %c0_i32_0 = arith.constant 0 : i32
    %c0_i32_1 = arith.constant 0 : i32
    return %arg0, %arg1, %c0_i32, %c0_i32_0 : i32, i32, i32, i32
  }
  func.func @transform_1(%arg0: i32, %arg1: i32) -> (i32, i32) {
    %c0_i32 = arith.constant 0 : i32
    %c0_i32_0 = arith.constant 0 : i32
    return %arg1, %c0_i32 : i32, i32
  }
  func.func @transform_2(%arg0: i32, %arg1: i32) -> (i32, i32, i32) {
    %c0_i32 = arith.constant 0 : i32
    %c0_i32_0 = arith.constant 0 : i32
    %c0_i32_1 = arith.constant 0 : i32
    %c0_i32_2 = arith.constant 0 : i32
    return %c0_i32, %c0_i32_0, %c0_i32_1 : i32, i32, i32
  }
  func.func @transform_3(%arg0: i32, %arg1: i32) -> (i32, i32) {
    %c0_i32 = arith.constant 0 : i32
    %c0_i32_0 = arith.constant 0 : i32
    %c0_i32_1 = arith.constant 0 : i32
    return %c0_i32, %c0_i32_0 : i32, i32
  }
  func.func @transform_4(%arg0: i32, %arg1: i32) -> (i32, i32, i32) {
    %c0_i32 = arith.constant 0 : i32
    %c0_i32_0 = arith.constant 0 : i32
    %c0_i32_1 = arith.constant 0 : i32
    return %arg0, %c0_i32, %c0_i32_0 : i32, i32, i32
  }
  func.func @transform_5(%arg0: i32, %arg1: i32) -> (i32, i32) {
    %c0_i32 = arith.constant 0 : i32
    %c0_i32_0 = arith.constant 0 : i32
    %c0_i32_1 = arith.constant 0 : i32
    return %c0_i32, %c0_i32_0 : i32, i32
  }
  func.func @transform_6(%arg0: i32, %arg1: i32) -> (i32, i32) {
    %c0_i32 = arith.constant 0 : i32
    %c0_i32_0 = arith.constant 0 : i32
    %c0_i32_1 = arith.constant 0 : i32
    return %c0_i32, %c0_i32_0 : i32, i32
  }
  func.func @transform_7(%arg0: i32, %arg1: i32) -> (i32, i32, i32) {
    %c0_i32 = arith.constant 0 : i32
    %c0_i32_0 = arith.constant 0 : i32
    %c0_i32_1 = arith.constant 0 : i32
    return %arg0, %c0_i32, %c0_i32_0 : i32, i32, i32
  }
}

</mosaic_0001>

<llo_original>
// kernel: tpu_custom_call.1
$region0: #{tpu_custom_call.1}
  #allocation0 [shape = 'u32[]', space=smem, size = 0x4, offset = 0x4, fixed_abs, tag = 'smem constant byte address 0x4 - core index']
  #allocation1 [shape = 'u32[144,128]{1,0:T(1,128)}', space=vmem, size = 0x12000, scoped, tag = 'internal scratch']
  #allocation2 [shape = 'f32[8,128]{1,0:T(8,128)}', space=vmem, size = 0x1000, scoped, tag = 'scratch operand']
  %s0 = inlined_call_operand.vmem [shape: bf16[2,1,384,4], index: 0, kind: input, shape index: {}]
  %s1 = inlined_call_operand.vmem [shape: f32[336,1], index: 1, kind: input, shape index: {}]
  %s2 = inlined_call_operand.vmem [shape: bf16[9,4,128], index: 2, kind: input, shape index: {}]
  %s3 = inlined_call_operand.vmem [shape: f32[1,128], index: 3, kind: input, shape index: {}]
  %s4 = inlined_call_operand.vmem [shape: f32[2,1,4], index: 4, kind: input, shape index: {}]
  %s5 = inlined_call_operand.vmem [shape: f32[4,4], index: 5, kind: input, shape index: {}]
  %s6 = inlined_call_operand.vmem [shape: f32[1,4], index: 6, kind: input, shape index: {}]
  %s7 = inlined_call_operand.hbm [shape: f32[2,1,128], index: 7, kind: output, shape index: {}]
  %s8 = sld [smem:[#allocation0]]
  $region69: #{tpu_custom_call.1} parent=0
    _
  %s10 = ssub.s32 1, %s8
  %s11 = scalar_select 0, %s10, %s8
  $region1: #{tpu_custom_call.1} parent=0
    #allocation3 [shape = 'u8[1024]{0}', space=vmem, size = 0x400, scoped, tag = 'output window, operand 0']
    #allocation4 [shape = 's32[2]{0}', space=sflag, size = 0x8, scoped, tag = 'scoped memory for tpu_custom_call.1']
    %12 = vsyncpa [#allocation4], 0
    %s13 = scalar_lea.sflag [#allocation4], 1
    %14 = vsyncpa %s13, 0
    loop: start=0, step=1, limit=4
    $region2: #{tpu_custom_call.1} parent=1 // loop_pre_header
      _
    $region3: #{tpu_custom_call.1} parent=1 // loop_header
      %s16 = sphi 0, %s20
      %p17 = scmp.ge.s32.totalorder %s16, 4
      %s23 = sphi 0, %s35
      %s24 = sphi 0, %s31
      %s25 = sphi 0, %s23
      %s26 = sphi 0, %s24
      %s27 = sphi 0, %s25
      %s28 = sphi 0, %s26
      %s40 = sphi 0, %s42
      %s43 = sphi 0, %s40
      %s44 = sphi 0, %s43
      %s60 = sphi 0, %s44
      %s66 = sphi 0, %s68
      %s69 = sphi 0, %s66
      %s70 = sphi 0, %s69
      %s86 = sphi 0, %s70
      %s90 = sphi 0, %s90
      %s92 = sphi 0, %s90
      %s93 = sphi 0, %s92
      %s107 = sphi 0, %s93
      %s111 = sphi 0, %s111
      %s113 = sphi 0, %s111
      %s114 = sphi 0, %s113
      %s128 = sphi 0, %s114
      %s134 = sphi 0, %s136
      %s137 = sphi 0, %s134
      %s138 = sphi 0, %s137
      %s154 = sphi 0, %s138
      %s158 = sphi 0, %s158
      %s160 = sphi 0, %s158
      %s161 = sphi 0, %s160
      %s175 = sphi 0, %s161
      %s179 = sphi 0, %s179
      %s181 = sphi 0, %s179
      %s182 = sphi 0, %s181
      %s196 = sphi 0, %s182
      %s202 = sphi 0, %s204
      %s205 = sphi 0, %s202
      %s206 = sphi 0, %s205
      %s222 = sphi 0, %s206
    $region4: #{tpu_custom_call.1} parent=1 // loop_header_branch
      %19 = sbr.rel (%p17) target = $region8
    $region5: #{tpu_custom_call.1} parent=1 // loop_body
      %s21 = ssub.s32 %s16, 1
      %s22 = ssub.s32 %s16, 2
      %s29 = sadd.s32 1, %s24
      %p30 = scmp.ge.s32.totalorder %s29, 1
      %s31 = scalar_select %p30, 0, %s29
      %s32 = sadd.s32 1, %s23
      %s33 = scalar_select %p30, %s32, %s23
      %p34 = scmp.ge.s32.totalorder %s33, 2
      %s35 = scalar_select %p34, 0, %s33
      %s36 = ssub.s32 %s23, %s35
      %s37 = ssub.s32 %s24, %s31
      %s38 = sor.u32 %s36, %s37
      %p39 = scmp.eq.s32.totalorder %s38, 0
      %s41 = sadd.s32 %s40, 1
      %s42 = scalar_select %p39, %s40, %s41
      %p45 = pneg %p39
      %p46 = scmp.eq.s32.totalorder %s16, 1
      %p47 = por %p45, %p46
      %p48 = scmp.ne.s32.totalorder %s40, %s43
      %p49 = scmp.eq.s32.totalorder %s16, 0
      %p50 = por %p48, %p49
      %p51 = scmp.ne.s32.totalorder %s40, %s43
      %p52 = scmp.eq.s32.totalorder %s21, 1
      %p53 = por %p51, %p52
      %p54 = scmp.ne.s32.totalorder %s43, %s44
      %p55 = scmp.eq.s32.totalorder %s21, 0
      %p56 = por %p54, %p55
      %p57 = scmp.ne.s32.totalorder %s43, %s44
      %p58 = scmp.eq.s32.totalorder %s22, 1
      %p59 = por %p57, %p58
      %p61 = scmp.ne.s32.totalorder %s44, %s60
      %p62 = scmp.eq.s32.totalorder %s22, 0
      %p63 = por %p61, %p62
      %s64 = ssub.s32 %s24, %s31
      %p65 = scmp.eq.s32.totalorder %s64, 0
      %s67 = sadd.s32 %s66, 1
      %s68 = scalar_select %p65, %s66, %s67
      %p71 = pneg %p65
      %p72 = scmp.eq.s32.totalorder %s16, 1
      %p73 = por %p71, %p72
      %p74 = scmp.ne.s32.totalorder %s66, %s69
      %p75 = scmp.eq.s32.totalorder %s16, 0
      %p76 = por %p74, %p75
      %p77 = scmp.ne.s32.totalorder %s66, %s69
      %p78 = scmp.eq.s32.totalorder %s21, 1
      %p79 = por %p77, %p78
      %p80 = scmp.ne.s32.totalorder %s69, %s70
      %p81 = scmp.eq.s32.totalorder %s21, 0
      %p82 = por %p80, %p81
      %p83 = scmp.ne.s32.totalorder %s69, %s70
      %p84 = scmp.eq.s32.totalorder %s22, 1
      %p85 = por %p83, %p84
      %p87 = scmp.ne.s32.totalorder %s70, %s86
      %p88 = scmp.eq.s32.totalorder %s22, 0
      %p89 = por %p87, %p88
      %s91 = sadd.s32 %s90, 1
      %p94 = scmp.eq.s32.totalorder %s16, 1
      %p95 = scmp.ne.s32.totalorder %s90, %s92
      %p96 = scmp.eq.s32.totalorder %s16, 0
      %p97 = por %p95, %p96
      %p98 = scmp.ne.s32.totalorder %s90, %s92
      %p99 = scmp.eq.s32.totalorder %s21, 1
      %p100 = por %p98, %p99
      %p101 = scmp.ne.s32.totalorder %s92, %s93
      %p102 = scmp.eq.s32.totalorder %s21, 0
      %p103 = por %p101, %p102
      %p104 = scmp.ne.s32.totalorder %s92, %s93
      %p105 = scmp.eq.s32.totalorder %s22, 1
      %p106 = por %p104, %p105
      %p108 = scmp.ne.s32.totalorder %s93, %s107
      %p109 = scmp.eq.s32.totalorder %s22, 0
      %p110 = por %p108, %p109
      %s112 = sadd.s32 %s111, 1
      %p115 = scmp.eq.s32.totalorder %s16, 1
      %p116 = scmp.ne.s32.totalorder %s111, %s113
      %p117 = scmp.eq.s32.totalorder %s16, 0
      %p118 = por %p116, %p117
      %p119 = scmp.ne.s32.totalorder %s111, %s113
      %p120 = scmp.eq.s32.totalorder %s21, 1
      %p121 = por %p119, %p120
      %p122 = scmp.ne.s32.totalorder %s113, %s114
      %p123 = scmp.eq.s32.totalorder %s21, 0
      %p124 = por %p122, %p123
      %p125 = scmp.ne.s32.totalorder %s113, %s114
      %p126 = scmp.eq.s32.totalorder %s22, 1
      %p127 = por %p125, %p126
      %p129 = scmp.ne.s32.totalorder %s114, %s128
      %p130 = scmp.eq.s32.totalorder %s22, 0
      %p131 = por %p129, %p130
      %s132 = ssub.s32 %s23, %s35
      %p133 = scmp.eq.s32.totalorder %s132, 0
      %s135 = sadd.s32 %s134, 1
      %s136 = scalar_select %p133, %s134, %s135
      %p139 = pneg %p133
      %p140 = scmp.eq.s32.totalorder %s16, 1
      %p141 = por %p139, %p140
      %p142 = scmp.ne.s32.totalorder %s134, %s137
      %p143 = scmp.eq.s32.totalorder %s16, 0
      %p144 = por %p142, %p143
      %p145 = scmp.ne.s32.totalorder %s134, %s137
      %p146 = scmp.eq.s32.totalorder %s21, 1
      %p147 = por %p145, %p146
      %p148 = scmp.ne.s32.totalorder %s137, %s138
      %p149 = scmp.eq.s32.totalorder %s21, 0
      %p150 = por %p148, %p149
      %p151 = scmp.ne.s32.totalorder %s137, %s138
      %p152 = scmp.eq.s32.totalorder %s22, 1
      %p153 = por %p151, %p152
      %p155 = scmp.ne.s32.totalorder %s138, %s154
      %p156 = scmp.eq.s32.totalorder %s22, 0
      %p157 = por %p155, %p156
      %s159 = sadd.s32 %s158, 1
      %p162 = scmp.eq.s32.totalorder %s16, 1
      %p163 = scmp.ne.s32.totalorder %s158, %s160
      %p164 = scmp.eq.s32.totalorder %s16, 0
      %p165 = por %p163, %p164
      %p166 = scmp.ne.s32.totalorder %s158, %s160
      %p167 = scmp.eq.s32.totalorder %s21, 1
      %p168 = por %p166, %p167
      %p169 = scmp.ne.s32.totalorder %s160, %s161
      %p170 = scmp.eq.s32.totalorder %s21, 0
      %p171 = por %p169, %p170
      %p172 = scmp.ne.s32.totalorder %s160, %s161
      %p173 = scmp.eq.s32.totalorder %s22, 1
      %p174 = por %p172, %p173
      %p176 = scmp.ne.s32.totalorder %s161, %s175
      %p177 = scmp.eq.s32.totalorder %s22, 0
      %p178 = por %p176, %p177
      %s180 = sadd.s32 %s179, 1
      %p183 = scmp.eq.s32.totalorder %s16, 1
      %p184 = scmp.ne.s32.totalorder %s179, %s181
      %p185 = scmp.eq.s32.totalorder %s16, 0
      %p186 = por %p184, %p185
      %p187 = scmp.ne.s32.totalorder %s179, %s181
      %p188 = scmp.eq.s32.totalorder %s21, 1
      %p189 = por %p187, %p188
      %p190 = scmp.ne.s32.totalorder %s181, %s182
      %p191 = scmp.eq.s32.totalorder %s21, 0
      %p192 = por %p190, %p191
      %p193 = scmp.ne.s32.totalorder %s181, %s182
      %p194 = scmp.eq.s32.totalorder %s22, 1
      %p195 = por %p193, %p194
      %p197 = scmp.ne.s32.totalorder %s182, %s196
      %p198 = scmp.eq.s32.totalorder %s22, 0
      %p199 = por %p197, %p198
      %s200 = ssub.s32 %s23, %s35
      %p201 = scmp.eq.s32.totalorder %s200, 0
      %s203 = sadd.s32 %s202, 1
      %s204 = scalar_select %p201, %s202, %s203
      %p207 = pneg %p201
      %p208 = scmp.eq.s32.totalorder %s16, 1
      %p209 = por %p207, %p208
      %p210 = scmp.ne.s32.totalorder %s202, %s205
      %p211 = scmp.eq.s32.totalorder %s16, 0
      %p212 = por %p210, %p211
      %p213 = scmp.ne.s32.totalorder %s202, %s205
      %p214 = scmp.eq.s32.totalorder %s21, 1
      %p215 = por %p213, %p214
      %p216 = scmp.ne.s32.totalorder %s205, %s206
      %p217 = scmp.eq.s32.totalorder %s21, 0
      %p218 = por %p216, %p217
      %p219 = scmp.ne.s32.totalorder %s205, %s206
      %p220 = scmp.eq.s32.totalorder %s22, 1
      %p221 = por %p219, %p220
      %p223 = scmp.ne.s32.totalorder %s206, %s222
      %p224 = scmp.eq.s32.totalorder %s22, 0
      %p225 = por %p223, %p224
      %p226 = scmp.le.s32.totalorder 1, %s16
      %p227 = scmp.lt.s32.totalorder %s16, 3
      %p228 = pnand %p226, %p227
      %p229 = pneg %p228
      // Predicated region
      $region9: #{tpu_custom_call.1} parent=5 // pred_check
        _
      $region10: #{tpu_custom_call.1} parent=5 // pred_check_branch
        %231 = sbr.rel (%p228) target = $region12
      $region11: #{tpu_custom_call.1} parent=5 // pred_region
        %s232 = ssub.s32 %s16, 1
        // Predicated region
        $region13: #{tpu_custom_call.1} parent=11 // pred_check
          %p233 = pneg %p82
        $region14: #{tpu_custom_call.1} parent=11 // pred_check_branch
          %235 = sbr.rel (%p233) target = $region16
        $region15: #{tpu_custom_call.1} parent=11 // pred_region
          %s236 = smul.u32 42, %s26
          %p237 = scmp.lt.s32.totalorder %s236, 41
          %s238 = scalar_select %p237, %s236, 41
          %s239 = smul.addr %s238, 8
          %s240 = scalar_lea.vmem %s1, %s239
          %s241 = smul.u32 42, %s26
        $region16: #{tpu_custom_call.1} parent=11 // pred_fallthru
          _
        // Predicated region
        $region17: #{tpu_custom_call.1} parent=11 // pred_check
          %p242 = pneg %p103
        $region18: #{tpu_custom_call.1} parent=11 // pred_check_branch
          %244 = sbr.rel (%p242) target = $region20
        $region19: #{tpu_custom_call.1} parent=11 // pred_region
          _
        $region20: #{tpu_custom_call.1} parent=11 // pred_fallthru
          _
        // Predicated region
        $region21: #{tpu_custom_call.1} parent=11 // pred_check
          %p245 = pneg %p124
        $region22: #{tpu_custom_call.1} parent=11 // pred_check_branch
          %247 = sbr.rel (%p245) target = $region24
        $region23: #{tpu_custom_call.1} parent=11 // pred_region
          _
        $region24: #{tpu_custom_call.1} parent=11 // pred_fallthru
          _
        // Predicated region
        $region25: #{tpu_custom_call.1} parent=11 // pred_check
          %p248 = pneg %p171
        $region26: #{tpu_custom_call.1} parent=11 // pred_check_branch
          %250 = sbr.rel (%p248) target = $region28
        $region27: #{tpu_custom_call.1} parent=11 // pred_region
          _
        $region28: #{tpu_custom_call.1} parent=11 // pred_fallthru
          _
        // Predicated region
        $region29: #{tpu_custom_call.1} parent=11 // pred_check
          %p251 = pneg %p192
        $region30: #{tpu_custom_call.1} parent=11 // pred_check_branch
          %253 = sbr.rel (%p251) target = $region32
        $region31: #{tpu_custom_call.1} parent=11 // pred_region
          _
        $region32: #{tpu_custom_call.1} parent=11 // pred_fallthru
          _
      $region12: #{tpu_custom_call.1} parent=5 // pred_fallthru
        _
      %p254 = scmp.lt.s32.totalorder %s16, 2
      // Predicated region
      $region33: #{tpu_custom_call.1} parent=5 // pred_check
        %p255 = pneg %p254
      $region34: #{tpu_custom_call.1} parent=5 // pred_check_branch
        %257 = sbr.rel (%p255) target = $region36
      $region35: #{tpu_custom_call.1} parent=5 // pred_region
        // Predicated region
        $region37: #{tpu_custom_call.1} parent=35 // pred_check
          %p258 = pneg %p50
        $region38: #{tpu_custom_call.1} parent=35 // pred_check_branch
          %260 = sbr.rel (%p258) target = $region40
        $region39: #{tpu_custom_call.1} parent=35 // pred_region
          %p261 = scmp.lt.s32.totalorder %s23, 1
          %s262 = scalar_select %p261, %s23, 1
          %p263 = scmp.lt.s32.totalorder %s24, 0
          %s264 = scalar_select %p263, %s24, 0
          %s265 = smul.addr %s264, 48
          %s266 = smul.addr %s262, 48
          %s267 = sadd.s32 %s265, %s266
          %s268 = smul.addr %s267, 4
          %s269 = scalar_lea.vmem %s0, %s268
        $region40: #{tpu_custom_call.1} parent=35 // pred_fallthru
          _
        // Predicated region
        $region41: #{tpu_custom_call.1} parent=35 // pred_check
          %p270 = pneg %p144
        $region42: #{tpu_custom_call.1} parent=35 // pred_check_branch
          %272 = sbr.rel (%p270) target = $region44
        $region43: #{tpu_custom_call.1} parent=35 // pred_region
          %p273 = scmp.lt.s32.totalorder %s23, 1
          %s274 = scalar_select %p273, %s23, 1
          %s275 = scalar_lea.vmem %s4, %s274
        $region44: #{tpu_custom_call.1} parent=35 // pred_fallthru
          _
      $region36: #{tpu_custom_call.1} parent=5 // pred_fallthru
        _
      %p276 = scmp.le.s32.totalorder 1, %s16
      %p277 = scmp.lt.s32.totalorder %s16, 3
      %p278 = pnand %p276, %p277
      %p279 = pneg %p278
      // Predicated region
      $region45: #{tpu_custom_call.1} parent=5 // pred_check
        _
      $region46: #{tpu_custom_call.1} parent=5 // pred_check_branch
        %281 = sbr.rel (%p278) target = $region48
      $region47: #{tpu_custom_call.1} parent=5 // pred_region
        %s282 = ssub.s32 %s16, 1
        %p283 = scmp.lt.s32.totalorder %s25, 1
        %s284 = scalar_select %p283, %s25, 1
        %p285 = scmp.lt.s32.totalorder %s26, 0
        %s286 = scalar_select %p285, %s26, 0
        %s287 = smul.addr %s286, 48
        %s288 = smul.addr %s284, 48
        %s289 = sadd.s32 %s287, %s288
        %s290 = smul.addr %s289, 4
        %s291 = scalar_lea.vmem %s0, %s290
        %p292 = pneg %p56
        %p293 = pneg %p53
        %s294 = smul.u32 42, %s26
        %p295 = scmp.lt.s32.totalorder %s294, 41
        %s296 = scalar_select %p295, %s294, 41
        %s297 = smul.addr %s296, 8
        %s298 = scalar_lea.vmem %s1, %s297
        %p299 = pneg %p82
        %p300 = pneg %p79
        %p301 = pneg %p103
        %p302 = pneg %p100
        %p303 = pneg %p124
        %p304 = pneg %p121
        %p305 = scmp.lt.s32.totalorder %s25, 1
        %s306 = scalar_select %p305, %s25, 1
        %s307 = scalar_lea.vmem %s4, %s306
        %p308 = pneg %p150
        %p309 = pneg %p147
        %p310 = pneg %p171
        %p311 = pneg %p168
        %p312 = pneg %p192
        %p313 = pneg %p189
        %p314 = pneg %p218
        %p315 = pneg %p215
        %s316 = sand.u32 %s205, 1
        %s317 = scalar_lea.sflag [#allocation4], %s316
        %s318 = sand.u32 %s205, 1
        %s319 = scalar_lea.vmem [#allocation3], %s318
        %p320 = scmp.lt.s32.totalorder %s25, 1
        %s321 = scalar_select %p320, %s25, 1
        %p322 = scmp.lt.s32.totalorder %s26, 0
        %s323 = scalar_select %p322, %s26, 0
        %s324 = smul.addr %s323, 48
        %s325 = smul.addr %s321, 48
        %s326 = sadd.s32 %s324, %s325
        %s327 = smul.addr %s326, 4
        %s328 = scalar_lea.vmem %s0, %s327
        %s329 = smul.u32 42, %s26
        %p330 = scmp.lt.s32.totalorder %s329, 41
        %s331 = scalar_select %p330, %s329, 41
        %s332 = smul.addr %s331, 8
        %s333 = scalar_lea.vmem %s1, %s332
        %s334 = smul.u32 42, %s26
        %p335 = scmp.lt.s32.totalorder %s25, 1
        %s336 = scalar_select %p335, %s25, 1
        %s337 = scalar_lea.vmem %s4, %s336
        %p339 = scmp.eq.s32.totalorder %s26, 0
        // Predicated region
        $region49: #{tpu_custom_call.1} parent=47 // pred_check
          %p340 = pneg %p339
        $region50: #{tpu_custom_call.1} parent=47 // pred_check_branch
          %342 = sbr.rel (%p340) target = $region52
        $region51: #{tpu_custom_call.1} parent=47 // pred_region
          %343 = vst [vmem:[#allocation2] sm:$0xff] 0.0
        $region52: #{tpu_custom_call.1} parent=47 // pred_fallthru
          _
        %v344 = vld [vmem:[%s328] sm:$0xf]
        %v345 = vld [vmem:[%s328 + $0x4] sm:$0xf]
        %v346 = vld [vmem:[%s328 + $0x8] sm:$0xf]
        %v347 = vld [vmem:[%s328 + $0xc] sm:$0xf]
        %v348 = vld [vmem:[%s328 + $0x10] sm:$0xf]
        %v349 = vld [vmem:[%s328 + $0x14] sm:$0xf]
        %v350 = vld [vmem:[%s328 + $0x18] sm:$0xf]
        %v351 = vld [vmem:[%s328 + $0x1c] sm:$0xf]
        %v352 = vld [vmem:[%s328 + $0x20] sm:$0xf]
        %v353 = vld [vmem:[%s328 + $0x24] sm:$0xf]
        %v354 = vld [vmem:[%s328 + $0x28] sm:$0xf]
        %v355 = vld [vmem:[%s328 + $0x2c] sm:$0xf]
        %v356 = vld [vmem:[%s328 + $0x30] sm:$0xf]
        %v357 = vld [vmem:[%s328 + $0x34] sm:$0xf]
        %v358 = vld [vmem:[%s328 + $0x38] sm:$0xf]
        %v359 = vld [vmem:[%s328 + $0x3c] sm:$0xf]
        %v360 = vld [vmem:[%s328 + $0x40] sm:$0xf]
        %v361 = vld [vmem:[%s328 + $0x44] sm:$0xf]
        %v362 = vld [vmem:[%s328 + $0x48] sm:$0xf]
        %v363 = vld [vmem:[%s328 + $0x4c] sm:$0xf]
        %v364 = vld [vmem:[%s328 + $0x50] sm:$0xf]
        %v365 = vld [vmem:[%s328 + $0x54] sm:$0xf]
        %v366 = vld [vmem:[%s328 + $0x58] sm:$0xf]
        %v367 = vld [vmem:[%s328 + $0x5c] sm:$0xf]
        %v368 = vld [vmem:[%s328 + $0x60] sm:$0xf]
        %v369 = vld [vmem:[%s328 + $0x64] sm:$0xf]
        %v370 = vld [vmem:[%s328 + $0x68] sm:$0xf]
        %v371 = vld [vmem:[%s328 + $0x6c] sm:$0xf]
        %v372 = vld [vmem:[%s328 + $0x70] sm:$0xf]
        %v373 = vld [vmem:[%s328 + $0x74] sm:$0xf]
        %v374 = vld [vmem:[%s328 + $0x78] sm:$0xf]
        %v375 = vld [vmem:[%s328 + $0x7c] sm:$0xf]
        %v376 = vld [vmem:[%s328 + $0x80] sm:$0xf]
        %v377 = vld [vmem:[%s328 + $0x84] sm:$0xf]
        %v378 = vld [vmem:[%s328 + $0x88] sm:$0xf]
        %v379 = vld [vmem:[%s328 + $0x8c] sm:$0xf]
        %v380 = vld [vmem:[%s328 + $0x90] sm:$0xf]
        %v381 = vld [vmem:[%s328 + $0x94] sm:$0xf]
        %v382 = vld [vmem:[%s328 + $0x98] sm:$0xf]
        %v383 = vld [vmem:[%s328 + $0x9c] sm:$0xf]
        %v384 = vld [vmem:[%s328 + $0xa0] sm:$0xf]
        %v385 = vld [vmem:[%s328 + $0xa4] sm:$0xf]
        %v386 = vld [vmem:[%s328 + $0xa8] sm:$0xf]
        %v387 = vld [vmem:[%s328 + $0xac] sm:$0xf]
        %v388 = vld [vmem:[%s328 + $0xb0] sm:$0xf]
        %v389 = vld [vmem:[%s328 + $0xb4] sm:$0xf]
        %v390 = vld [vmem:[%s328 + $0xb8] sm:$0xf]
        %v391 = vld [vmem:[%s2] sm:$0x3]
        %s392 = scalar_lea.vmem %s2, 2
        %v393 = vld [vmem:[%s392] sm:$0x3]
        %v437 = vunpack.c.l.b16 %v344
        %v438 = vunpack.c.l.b16 %v345
        %v439 = vunpack.c.l.b16 %v346
        %v440 = vunpack.c.l.b16 %v347
        %v441 = vunpack.c.l.b16 %v348
        %v442 = vunpack.c.l.b16 %v349
        %v443 = vunpack.c.l.b16 %v350
        %v444 = vunpack.c.l.b16 %v351
        %v445 = vunpack.c.l.b16 %v352
        %v446 = vunpack.c.l.b16 %v353
        %v447 = vunpack.c.l.b16 %v354
        %v448 = vunpack.c.l.b16 %v355
        %v449 = vunpack.c.l.b16 %v356
        %v450 = vunpack.c.l.b16 %v357
        %v451 = vunpack.c.l.b16 %v358
        %v452 = vunpack.c.l.b16 %v359
        %v453 = vunpack.c.l.b16 %v360
        %v454 = vunpack.c.l.b16 %v361
        %v455 = vunpack.c.l.b16 %v362
        %v456 = vunpack.c.l.b16 %v363
        %v457 = vunpack.c.l.b16 %v364
        %v458 = vunpack.c.l.b16 %v365
        %v459 = vunpack.c.l.b16 %v366
        %v460 = vunpack.c.l.b16 %v367
        %v461 = vunpack.c.l.b16 %v368
        %v462 = vunpack.c.l.b16 %v369
        %v463 = vunpack.c.l.b16 %v370
        %v464 = vunpack.c.l.b16 %v371
        %v465 = vunpack.c.l.b16 %v372
        %v466 = vunpack.c.l.b16 %v373
        %v467 = vunpack.c.l.b16 %v374
        %v468 = vunpack.c.l.b16 %v375
        %v469 = vunpack.c.l.b16 %v376
        %v470 = vunpack.c.l.b16 %v377
        %v471 = vunpack.c.l.b16 %v378
        %v472 = vunpack.c.l.b16 %v379
        %v473 = vunpack.c.l.b16 %v380
        %v474 = vunpack.c.l.b16 %v381
        %v475 = vunpack.c.l.b16 %v382
        %v476 = vunpack.c.l.b16 %v383
        %v477 = vunpack.c.l.b16 %v384
        %v478 = vunpack.c.l.b16 %v385
        %v479 = vunpack.c.l.b16 %v386
        %v480 = vpack.c.b16 %v438, %v437
        %v481 = vpack.c.b16 %v440, %v439
        %v482 = vpack.c.b16 %v442, %v441
        %v483 = vpack.c.b16 %v444, %v443
        %v484 = vpack.c.b16 %v446, %v445
        %v485 = vpack.c.b16 %v448, %v447
        %v486 = vpack.c.b16 %v450, %v449
        %v487 = vpack.c.b16 %v452, %v451
        %v488 = vpack.c.b16 %v454, %v453
        %v489 = vpack.c.b16 %v456, %v455
        %v490 = vpack.c.b16 %v458, %v457
        %v491 = vpack.c.b16 %v460, %v459
        %v492 = vpack.c.b16 %v462, %v461
        %v493 = vpack.c.b16 %v464, %v463
        %v494 = vpack.c.b16 %v466, %v465
        %v495 = vpack.c.b16 %v468, %v467
        %v496 = vpack.c.b16 %v470, %v469
        %v497 = vpack.c.b16 %v472, %v471
        %v498 = vpack.c.b16 %v474, %v473
        %v499 = vpack.c.b16 %v476, %v475
        %v500 = vpack.c.b16 %v478, %v477
        %v501 = vpack.c.b16 %v479, %v479
        %vm502 = vsmask.f32 7424
        %v504 = vshrl.u32 %v480, 16
        %v506 = vshll.u32 %v480, 16
        %v508 = vrot.slane %v506, 1
        %v509 = vor.u32 %v504, %v508
        %v511 = vshll.u32 %v481, 16
        %v513 = vrot.slane %v511, 1
        %v514 = vsel %vm502, %v509, %v513
        %v515 = vshrl.u32 %v481, 16
        %v517 = vor.u32 %v515, %v513
        %v519 = vshll.u32 %v482, 16
        %v521 = vrot.slane %v519, 1
        %v522 = vsel %vm502, %v517, %v521
        %v523 = vshrl.u32 %v482, 16
        %v525 = vor.u32 %v523, %v521
        %v527 = vshll.u32 %v483, 16
        %v529 = vrot.slane %v527, 1
        %v530 = vsel %vm502, %v525, %v529
        %v531 = vshrl.u32 %v483, 16
        %v533 = vor.u32 %v531, %v529
        %v535 = vshll.u32 %v484, 16
        %v537 = vrot.slane %v535, 1
        %v538 = vsel %vm502, %v533, %v537
        %v539 = vshrl.u32 %v484, 16
        %v541 = vor.u32 %v539, %v537
        %v543 = vshll.u32 %v485, 16
        %v545 = vrot.slane %v543, 1
        %v546 = vsel %vm502, %v541, %v545
        %v547 = vshrl.u32 %v485, 16
        %v549 = vor.u32 %v547, %v545
        %v551 = vshll.u32 %v486, 16
        %v553 = vrot.slane %v551, 1
        %v554 = vsel %vm502, %v549, %v553
        %v555 = vshrl.u32 %v486, 16
        %v557 = vor.u32 %v555, %v553
        %v559 = vshll.u32 %v487, 16
        %v561 = vrot.slane %v559, 1
        %v562 = vsel %vm502, %v557, %v561
        %v563 = vshrl.u32 %v487, 16
        %v565 = vor.u32 %v563, %v561
        %v567 = vshll.u32 %v488, 16
        %v569 = vrot.slane %v567, 1
        %v570 = vsel %vm502, %v565, %v569
        %v571 = vshrl.u32 %v488, 16
        %v573 = vor.u32 %v571, %v569
        %v575 = vshll.u32 %v489, 16
        %v577 = vrot.slane %v575, 1
        %v578 = vsel %vm502, %v573, %v577
        %v579 = vshrl.u32 %v489, 16
        %v581 = vor.u32 %v579, %v577
        %v583 = vshll.u32 %v490, 16
        %v585 = vrot.slane %v583, 1
        %v586 = vsel %vm502, %v581, %v585
        %v587 = vshrl.u32 %v490, 16
        %v589 = vor.u32 %v587, %v585
        %v591 = vshll.u32 %v491, 16
        %v593 = vrot.slane %v591, 1
        %v594 = vsel %vm502, %v589, %v593
        %v595 = vshrl.u32 %v491, 16
        %v597 = vor.u32 %v595, %v593
        %v599 = vshll.u32 %v492, 16
        %v601 = vrot.slane %v599, 1
        %v602 = vsel %vm502, %v597, %v601
        %v603 = vshrl.u32 %v492, 16
        %v605 = vor.u32 %v603, %v601
        %v607 = vshll.u32 %v493, 16
        %v609 = vrot.slane %v607, 1
        %v610 = vsel %vm502, %v605, %v609
        %v611 = vshrl.u32 %v493, 16
        %v613 = vor.u32 %v611, %v609
        %v615 = vshll.u32 %v494, 16
        %v617 = vrot.slane %v615, 1
        %v618 = vsel %vm502, %v613, %v617
        %v619 = vshrl.u32 %v494, 16
        %v621 = vor.u32 %v619, %v617
        %v623 = vshll.u32 %v495, 16
        %v625 = vrot.slane %v623, 1
        %v626 = vsel %vm502, %v621, %v625
        %v627 = vshrl.u32 %v495, 16
        %v629 = vor.u32 %v627, %v625
        %v631 = vshll.u32 %v496, 16
        %v633 = vrot.slane %v631, 1
        %v634 = vsel %vm502, %v629, %v633
        %v635 = vshrl.u32 %v496, 16
        %v637 = vor.u32 %v635, %v633
        %v639 = vshll.u32 %v497, 16
        %v641 = vrot.slane %v639, 1
        %v642 = vsel %vm502, %v637, %v641
        %v643 = vshrl.u32 %v497, 16
        %v645 = vor.u32 %v643, %v641
        %v647 = vshll.u32 %v498, 16
        %v649 = vrot.slane %v647, 1
        %v650 = vsel %vm502, %v645, %v649
        %v651 = vshrl.u32 %v498, 16
        %v653 = vor.u32 %v651, %v649
        %v655 = vshll.u32 %v499, 16
        %v657 = vrot.slane %v655, 1
        %v658 = vsel %vm502, %v653, %v657
        %v659 = vshrl.u32 %v499, 16
        %v661 = vor.u32 %v659, %v657
        %v663 = vshll.u32 %v500, 16
        %v665 = vrot.slane %v663, 1
        %v666 = vsel %vm502, %v661, %v665
        %v667 = vshrl.u32 %v500, 16
        %v669 = vor.u32 %v667, %v665
        %v671 = vshll.u32 %v501, 16
        %v673 = vrot.slane %v671, 1
        %v674 = vsel %vm502, %v669, %v673
        %vm675 = vcmask 31744
        %v677 = vsel %vm675, %v514, 0
        %v680 = vsel %vm675, %v522, 0
        %v683 = vsel %vm675, %v530, 0
        %v686 = vsel %vm675, %v538, 0
        %v689 = vsel %vm675, %v546, 0
        %v692 = vsel %vm675, %v554, 0
        %v695 = vsel %vm675, %v562, 0
        %v698 = vsel %vm675, %v570, 0
        %v701 = vsel %vm675, %v578, 0
        %v704 = vsel %vm675, %v586, 0
        %v707 = vsel %vm675, %v594, 0
        %v710 = vsel %vm675, %v602, 0
        %v713 = vsel %vm675, %v610, 0
        %v716 = vsel %vm675, %v618, 0
        %v719 = vsel %vm675, %v626, 0
        %v722 = vsel %vm675, %v634, 0
        %v725 = vsel %vm675, %v642, 0
        %v728 = vsel %vm675, %v650, 0
        %v731 = vsel %vm675, %v658, 0
        %v734 = vsel %vm675, %v666, 0
        %v737 = vsel %vm675, %v674, 0
        %vm739 = vcmask 1041408
        %v741 = vsel %vm739, %v393, 0
        %743 = vmatprep.subr.bf16.mxu0 0
        %744 = vmatpush1.bf16.msra.mxu0 0
        %745 = vmatprep.subr.bf16.mxu0 0
        %746 = vmatpush1.bf16.msra.mxu0 0
        %747 = vmatprep.subr.bf16.mxu0 0
        %748 = vmatpush1.bf16.msra.mxu0 0
        %749 = vmatprep.subr.bf16.mxu0 0
        %750 = vmatpush1.bf16.msra.mxu0 0
        %751 = vmatprep.subr.bf16.mxu0 0
        %752 = vmatpush1.bf16.msra.mxu0 0
        %753 = vmatprep.subr.bf16.mxu0 0
        %754 = vmatpush1.bf16.msra.mxu0 0
        %755 = vmatprep.subr.bf16.mxu0 0
        %756 = vmatpush1.bf16.msra.mxu0 0
        %757 = vmatprep.subr.bf16.mxu0 0
        %758 = vmatpush1.bf16.msra.mxu0 %v741
        %759 = vmatprep.subr.bf16.mxu0 0
        %760 = vmatpush2.bf16.msra.mxu0 0
        %761 = vmatprep.subr.bf16.mxu0 0
        %762 = vmatpush2.bf16.msra.mxu0 0
        %763 = vmatprep.subr.bf16.mxu0 0
        %764 = vmatpush2.bf16.msra.mxu0 0
        %765 = vmatprep.subr.bf16.mxu0 0
        %766 = vmatpush2.bf16.msra.mxu0 0
        %767 = vmatprep.subr.bf16.mxu0 0
        %768 = vmatpush2.bf16.msra.mxu0 0
        %769 = vmatprep.subr.bf16.mxu0 0
        %770 = vmatpush2.bf16.msra.mxu0 0
        %771 = vmatprep.subr.bf16.mxu0 0
        %772 = vmatpush2.bf16.msra.mxu0 0
        %773 = vmatprep.subr.bf16.mxu0 0
        %774 = vmatpush2.bf16.msra.mxu0 0
        %775 = vmatprep.mubr.bf16.mxu0 0
        %776 = vmatmul.mubr.bf16.gmra.mxu0 %v677
        %v777 = vpop.f32.mrf.mxu0
        %v778 = vadd.f32 0.0, %v777
        %v779 = vpop.f32.mrf.mxu0
        %v780 = vpop.f32.mrf.mxu0
        %v781 = vadd.f32 0.0, %v780
        %v782 = vpop.f32.mrf.mxu0
        %783 = vmatprep.mubr.bf16.mxu0 0
        %784 = vmatmul.mubr.bf16.gmra.mxu0 %v680
        %v785 = vpop.f32.mrf.mxu0
        %v786 = vadd.f32 0.0, %v785
        %v787 = vpop.f32.mrf.mxu0
        %v788 = vpop.f32.mrf.mxu0
        %v789 = vadd.f32 0.0, %v788
        %v790 = vpop.f32.mrf.mxu0
        %791 = vmatprep.mubr.bf16.mxu0 0
        %792 = vmatmul.mubr.bf16.gmra.mxu0 %v683
        %v793 = vpop.f32.mrf.mxu0
        %v794 = vadd.f32 0.0, %v793
        %v795 = vpop.f32.mrf.mxu0
        %v796 = vpop.f32.mrf.mxu0
        %v797 = vadd.f32 0.0, %v796
        %v798 = vpop.f32.mrf.mxu0
        %799 = vmatprep.mubr.bf16.mxu0 0
        %800 = vmatmul.mubr.bf16.gmra.mxu0 %v686
        %v801 = vpop.f32.mrf.mxu0
        %v802 = vadd.f32 0.0, %v801
        %v803 = vpop.f32.mrf.mxu0
        %v804 = vpop.f32.mrf.mxu0
        %v805 = vadd.f32 0.0, %v804
        %v806 = vpop.f32.mrf.mxu0
        %807 = vmatprep.mubr.bf16.mxu0 0
        %808 = vmatmul.mubr.bf16.gmra.mxu0 %v689
        %v809 = vpop.f32.mrf.mxu0
        %v810 = vadd.f32 0.0, %v809
        %v811 = vpop.f32.mrf.mxu0
        %v812 = vpop.f32.mrf.mxu0
        %v813 = vadd.f32 0.0, %v812
        %v814 = vpop.f32.mrf.mxu0
        %815 = vmatprep.mubr.bf16.mxu0 0
        %816 = vmatmul.mubr.bf16.gmra.mxu0 %v692
        %v817 = vpop.f32.mrf.mxu0
        %v818 = vadd.f32 0.0, %v817
        %v819 = vpop.f32.mrf.mxu0
        %v820 = vpop.f32.mrf.mxu0
        %v821 = vadd.f32 0.0, %v820
        %v822 = vpop.f32.mrf.mxu0
        %823 = vmatprep.mubr.bf16.mxu0 0
        %824 = vmatmul.mubr.bf16.gmra.mxu0 %v695
        %v825 = vpop.f32.mrf.mxu0
        %v826 = vadd.f32 0.0, %v825
        %v827 = vpop.f32.mrf.mxu0
        %v828 = vpop.f32.mrf.mxu0
        %v829 = vadd.f32 0.0, %v828
        %v830 = vpop.f32.mrf.mxu0
        %831 = vmatprep.mubr.bf16.mxu0 0
        %832 = vmatmul.mubr.bf16.gmra.mxu0 %v698
        %v833 = vpop.f32.mrf.mxu0
        %v834 = vadd.f32 0.0, %v833
        %v835 = vpop.f32.mrf.mxu0
        %v836 = vpop.f32.mrf.mxu0
        %v837 = vadd.f32 0.0, %v836
        %v838 = vpop.f32.mrf.mxu0
        %839 = vmatprep.mubr.bf16.mxu0 0
        %840 = vmatmul.mubr.bf16.gmra.mxu0 %v701
        %v841 = vpop.f32.mrf.mxu0
        %v842 = vadd.f32 0.0, %v841
        %v843 = vpop.f32.mrf.mxu0
        %v844 = vpop.f32.mrf.mxu0
        %v845 = vadd.f32 0.0, %v844
        %v846 = vpop.f32.mrf.mxu0
        %847 = vmatprep.mubr.bf16.mxu0 0
        %848 = vmatmul.mubr.bf16.gmra.mxu0 %v704
        %v849 = vpop.f32.mrf.mxu0
        %v850 = vadd.f32 0.0, %v849
        %v851 = vpop.f32.mrf.mxu0
        %v852 = vpop.f32.mrf.mxu0
        %v853 = vadd.f32 0.0, %v852
        %v854 = vpop.f32.mrf.mxu0
        %855 = vmatprep.mubr.bf16.mxu0 0
        %856 = vmatmul.mubr.bf16.gmra.mxu0 %v707
        %v857 = vpop.f32.mrf.mxu0
        %v858 = vadd.f32 0.0, %v857
        %v859 = vpop.f32.mrf.mxu0
        %v860 = vpop.f32.mrf.mxu0
        %v861 = vadd.f32 0.0, %v860
        %v862 = vpop.f32.mrf.mxu0
        %863 = vmatprep.mubr.bf16.mxu0 0
        %864 = vmatmul.mubr.bf16.gmra.mxu0 %v710
        %v865 = vpop.f32.mrf.mxu0
        %v866 = vadd.f32 0.0, %v865
        %v867 = vpop.f32.mrf.mxu0
        %v868 = vpop.f32.mrf.mxu0
        %v869 = vadd.f32 0.0, %v868
        %v870 = vpop.f32.mrf.mxu0
        %871 = vmatprep.mubr.bf16.mxu0 0
        %872 = vmatmul.mubr.bf16.gmra.mxu0 %v713
        %v873 = vpop.f32.mrf.mxu0
        %v874 = vadd.f32 0.0, %v873
        %v875 = vpop.f32.mrf.mxu0
        %v876 = vpop.f32.mrf.mxu0
        %v877 = vadd.f32 0.0, %v876
        %v878 = vpop.f32.mrf.mxu0
        %879 = vmatprep.mubr.bf16.mxu0 0
        %880 = vmatmul.mubr.bf16.gmra.mxu0 %v716
        %v881 = vpop.f32.mrf.mxu0
        %v882 = vadd.f32 0.0, %v881
        %v883 = vpop.f32.mrf.mxu0
        %v884 = vpop.f32.mrf.mxu0
        %v885 = vadd.f32 0.0, %v884
        %v886 = vpop.f32.mrf.mxu0
        %887 = vmatprep.mubr.bf16.mxu0 0
        %888 = vmatmul.mubr.bf16.gmra.mxu0 %v719
        %v889 = vpop.f32.mrf.mxu0
        %v890 = vadd.f32 0.0, %v889
        %v891 = vpop.f32.mrf.mxu0
        %v892 = vpop.f32.mrf.mxu0
        %v893 = vadd.f32 0.0, %v892
        %v894 = vpop.f32.mrf.mxu0
        %895 = vmatprep.mubr.bf16.mxu0 0
        %896 = vmatmul.mubr.bf16.gmra.mxu0 %v722
        %v897 = vpop.f32.mrf.mxu0
        %v898 = vadd.f32 0.0, %v897
        %v899 = vpop.f32.mrf.mxu0
        %v900 = vpop.f32.mrf.mxu0
        %v901 = vadd.f32 0.0, %v900
        %v902 = vpop.f32.mrf.mxu0
        %903 = vmatprep.mubr.bf16.mxu0 0
        %904 = vmatmul.mubr.bf16.gmra.mxu0 %v725
        %v905 = vpop.f32.mrf.mxu0
        %v906 = vadd.f32 0.0, %v905
        %v907 = vpop.f32.mrf.mxu0
        %v908 = vpop.f32.mrf.mxu0
        %v909 = vadd.f32 0.0, %v908
        %v910 = vpop.f32.mrf.mxu0
        %911 = vmatprep.mubr.bf16.mxu0 0
        %912 = vmatmul.mubr.bf16.gmra.mxu0 %v728
        %v913 = vpop.f32.mrf.mxu0
        %v914 = vadd.f32 0.0, %v913
        %v915 = vpop.f32.mrf.mxu0
        %v916 = vpop.f32.mrf.mxu0
        %v917 = vadd.f32 0.0, %v916
        %v918 = vpop.f32.mrf.mxu0
        %919 = vmatprep.mubr.bf16.mxu0 0
        %920 = vmatmul.mubr.bf16.gmra.mxu0 %v731
        %v921 = vpop.f32.mrf.mxu0
        %v922 = vadd.f32 0.0, %v921
        %v923 = vpop.f32.mrf.mxu0
        %v924 = vpop.f32.mrf.mxu0
        %v925 = vadd.f32 0.0, %v924
        %v926 = vpop.f32.mrf.mxu0
        %927 = vmatprep.mubr.bf16.mxu0 0
        %928 = vmatmul.mubr.bf16.gmra.mxu0 %v734
        %v929 = vpop.f32.mrf.mxu0
        %v930 = vadd.f32 0.0, %v929
        %v931 = vpop.f32.mrf.mxu0
        %v932 = vpop.f32.mrf.mxu0
        %v933 = vadd.f32 0.0, %v932
        %v934 = vpop.f32.mrf.mxu0
        %935 = vmatprep.mubr.bf16.mxu0 0
        %936 = vmatmul.mubr.bf16.gmra.mxu0 %v737
        %v937 = vpop.f32.mrf.mxu0
        %v938 = vadd.f32 0.0, %v937
        %v939 = vpop.f32.mrf.mxu0
        %v940 = vpop.f32.mrf.mxu0
        %v941 = vadd.f32 0.0, %v940
        %v942 = vpop.f32.mrf.mxu0
        %943 = vdwg.mxu0
        %v944 = vsel %vm675, %v480, 0
        %v946 = vsel %vm675, %v481, 0
        %v948 = vsel %vm675, %v482, 0
        %v950 = vsel %vm675, %v483, 0
        %v952 = vsel %vm675, %v484, 0
        %v954 = vsel %vm675, %v485, 0
        %v956 = vsel %vm675, %v486, 0
        %v958 = vsel %vm675, %v487, 0
        %v960 = vsel %vm675, %v488, 0
        %v962 = vsel %vm675, %v489, 0
        %v964 = vsel %vm675, %v490, 0
        %v966 = vsel %vm675, %v491, 0
        %v968 = vsel %vm675, %v492, 0
        %v970 = vsel %vm675, %v493, 0
        %v972 = vsel %vm675, %v494, 0
        %v974 = vsel %vm675, %v495, 0
        %v976 = vsel %vm675, %v496, 0
        %v978 = vsel %vm675, %v497, 0
        %v980 = vsel %vm675, %v498, 0
        %v982 = vsel %vm675, %v499, 0
        %v984 = vsel %vm675, %v500, 0
        %v987 = vsel %vm739, %v391, 0
        %989 = vmatprep.subr.bf16.mxu0 0
        %990 = vmatpush1.bf16.msra.mxu0 0
        %991 = vmatprep.subr.bf16.mxu0 0
        %992 = vmatpush1.bf16.msra.mxu0 0
        %993 = vmatprep.subr.bf16.mxu0 0
        %994 = vmatpush1.bf16.msra.mxu0 0
        %995 = vmatprep.subr.bf16.mxu0 0
        %996 = vmatpush1.bf16.msra.mxu0 0
        %997 = vmatprep.subr.bf16.mxu0 0
        %998 = vmatpush1.bf16.msra.mxu0 0
        %999 = vmatprep.subr.bf16.mxu0 0
        %1000 = vmatpush1.bf16.msra.mxu0 0
        %1001 = vmatprep.subr.bf16.mxu0 0
        %1002 = vmatpush1.bf16.msra.mxu0 0
        %1003 = vmatprep.subr.bf16.mxu0 0
        %1004 = vmatpush1.bf16.msra.mxu0 %v987
        %1005 = vmatprep.subr.bf16.mxu0 0
        %1006 = vmatpush2.bf16.msra.mxu0 0
        %1007 = vmatprep.subr.bf16.mxu0 0
        %1008 = vmatpush2.bf16.msra.mxu0 0
        %1009 = vmatprep.subr.bf16.mxu0 0
        %1010 = vmatpush2.bf16.msra.mxu0 0
        %1011 = vmatprep.subr.bf16.mxu0 0
        %1012 = vmatpush2.bf16.msra.mxu0 0
        %1013 = vmatprep.subr.bf16.mxu0 0
        %1014 = vmatpush2.bf16.msra.mxu0 0
        %1015 = vmatprep.subr.bf16.mxu0 0
        %1016 = vmatpush2.bf16.msra.mxu0 0
        %1017 = vmatprep.subr.bf16.mxu0 0
        %1018 = vmatpush2.bf16.msra.mxu0 0
        %1019 = vmatprep.subr.bf16.mxu0 0
        %1020 = vmatpush2.bf16.msra.mxu0 0
        %1021 = vmatprep.mubr.bf16.mxu0 0
        %1022 = vmatmul.mubr.bf16.gmra.mxu0 %v944
        %v1023 = vpop.f32.mrf.mxu0
        %v1024 = vadd.f32 %v778, %v1023
        %v1025 = vpop.f32.mrf.mxu0
        %v1026 = vpop.f32.mrf.mxu0
        %v1027 = vadd.f32 %v781, %v1026
        %v1028 = vpop.f32.mrf.mxu0
        %1029 = vmatprep.mubr.bf16.mxu0 0
        %1030 = vmatmul.mubr.bf16.gmra.mxu0 %v946
        %v1031 = vpop.f32.mrf.mxu0
        %v1032 = vadd.f32 %v786, %v1031
        %v1033 = vpop.f32.mrf.mxu0
        %v1034 = vpop.f32.mrf.mxu0
        %v1035 = vadd.f32 %v789, %v1034
        %v1036 = vpop.f32.mrf.mxu0
        %1037 = vmatprep.mubr.bf16.mxu0 0
        %1038 = vmatmul.mubr.bf16.gmra.mxu0 %v948
        %v1039 = vpop.f32.mrf.mxu0
        %v1040 = vadd.f32 %v794, %v1039
        %v1041 = vpop.f32.mrf.mxu0
        %v1042 = vpop.f32.mrf.mxu0
        %v1043 = vadd.f32 %v797, %v1042
        %v1044 = vpop.f32.mrf.mxu0
        %1045 = vmatprep.mubr.bf16.mxu0 0
        %1046 = vmatmul.mubr.bf16.gmra.mxu0 %v950
        %v1047 = vpop.f32.mrf.mxu0
        %v1048 = vadd.f32 %v802, %v1047
        %v1049 = vpop.f32.mrf.mxu0
        %v1050 = vpop.f32.mrf.mxu0
        %v1051 = vadd.f32 %v805, %v1050
        %v1052 = vpop.f32.mrf.mxu0
        %1053 = vmatprep.mubr.bf16.mxu0 0
        %1054 = vmatmul.mubr.bf16.gmra.mxu0 %v952
        %v1055 = vpop.f32.mrf.mxu0
        %v1056 = vadd.f32 %v810, %v1055
        %v1057 = vpop.f32.mrf.mxu0
        %v1058 = vpop.f32.mrf.mxu0
        %v1059 = vadd.f32 %v813, %v1058
        %v1060 = vpop.f32.mrf.mxu0
        %1061 = vmatprep.mubr.bf16.mxu0 0
        %1062 = vmatmul.mubr.bf16.gmra.mxu0 %v954
        %v1063 = vpop.f32.mrf.mxu0
        %v1064 = vadd.f32 %v818, %v1063
        %v1065 = vpop.f32.mrf.mxu0
        %v1066 = vpop.f32.mrf.mxu0
        %v1067 = vadd.f32 %v821, %v1066
        %v1068 = vpop.f32.mrf.mxu0
        %1069 = vmatprep.mubr.bf16.mxu0 0
        %1070 = vmatmul.mubr.bf16.gmra.mxu0 %v956
        %v1071 = vpop.f32.mrf.mxu0
        %v1072 = vadd.f32 %v826, %v1071
        %v1073 = vpop.f32.mrf.mxu0
        %v1074 = vpop.f32.mrf.mxu0
        %v1075 = vadd.f32 %v829, %v1074
        %v1076 = vpop.f32.mrf.mxu0
        %1077 = vmatprep.mubr.bf16.mxu0 0
        %1078 = vmatmul.mubr.bf16.gmra.mxu0 %v958
        %v1079 = vpop.f32.mrf.mxu0
        %v1080 = vadd.f32 %v834, %v1079
        %v1081 = vpop.f32.mrf.mxu0
        %v1082 = vpop.f32.mrf.mxu0
        %v1083 = vadd.f32 %v837, %v1082
        %v1084 = vpop.f32.mrf.mxu0
        %1085 = vmatprep.mubr.bf16.mxu0 0
        %1086 = vmatmul.mubr.bf16.gmra.mxu0 %v960
        %v1087 = vpop.f32.mrf.mxu0
        %v1088 = vadd.f32 %v842, %v1087
        %v1089 = vpop.f32.mrf.mxu0
        %v1090 = vpop.f32.mrf.mxu0
        %v1091 = vadd.f32 %v845, %v1090
        %v1092 = vpop.f32.mrf.mxu0
        %1093 = vmatprep.mubr.bf16.mxu0 0
        %1094 = vmatmul.mubr.bf16.gmra.mxu0 %v962
        %v1095 = vpop.f32.mrf.mxu0
        %v1096 = vadd.f32 %v850, %v1095
        %v1097 = vpop.f32.mrf.mxu0
        %v1098 = vpop.f32.mrf.mxu0
        %v1099 = vadd.f32 %v853, %v1098
        %v1100 = vpop.f32.mrf.mxu0
        %1101 = vmatprep.mubr.bf16.mxu0 0
        %1102 = vmatmul.mubr.bf16.gmra.mxu0 %v964
        %v1103 = vpop.f32.mrf.mxu0
        %v1104 = vadd.f32 %v858, %v1103
        %v1105 = vpop.f32.mrf.mxu0
        %v1106 = vpop.f32.mrf.mxu0
        %v1107 = vadd.f32 %v861, %v1106
        %v1108 = vpop.f32.mrf.mxu0
        %1109 = vmatprep.mubr.bf16.mxu0 0
        %1110 = vmatmul.mubr.bf16.gmra.mxu0 %v966
        %v1111 = vpop.f32.mrf.mxu0
        %v1112 = vadd.f32 %v866, %v1111
        %v1113 = vpop.f32.mrf.mxu0
        %v1114 = vpop.f32.mrf.mxu0
        %v1115 = vadd.f32 %v869, %v1114
        %v1116 = vpop.f32.mrf.mxu0
        %1117 = vmatprep.mubr.bf16.mxu0 0
        %1118 = vmatmul.mubr.bf16.gmra.mxu0 %v968
        %v1119 = vpop.f32.mrf.mxu0
        %v1120 = vadd.f32 %v874, %v1119
        %v1121 = vpop.f32.mrf.mxu0
        %v1122 = vpop.f32.mrf.mxu0
        %v1123 = vadd.f32 %v877, %v1122
        %v1124 = vpop.f32.mrf.mxu0
        %1125 = vmatprep.mubr.bf16.mxu0 0
        %1126 = vmatmul.mubr.bf16.gmra.mxu0 %v970
        %v1127 = vpop.f32.mrf.mxu0
        %v1128 = vadd.f32 %v882, %v1127
        %v1129 = vpop.f32.mrf.mxu0
        %v1130 = vpop.f32.mrf.mxu0
        %v1131 = vadd.f32 %v885, %v1130
        %v1132 = vpop.f32.mrf.mxu0
        %1133 = vmatprep.mubr.bf16.mxu0 0
        %1134 = vmatmul.mubr.bf16.gmra.mxu0 %v972
        %v1135 = vpop.f32.mrf.mxu0
        %v1136 = vadd.f32 %v890, %v1135
        %v1137 = vpop.f32.mrf.mxu0
        %v1138 = vpop.f32.mrf.mxu0
        %v1139 = vadd.f32 %v893, %v1138
        %v1140 = vpop.f32.mrf.mxu0
        %1141 = vmatprep.mubr.bf16.mxu0 0
        %1142 = vmatmul.mubr.bf16.gmra.mxu0 %v974
        %v1143 = vpop.f32.mrf.mxu0
        %v1144 = vadd.f32 %v898, %v1143
        %v1145 = vpop.f32.mrf.mxu0
        %v1146 = vpop.f32.mrf.mxu0
        %v1147 = vadd.f32 %v901, %v1146
        %v1148 = vpop.f32.mrf.mxu0
        %1149 = vmatprep.mubr.bf16.mxu0 0
        %1150 = vmatmul.mubr.bf16.gmra.mxu0 %v976
        %v1151 = vpop.f32.mrf.mxu0
        %v1152 = vadd.f32 %v906, %v1151
        %v1153 = vpop.f32.mrf.mxu0
        %v1154 = vpop.f32.mrf.mxu0
        %v1155 = vadd.f32 %v909, %v1154
        %v1156 = vpop.f32.mrf.mxu0
        %1157 = vmatprep.mubr.bf16.mxu0 0
        %1158 = vmatmul.mubr.bf16.gmra.mxu0 %v978
        %v1159 = vpop.f32.mrf.mxu0
        %v1160 = vadd.f32 %v914, %v1159
        %v1161 = vpop.f32.mrf.mxu0
        %v1162 = vpop.f32.mrf.mxu0
        %v1163 = vadd.f32 %v917, %v1162
        %v1164 = vpop.f32.mrf.mxu0
        %1165 = vmatprep.mubr.bf16.mxu0 0
        %1166 = vmatmul.mubr.bf16.gmra.mxu0 %v980
        %v1167 = vpop.f32.mrf.mxu0
        %v1168 = vadd.f32 %v922, %v1167
        %v1169 = vpop.f32.mrf.mxu0
        %v1170 = vpop.f32.mrf.mxu0
        %v1171 = vadd.f32 %v925, %v1170
        %v1172 = vpop.f32.mrf.mxu0
        %1173 = vmatprep.mubr.bf16.mxu0 0
        %1174 = vmatmul.mubr.bf16.gmra.mxu0 %v982
        %v1175 = vpop.f32.mrf.mxu0
        %v1176 = vadd.f32 %v930, %v1175
        %v1177 = vpop.f32.mrf.mxu0
        %v1178 = vpop.f32.mrf.mxu0
        %v1179 = vadd.f32 %v933, %v1178
        %v1180 = vpop.f32.mrf.mxu0
        %1181 = vmatprep.mubr.bf16.mxu0 0
        %1182 = vmatmul.mubr.bf16.gmra.mxu0 %v984
        %v1183 = vpop.f32.mrf.mxu0
        %v1184 = vadd.f32 %v938, %v1183
        %v1185 = vpop.f32.mrf.mxu0
        %v1186 = vpop.f32.mrf.mxu0
        %v1187 = vadd.f32 %v941, %v1186
        %v1188 = vpop.f32.mrf.mxu0
        %1189 = vdwg.mxu0
        %s1190 = scalar_lea.vmem %s2, 4
        %v1191 = vld [vmem:[%s1190] sm:$0x3]
        %vm1192 = vcmask 1046528
        %v1193 = vrot.slane %v480, 1
        %v1194 = vrot.slane %v481, 1
        %v1195 = vsel %vm1192, %v1193, %v1194
        %v1196 = vrot.slane %v482, 1
        %v1197 = vsel %vm1192, %v1194, %v1196
        %v1198 = vrot.slane %v483, 1
        %v1199 = vsel %vm1192, %v1196, %v1198
        %v1200 = vrot.slane %v484, 1
        %v1201 = vsel %vm1192, %v1198, %v1200
        %v1202 = vrot.slane %v485, 1
        %v1203 = vsel %vm1192, %v1200, %v1202
        %v1204 = vrot.slane %v486, 1
        %v1205 = vsel %vm1192, %v1202, %v1204
        %v1206 = vrot.slane %v487, 1
        %v1207 = vsel %vm1192, %v1204, %v1206
        %v1208 = vrot.slane %v488, 1
        %v1209 = vsel %vm1192, %v1206, %v1208
        %v1210 = vrot.slane %v489, 1
        %v1211 = vsel %vm1192, %v1208, %v1210
        %v1212 = vrot.slane %v490, 1
        %v1213 = vsel %vm1192, %v1210, %v1212
        %v1214 = vrot.slane %v491, 1
        %v1215 = vsel %vm1192, %v1212, %v1214
        %v1216 = vrot.slane %v492, 1
        %v1217 = vsel %vm1192, %v1214, %v1216
        %v1218 = vrot.slane %v493, 1
        %v1219 = vsel %vm1192, %v1216, %v1218
        %v1220 = vrot.slane %v494, 1
        %v1221 = vsel %vm1192, %v1218, %v1220
        %v1222 = vrot.slane %v495, 1
        %v1223 = vsel %vm1192, %v1220, %v1222
        %v1224 = vrot.slane %v496, 1
        %v1225 = vsel %vm1192, %v1222, %v1224
        %v1226 = vrot.slane %v497, 1
        %v1227 = vsel %vm1192, %v1224, %v1226
        %v1228 = vrot.slane %v498, 1
        %v1229 = vsel %vm1192, %v1226, %v1228
        %v1230 = vrot.slane %v499, 1
        %v1231 = vsel %vm1192, %v1228, %v1230
        %v1232 = vrot.slane %v500, 1
        %v1233 = vsel %vm1192, %v1230, %v1232
        %v1234 = vrot.slane %v501, 1
        %v1235 = vsel %vm1192, %v1232, %v1234
        %v1237 = vsel %vm675, %v1195, 0
        %v1240 = vsel %vm675, %v1197, 0
        %v1243 = vsel %vm675, %v1199, 0
        %v1246 = vsel %vm675, %v1201, 0
        %v1249 = vsel %vm675, %v1203, 0
        %v1252 = vsel %vm675, %v1205, 0
        %v1255 = vsel %vm675, %v1207, 0
        %v1258 = vsel %vm675, %v1209, 0
        %v1261 = vsel %vm675, %v1211, 0
        %v1264 = vsel %vm675, %v1213, 0
        %v1267 = vsel %vm675, %v1215, 0
        %v1270 = vsel %vm675, %v1217, 0
        %v1273 = vsel %vm675, %v1219, 0
        %v1276 = vsel %vm675, %v1221, 0
        %v1279 = vsel %vm675, %v1223, 0
        %v1282 = vsel %vm675, %v1225, 0
        %v1285 = vsel %vm675, %v1227, 0
        %v1288 = vsel %vm675, %v1229, 0
        %v1291 = vsel %vm675, %v1231, 0
        %v1294 = vsel %vm675, %v1233, 0
        %v1297 = vsel %vm675, %v1235, 0
        %v1300 = vsel %vm739, %v1191, 0
        %1302 = vmatprep.subr.bf16.mxu0 0
        %1303 = vmatpush1.bf16.msra.mxu0 0
        %1304 = vmatprep.subr.bf16.mxu0 0
        %1305 = vmatpush1.bf16.msra.mxu0 0
        %1306 = vmatprep.subr.bf16.mxu0 0
        %1307 = vmatpush1.bf16.msra.mxu0 0
        %1308 = vmatprep.subr.bf16.mxu0 0
        %1309 = vmatpush1.bf16.msra.mxu0 0
        %1310 = vmatprep.subr.bf16.mxu0 0
        %1311 = vmatpush1.bf16.msra.mxu0 0
        %1312 = vmatprep.subr.bf16.mxu0 0
        %1313 = vmatpush1.bf16.msra.mxu0 0
        %1314 = vmatprep.subr.bf16.mxu0 0
        %1315 = vmatpush1.bf16.msra.mxu0 0
        %1316 = vmatprep.subr.bf16.mxu0 0
        %1317 = vmatpush1.bf16.msra.mxu0 %v1300
        %1318 = vmatprep.subr.bf16.mxu0 0
        %1319 = vmatpush2.bf16.msra.mxu0 0
        %1320 = vmatprep.subr.bf16.mxu0 0
        %1321 = vmatpush2.bf16.msra.mxu0 0
        %1322 = vmatprep.subr.bf16.mxu0 0
        %1323 = vmatpush2.bf16.msra.mxu0 0
        %1324 = vmatprep.subr.bf16.mxu0 0
        %1325 = vmatpush2.bf16.msra.mxu0 0
        %1326 = vmatprep.subr.bf16.mxu0 0
        %1327 = vmatpush2.bf16.msra.mxu0 0
        %1328 = vmatprep.subr.bf16.mxu0 0
        %1329 = vmatpush2.bf16.msra.mxu0 0
        %1330 = vmatprep.subr.bf16.mxu0 0
        %1331 = vmatpush2.bf16.msra.mxu0 0
        %1332 = vmatprep.subr.bf16.mxu0 0
        %1333 = vmatpush2.bf16.msra.mxu0 0
        %1334 = vmatprep.mubr.bf16.mxu0 0
        %1335 = vmatmul.mubr.bf16.gmra.mxu0 %v1237
        %v1336 = vpop.f32.mrf.mxu0
        %v1337 = vadd.f32 0.0, %v1336
        %v1338 = vpop.f32.mrf.mxu0
        %v1339 = vpop.f32.mrf.mxu0
        %v1340 = vadd.f32 0.0, %v1339
        %v1341 = vpop.f32.mrf.mxu0
        %1342 = vmatprep.mubr.bf16.mxu0 0
        %1343 = vmatmul.mubr.bf16.gmra.mxu0 %v1240
        %v1344 = vpop.f32.mrf.mxu0
        %v1345 = vadd.f32 0.0, %v1344
        %v1346 = vpop.f32.mrf.mxu0
        %v1347 = vpop.f32.mrf.mxu0
        %v1348 = vadd.f32 0.0, %v1347
        %v1349 = vpop.f32.mrf.mxu0
        %1350 = vmatprep.mubr.bf16.mxu0 0
        %1351 = vmatmul.mubr.bf16.gmra.mxu0 %v1243
        %v1352 = vpop.f32.mrf.mxu0
        %v1353 = vadd.f32 0.0, %v1352
        %v1354 = vpop.f32.mrf.mxu0
        %v1355 = vpop.f32.mrf.mxu0
        %v1356 = vadd.f32 0.0, %v1355
        %v1357 = vpop.f32.mrf.mxu0
        %1358 = vmatprep.mubr.bf16.mxu0 0
        %1359 = vmatmul.mubr.bf16.gmra.mxu0 %v1246
        %v1360 = vpop.f32.mrf.mxu0
        %v1361 = vadd.f32 0.0, %v1360
        %v1362 = vpop.f32.mrf.mxu0
        %v1363 = vpop.f32.mrf.mxu0
        %v1364 = vadd.f32 0.0, %v1363
        %v1365 = vpop.f32.mrf.mxu0
        %1366 = vmatprep.mubr.bf16.mxu0 0
        %1367 = vmatmul.mubr.bf16.gmra.mxu0 %v1249
        %v1368 = vpop.f32.mrf.mxu0
        %v1369 = vadd.f32 0.0, %v1368
        %v1370 = vpop.f32.mrf.mxu0
        %v1371 = vpop.f32.mrf.mxu0
        %v1372 = vadd.f32 0.0, %v1371
        %v1373 = vpop.f32.mrf.mxu0
        %1374 = vmatprep.mubr.bf16.mxu0 0
        %1375 = vmatmul.mubr.bf16.gmra.mxu0 %v1252
        %v1376 = vpop.f32.mrf.mxu0
        %v1377 = vadd.f32 0.0, %v1376
        %v1378 = vpop.f32.mrf.mxu0
        %v1379 = vpop.f32.mrf.mxu0
        %v1380 = vadd.f32 0.0, %v1379
        %v1381 = vpop.f32.mrf.mxu0
        %1382 = vmatprep.mubr.bf16.mxu0 0
        %1383 = vmatmul.mubr.bf16.gmra.mxu0 %v1255
        %v1384 = vpop.f32.mrf.mxu0
        %v1385 = vadd.f32 0.0, %v1384
        %v1386 = vpop.f32.mrf.mxu0
        %v1387 = vpop.f32.mrf.mxu0
        %v1388 = vadd.f32 0.0, %v1387
        %v1389 = vpop.f32.mrf.mxu0
        %1390 = vmatprep.mubr.bf16.mxu0 0
        %1391 = vmatmul.mubr.bf16.gmra.mxu0 %v1258
        %v1392 = vpop.f32.mrf.mxu0
        %v1393 = vadd.f32 0.0, %v1392
        %v1394 = vpop.f32.mrf.mxu0
        %v1395 = vpop.f32.mrf.mxu0
        %v1396 = vadd.f32 0.0, %v1395
        %v1397 = vpop.f32.mrf.mxu0
        %1398 = vmatprep.mubr.bf16.mxu0 0
        %1399 = vmatmul.mubr.bf16.gmra.mxu0 %v1261
        %v1400 = vpop.f32.mrf.mxu0
        %v1401 = vadd.f32 0.0, %v1400
        %v1402 = vpop.f32.mrf.mxu0
        %v1403 = vpop.f32.mrf.mxu0
        %v1404 = vadd.f32 0.0, %v1403
        %v1405 = vpop.f32.mrf.mxu0
        %1406 = vmatprep.mubr.bf16.mxu0 0
        %1407 = vmatmul.mubr.bf16.gmra.mxu0 %v1264
        %v1408 = vpop.f32.mrf.mxu0
        %v1409 = vadd.f32 0.0, %v1408
        %v1410 = vpop.f32.mrf.mxu0
        %v1411 = vpop.f32.mrf.mxu0
        %v1412 = vadd.f32 0.0, %v1411
        %v1413 = vpop.f32.mrf.mxu0
        %1414 = vmatprep.mubr.bf16.mxu0 0
        %1415 = vmatmul.mubr.bf16.gmra.mxu0 %v1267
        %v1416 = vpop.f32.mrf.mxu0
        %v1417 = vadd.f32 0.0, %v1416
        %v1418 = vpop.f32.mrf.mxu0
        %v1419 = vpop.f32.mrf.mxu0
        %v1420 = vadd.f32 0.0, %v1419
        %v1421 = vpop.f32.mrf.mxu0
        %1422 = vmatprep.mubr.bf16.mxu0 0
        %1423 = vmatmul.mubr.bf16.gmra.mxu0 %v1270
        %v1424 = vpop.f32.mrf.mxu0
        %v1425 = vadd.f32 0.0, %v1424
        %v1426 = vpop.f32.mrf.mxu0
        %v1427 = vpop.f32.mrf.mxu0
        %v1428 = vadd.f32 0.0, %v1427
        %v1429 = vpop.f32.mrf.mxu0
        %1430 = vmatprep.mubr.bf16.mxu0 0
        %1431 = vmatmul.mubr.bf16.gmra.mxu0 %v1273
        %v1432 = vpop.f32.mrf.mxu0
        %v1433 = vadd.f32 0.0, %v1432
        %v1434 = vpop.f32.mrf.mxu0
        %v1435 = vpop.f32.mrf.mxu0
        %v1436 = vadd.f32 0.0, %v1435
        %v1437 = vpop.f32.mrf.mxu0
        %1438 = vmatprep.mubr.bf16.mxu0 0
        %1439 = vmatmul.mubr.bf16.gmra.mxu0 %v1276
        %v1440 = vpop.f32.mrf.mxu0
        %v1441 = vadd.f32 0.0, %v1440
        %v1442 = vpop.f32.mrf.mxu0
        %v1443 = vpop.f32.mrf.mxu0
        %v1444 = vadd.f32 0.0, %v1443
        %v1445 = vpop.f32.mrf.mxu0
        %1446 = vmatprep.mubr.bf16.mxu0 0
        %1447 = vmatmul.mubr.bf16.gmra.mxu0 %v1279
        %v1448 = vpop.f32.mrf.mxu0
        %v1449 = vadd.f32 0.0, %v1448
        %v1450 = vpop.f32.mrf.mxu0
        %v1451 = vpop.f32.mrf.mxu0
        %v1452 = vadd.f32 0.0, %v1451
        %v1453 = vpop.f32.mrf.mxu0
        %1454 = vmatprep.mubr.bf16.mxu0 0
        %1455 = vmatmul.mubr.bf16.gmra.mxu0 %v1282
        %v1456 = vpop.f32.mrf.mxu0
        %v1457 = vadd.f32 0.0, %v1456
        %v1458 = vpop.f32.mrf.mxu0
        %v1459 = vpop.f32.mrf.mxu0
        %v1460 = vadd.f32 0.0, %v1459
        %v1461 = vpop.f32.mrf.mxu0
        %1462 = vmatprep.mubr.bf16.mxu0 0
        %1463 = vmatmul.mubr.bf16.gmra.mxu0 %v1285
        %v1464 = vpop.f32.mrf.mxu0
        %v1465 = vadd.f32 0.0, %v1464
        %v1466 = vpop.f32.mrf.mxu0
        %v1467 = vpop.f32.mrf.mxu0
        %v1468 = vadd.f32 0.0, %v1467
        %v1469 = vpop.f32.mrf.mxu0
        %1470 = vmatprep.mubr.bf16.mxu0 0
        %1471 = vmatmul.mubr.bf16.gmra.mxu0 %v1288
        %v1472 = vpop.f32.mrf.mxu0
        %v1473 = vadd.f32 0.0, %v1472
        %v1474 = vpop.f32.mrf.mxu0
        %v1475 = vpop.f32.mrf.mxu0
        %v1476 = vadd.f32 0.0, %v1475
        %v1477 = vpop.f32.mrf.mxu0
        %1478 = vmatprep.mubr.bf16.mxu0 0
        %1479 = vmatmul.mubr.bf16.gmra.mxu0 %v1291
        %v1480 = vpop.f32.mrf.mxu0
        %v1481 = vadd.f32 0.0, %v1480
        %v1482 = vpop.f32.mrf.mxu0
        %v1483 = vpop.f32.mrf.mxu0
        %v1484 = vadd.f32 0.0, %v1483
        %v1485 = vpop.f32.mrf.mxu0
        %1486 = vmatprep.mubr.bf16.mxu0 0
        %1487 = vmatmul.mubr.bf16.gmra.mxu0 %v1294
        %v1488 = vpop.f32.mrf.mxu0
        %v1489 = vadd.f32 0.0, %v1488
        %v1490 = vpop.f32.mrf.mxu0
        %v1491 = vpop.f32.mrf.mxu0
        %v1492 = vadd.f32 0.0, %v1491
        %v1493 = vpop.f32.mrf.mxu0
        %1494 = vmatprep.mubr.bf16.mxu0 0
        %1495 = vmatmul.mubr.bf16.gmra.mxu0 %v1297
        %v1496 = vpop.f32.mrf.mxu0
        %v1497 = vadd.f32 0.0, %v1496
        %v1498 = vpop.f32.mrf.mxu0
        %v1499 = vpop.f32.mrf.mxu0
        %v1500 = vadd.f32 0.0, %v1499
        %v1501 = vpop.f32.mrf.mxu0
        %1502 = vdwg.mxu0
        %v1503 = vadd.f32 %v1024, %v1337
        %v1504 = vadd.f32 %v1027, %v1340
        %v1505 = vadd.f32 %v1032, %v1345
        %v1506 = vadd.f32 %v1035, %v1348
        %v1507 = vadd.f32 %v1040, %v1353
        %v1508 = vadd.f32 %v1043, %v1356
        %v1509 = vadd.f32 %v1048, %v1361
        %v1510 = vadd.f32 %v1051, %v1364
        %v1511 = vadd.f32 %v1056, %v1369
        %v1512 = vadd.f32 %v1059, %v1372
        %v1513 = vadd.f32 %v1064, %v1377
        %v1514 = vadd.f32 %v1067, %v1380
        %v1515 = vadd.f32 %v1072, %v1385
        %v1516 = vadd.f32 %v1075, %v1388
        %v1517 = vadd.f32 %v1080, %v1393
        %v1518 = vadd.f32 %v1083, %v1396
        %v1519 = vadd.f32 %v1088, %v1401
        %v1520 = vadd.f32 %v1091, %v1404
        %v1521 = vadd.f32 %v1096, %v1409
        %v1522 = vadd.f32 %v1099, %v1412
        %v1523 = vadd.f32 %v1104, %v1417
        %v1524 = vadd.f32 %v1107, %v1420
        %v1525 = vadd.f32 %v1112, %v1425
        %v1526 = vadd.f32 %v1115, %v1428
        %v1527 = vadd.f32 %v1120, %v1433
        %v1528 = vadd.f32 %v1123, %v1436
        %v1529 = vadd.f32 %v1128, %v1441
        %v1530 = vadd.f32 %v1131, %v1444
        %v1531 = vadd.f32 %v1136, %v1449
        %v1532 = vadd.f32 %v1139, %v1452
        %v1533 = vadd.f32 %v1144, %v1457
        %v1534 = vadd.f32 %v1147, %v1460
        %v1535 = vadd.f32 %v1152, %v1465
        %v1536 = vadd.f32 %v1155, %v1468
        %v1537 = vadd.f32 %v1160, %v1473
        %v1538 = vadd.f32 %v1163, %v1476
        %v1539 = vadd.f32 %v1168, %v1481
        %v1540 = vadd.f32 %v1171, %v1484
        %v1541 = vadd.f32 %v1176, %v1489
        %v1542 = vadd.f32 %v1179, %v1492
        %v1543 = vadd.f32 %v1184, %v1497
        %v1544 = vadd.f32 %v1187, %v1500
        %s1545 = scalar_lea.vmem %s2, 6
        %v1546 = vld [vmem:[%s1545] sm:$0x3]
        %v1549 = vunpack.c.l.b16 %v387
        %v1550 = vunpack.c.l.b16 %v388
        %v1551 = vpack.c.b16 %v1549, %v479
        %v1552 = vpack.c.b16 %v1550, %v1550
        %v1553 = vrot.slane %v1551, 1
        %v1554 = vsel %vm1192, %v1232, %v1553
        %v1555 = vrot.slane %v1552, 1
        %v1556 = vsel %vm1192, %v1553, %v1555
        %v1558 = vsel %vm675, %v1554, 0
        %v1561 = vsel %vm675, %v1556, 0
        %v1564 = vsel %vm739, %v1546, 0
        %1566 = vmatprep.subr.bf16.mxu0 0
        %1567 = vmatpush1.bf16.msra.mxu0 0
        %1568 = vmatprep.subr.bf16.mxu0 0
        %1569 = vmatpush1.bf16.msra.mxu0 0
        %1570 = vmatprep.subr.bf16.mxu0 0
        %1571 = vmatpush1.bf16.msra.mxu0 0
        %1572 = vmatprep.subr.bf16.mxu0 0
        %1573 = vmatpush1.bf16.msra.mxu0 0
        %1574 = vmatprep.subr.bf16.mxu0 0
        %1575 = vmatpush1.bf16.msra.mxu0 0
        %1576 = vmatprep.subr.bf16.mxu0 0
        %1577 = vmatpush1.bf16.msra.mxu0 0
        %1578 = vmatprep.subr.bf16.mxu0 0
        %1579 = vmatpush1.bf16.msra.mxu0 0
        %1580 = vmatprep.subr.bf16.mxu0 0
        %1581 = vmatpush1.bf16.msra.mxu0 %v1564
        %1582 = vmatprep.subr.bf16.mxu0 0
        %1583 = vmatpush2.bf16.msra.mxu0 0
        %1584 = vmatprep.subr.bf16.mxu0 0
        %1585 = vmatpush2.bf16.msra.mxu0 0
        %1586 = vmatprep.subr.bf16.mxu0 0
        %1587 = vmatpush2.bf16.msra.mxu0 0
        %1588 = vmatprep.subr.bf16.mxu0 0
        %1589 = vmatpush2.bf16.msra.mxu0 0
        %1590 = vmatprep.subr.bf16.mxu0 0
        %1591 = vmatpush2.bf16.msra.mxu0 0
        %1592 = vmatprep.subr.bf16.mxu0 0
        %1593 = vmatpush2.bf16.msra.mxu0 0
        %1594 = vmatprep.subr.bf16.mxu0 0
        %1595 = vmatpush2.bf16.msra.mxu0 0
        %1596 = vmatprep.subr.bf16.mxu0 0
        %1597 = vmatpush2.bf16.msra.mxu0 0
        %1598 = vmatprep.mubr.bf16.mxu0 0
        %1599 = vmatmul.mubr.bf16.gmra.mxu0 %v1240
        %v1600 = vpop.f32.mrf.mxu0
        %v1601 = vadd.f32 0.0, %v1600
        %v1602 = vpop.f32.mrf.mxu0
        %v1603 = vpop.f32.mrf.mxu0
        %v1604 = vadd.f32 0.0, %v1603
        %v1605 = vpop.f32.mrf.mxu0
        %1606 = vmatprep.mubr.bf16.mxu0 0
        %1607 = vmatmul.mubr.bf16.gmra.mxu0 %v1243
        %v1608 = vpop.f32.mrf.mxu0
        %v1609 = vadd.f32 0.0, %v1608
        %v1610 = vpop.f32.mrf.mxu0
        %v1611 = vpop.f32.mrf.mxu0
        %v1612 = vadd.f32 0.0, %v1611
        %v1613 = vpop.f32.mrf.mxu0
        %1614 = vmatprep.mubr.bf16.mxu0 0
        %1615 = vmatmul.mubr.bf16.gmra.mxu0 %v1246
        %v1616 = vpop.f32.mrf.mxu0
        %v1617 = vadd.f32 0.0, %v1616
        %v1618 = vpop.f32.mrf.mxu0
        %v1619 = vpop.f32.mrf.mxu0
        %v1620 = vadd.f32 0.0, %v1619
        %v1621 = vpop.f32.mrf.mxu0
        %1622 = vmatprep.mubr.bf16.mxu0 0
        %1623 = vmatmul.mubr.bf16.gmra.mxu0 %v1249
        %v1624 = vpop.f32.mrf.mxu0
        %v1625 = vadd.f32 0.0, %v1624
        %v1626 = vpop.f32.mrf.mxu0
        %v1627 = vpop.f32.mrf.mxu0
        %v1628 = vadd.f32 0.0, %v1627
        %v1629 = vpop.f32.mrf.mxu0
        %1630 = vmatprep.mubr.bf16.mxu0 0
        %1631 = vmatmul.mubr.bf16.gmra.mxu0 %v1252
        %v1632 = vpop.f32.mrf.mxu0
        %v1633 = vadd.f32 0.0, %v1632
        %v1634 = vpop.f32.mrf.mxu0
        %v1635 = vpop.f32.mrf.mxu0
        %v1636 = vadd.f32 0.0, %v1635
        %v1637 = vpop.f32.mrf.mxu0
        %1638 = vmatprep.mubr.bf16.mxu0 0
        %1639 = vmatmul.mubr.bf16.gmra.mxu0 %v1255
        %v1640 = vpop.f32.mrf.mxu0
        %v1641 = vadd.f32 0.0, %v1640
        %v1642 = vpop.f32.mrf.mxu0
        %v1643 = vpop.f32.mrf.mxu0
        %v1644 = vadd.f32 0.0, %v1643
        %v1645 = vpop.f32.mrf.mxu0
        %1646 = vmatprep.mubr.bf16.mxu0 0
        %1647 = vmatmul.mubr.bf16.gmra.mxu0 %v1258
        %v1648 = vpop.f32.mrf.mxu0
        %v1649 = vadd.f32 0.0, %v1648
        %v1650 = vpop.f32.mrf.mxu0
        %v1651 = vpop.f32.mrf.mxu0
        %v1652 = vadd.f32 0.0, %v1651
        %v1653 = vpop.f32.mrf.mxu0
        %1654 = vmatprep.mubr.bf16.mxu0 0
        %1655 = vmatmul.mubr.bf16.gmra.mxu0 %v1261
        %v1656 = vpop.f32.mrf.mxu0
        %v1657 = vadd.f32 0.0, %v1656
        %v1658 = vpop.f32.mrf.mxu0
        %v1659 = vpop.f32.mrf.mxu0
        %v1660 = vadd.f32 0.0, %v1659
        %v1661 = vpop.f32.mrf.mxu0
        %1662 = vmatprep.mubr.bf16.mxu0 0
        %1663 = vmatmul.mubr.bf16.gmra.mxu0 %v1264
        %v1664 = vpop.f32.mrf.mxu0
        %v1665 = vadd.f32 0.0, %v1664
        %v1666 = vpop.f32.mrf.mxu0
        %v1667 = vpop.f32.mrf.mxu0
        %v1668 = vadd.f32 0.0, %v1667
        %v1669 = vpop.f32.mrf.mxu0
        %1670 = vmatprep.mubr.bf16.mxu0 0
        %1671 = vmatmul.mubr.bf16.gmra.mxu0 %v1267
        %v1672 = vpop.f32.mrf.mxu0
        %v1673 = vadd.f32 0.0, %v1672
        %v1674 = vpop.f32.mrf.mxu0
        %v1675 = vpop.f32.mrf.mxu0
        %v1676 = vadd.f32 0.0, %v1675
        %v1677 = vpop.f32.mrf.mxu0
        %1678 = vmatprep.mubr.bf16.mxu0 0
        %1679 = vmatmul.mubr.bf16.gmra.mxu0 %v1270
        %v1680 = vpop.f32.mrf.mxu0
        %v1681 = vadd.f32 0.0, %v1680
        %v1682 = vpop.f32.mrf.mxu0
        %v1683 = vpop.f32.mrf.mxu0
        %v1684 = vadd.f32 0.0, %v1683
        %v1685 = vpop.f32.mrf.mxu0
        %1686 = vmatprep.mubr.bf16.mxu0 0
        %1687 = vmatmul.mubr.bf16.gmra.mxu0 %v1273
        %v1688 = vpop.f32.mrf.mxu0
        %v1689 = vadd.f32 0.0, %v1688
        %v1690 = vpop.f32.mrf.mxu0
        %v1691 = vpop.f32.mrf.mxu0
        %v1692 = vadd.f32 0.0, %v1691
        %v1693 = vpop.f32.mrf.mxu0
        %1694 = vmatprep.mubr.bf16.mxu0 0
        %1695 = vmatmul.mubr.bf16.gmra.mxu0 %v1276
        %v1696 = vpop.f32.mrf.mxu0
        %v1697 = vadd.f32 0.0, %v1696
        %v1698 = vpop.f32.mrf.mxu0
        %v1699 = vpop.f32.mrf.mxu0
        %v1700 = vadd.f32 0.0, %v1699
        %v1701 = vpop.f32.mrf.mxu0
        %1702 = vmatprep.mubr.bf16.mxu0 0
        %1703 = vmatmul.mubr.bf16.gmra.mxu0 %v1279
        %v1704 = vpop.f32.mrf.mxu0
        %v1705 = vadd.f32 0.0, %v1704
        %v1706 = vpop.f32.mrf.mxu0
        %v1707 = vpop.f32.mrf.mxu0
        %v1708 = vadd.f32 0.0, %v1707
        %v1709 = vpop.f32.mrf.mxu0
        %1710 = vmatprep.mubr.bf16.mxu0 0
        %1711 = vmatmul.mubr.bf16.gmra.mxu0 %v1282
        %v1712 = vpop.f32.mrf.mxu0
        %v1713 = vadd.f32 0.0, %v1712
        %v1714 = vpop.f32.mrf.mxu0
        %v1715 = vpop.f32.mrf.mxu0
        %v1716 = vadd.f32 0.0, %v1715
        %v1717 = vpop.f32.mrf.mxu0
        %1718 = vmatprep.mubr.bf16.mxu0 0
        %1719 = vmatmul.mubr.bf16.gmra.mxu0 %v1285
        %v1720 = vpop.f32.mrf.mxu0
        %v1721 = vadd.f32 0.0, %v1720
        %v1722 = vpop.f32.mrf.mxu0
        %v1723 = vpop.f32.mrf.mxu0
        %v1724 = vadd.f32 0.0, %v1723
        %v1725 = vpop.f32.mrf.mxu0
        %1726 = vmatprep.mubr.bf16.mxu0 0
        %1727 = vmatmul.mubr.bf16.gmra.mxu0 %v1288
        %v1728 = vpop.f32.mrf.mxu0
        %v1729 = vadd.f32 0.0, %v1728
        %v1730 = vpop.f32.mrf.mxu0
        %v1731 = vpop.f32.mrf.mxu0
        %v1732 = vadd.f32 0.0, %v1731
        %v1733 = vpop.f32.mrf.mxu0
        %1734 = vmatprep.mubr.bf16.mxu0 0
        %1735 = vmatmul.mubr.bf16.gmra.mxu0 %v1291
        %v1736 = vpop.f32.mrf.mxu0
        %v1737 = vadd.f32 0.0, %v1736
        %v1738 = vpop.f32.mrf.mxu0
        %v1739 = vpop.f32.mrf.mxu0
        %v1740 = vadd.f32 0.0, %v1739
        %v1741 = vpop.f32.mrf.mxu0
        %1742 = vmatprep.mubr.bf16.mxu0 0
        %1743 = vmatmul.mubr.bf16.gmra.mxu0 %v1294
        %v1744 = vpop.f32.mrf.mxu0
        %v1745 = vadd.f32 0.0, %v1744
        %v1746 = vpop.f32.mrf.mxu0
        %v1747 = vpop.f32.mrf.mxu0
        %v1748 = vadd.f32 0.0, %v1747
        %v1749 = vpop.f32.mrf.mxu0
        %1750 = vmatprep.mubr.bf16.mxu0 0
        %1751 = vmatmul.mubr.bf16.gmra.mxu0 %v1558
        %v1752 = vpop.f32.mrf.mxu0
        %v1753 = vadd.f32 0.0, %v1752
        %v1754 = vpop.f32.mrf.mxu0
        %v1755 = vpop.f32.mrf.mxu0
        %v1756 = vadd.f32 0.0, %v1755
        %v1757 = vpop.f32.mrf.mxu0
        %1758 = vmatprep.mubr.bf16.mxu0 0
        %1759 = vmatmul.mubr.bf16.gmra.mxu0 %v1561
        %v1760 = vpop.f32.mrf.mxu0
        %v1761 = vadd.f32 0.0, %v1760
        %v1762 = vpop.f32.mrf.mxu0
        %v1763 = vpop.f32.mrf.mxu0
        %v1764 = vadd.f32 0.0, %v1763
        %v1765 = vpop.f32.mrf.mxu0
        %1766 = vdwg.mxu0
        %v1767 = vadd.f32 %v1503, %v1601
        %v1768 = vadd.f32 %v1504, %v1604
        %v1769 = vadd.f32 %v1505, %v1609
        %v1770 = vadd.f32 %v1506, %v1612
        %v1771 = vadd.f32 %v1507, %v1617
        %v1772 = vadd.f32 %v1508, %v1620
        %v1773 = vadd.f32 %v1509, %v1625
        %v1774 = vadd.f32 %v1510, %v1628
        %v1775 = vadd.f32 %v1511, %v1633
        %v1776 = vadd.f32 %v1512, %v1636
        %v1777 = vadd.f32 %v1513, %v1641
        %v1778 = vadd.f32 %v1514, %v1644
        %v1779 = vadd.f32 %v1515, %v1649
        %v1780 = vadd.f32 %v1516, %v1652
        %v1781 = vadd.f32 %v1517, %v1657
        %v1782 = vadd.f32 %v1518, %v1660
        %v1783 = vadd.f32 %v1519, %v1665
        %v1784 = vadd.f32 %v1520, %v1668
        %v1785 = vadd.f32 %v1521, %v1673
        %v1786 = vadd.f32 %v1522, %v1676
        %v1787 = vadd.f32 %v1523, %v1681
        %v1788 = vadd.f32 %v1524, %v1684
        %v1789 = vadd.f32 %v1525, %v1689
        %v1790 = vadd.f32 %v1526, %v1692
        %v1791 = vadd.f32 %v1527, %v1697
        %v1792 = vadd.f32 %v1528, %v1700
        %v1793 = vadd.f32 %v1529, %v1705
        %v1794 = vadd.f32 %v1530, %v1708
        %v1795 = vadd.f32 %v1531, %v1713
        %v1796 = vadd.f32 %v1532, %v1716
        %v1797 = vadd.f32 %v1533, %v1721
        %v1798 = vadd.f32 %v1534, %v1724
        %v1799 = vadd.f32 %v1535, %v1729
        %v1800 = vadd.f32 %v1536, %v1732
        %v1801 = vadd.f32 %v1537, %v1737
        %v1802 = vadd.f32 %v1538, %v1740
        %v1803 = vadd.f32 %v1539, %v1745
        %v1804 = vadd.f32 %v1540, %v1748
        %v1805 = vadd.f32 %v1541, %v1753
        %v1806 = vadd.f32 %v1542, %v1756
        %v1807 = vadd.f32 %v1543, %v1761
        %v1808 = vadd.f32 %v1544, %v1764
        %s1809 = scalar_lea.vmem %s2, 8
        %v1810 = vld [vmem:[%s1809] sm:$0x3]
        %vm1811 = vsmask.f32 6400
        %v1812 = vrot.slane %v515, 1
        %v1813 = vrot.slane %v511, 2
        %v1814 = vor.u32 %v1812, %v1813
        %v1815 = vrot.slane %v523, 1
        %v1816 = vrot.slane %v519, 2
        %v1817 = vor.u32 %v1815, %v1816
        %v1818 = vsel %vm1811, %v1814, %v1817
        %v1819 = vrot.slane %v531, 1
        %v1820 = vrot.slane %v527, 2
        %v1821 = vor.u32 %v1819, %v1820
        %v1822 = vsel %vm1811, %v1817, %v1821
        %v1823 = vrot.slane %v539, 1
        %v1824 = vrot.slane %v535, 2
        %v1825 = vor.u32 %v1823, %v1824
        %v1826 = vsel %vm1811, %v1821, %v1825
        %v1827 = vrot.slane %v547, 1
        %v1828 = vrot.slane %v543, 2
        %v1829 = vor.u32 %v1827, %v1828
        %v1830 = vsel %vm1811, %v1825, %v1829
        %v1831 = vrot.slane %v555, 1
        %v1832 = vrot.slane %v551, 2
        %v1833 = vor.u32 %v1831, %v1832
        %v1834 = vsel %vm1811, %v1829, %v1833
        %v1835 = vrot.slane %v563, 1
        %v1836 = vrot.slane %v559, 2
        %v1837 = vor.u32 %v1835, %v1836
        %v1838 = vsel %vm1811, %v1833, %v1837
        %v1839 = vrot.slane %v571, 1
        %v1840 = vrot.slane %v567, 2
        %v1841 = vor.u32 %v1839, %v1840
        %v1842 = vsel %vm1811, %v1837, %v1841
        %v1843 = vrot.slane %v579, 1
        %v1844 = vrot.slane %v575, 2
        %v1845 = vor.u32 %v1843, %v1844
        %v1846 = vsel %vm1811, %v1841, %v1845
        %v1847 = vrot.slane %v587, 1
        %v1848 = vrot.slane %v583, 2
        %v1849 = vor.u32 %v1847, %v1848
        %v1850 = vsel %vm1811, %v1845, %v1849
        %v1851 = vrot.slane %v595, 1
        %v1852 = vrot.slane %v591, 2
        %v1853 = vor.u32 %v1851, %v1852
        %v1854 = vsel %vm1811, %v1849, %v1853
        %v1855 = vrot.slane %v603, 1
        %v1856 = vrot.slane %v599, 2
        %v1857 = vor.u32 %v1855, %v1856
        %v1858 = vsel %vm1811, %v1853, %v1857
        %v1859 = vrot.slane %v611, 1
        %v1860 = vrot.slane %v607, 2
        %v1861 = vor.u32 %v1859, %v1860
        %v1862 = vsel %vm1811, %v1857, %v1861
        %v1863 = vrot.slane %v619, 1
        %v1864 = vrot.slane %v615, 2
        %v1865 = vor.u32 %v1863, %v1864
        %v1866 = vsel %vm1811, %v1861, %v1865
        %v1867 = vrot.slane %v627, 1
        %v1868 = vrot.slane %v623, 2
        %v1869 = vor.u32 %v1867, %v1868
        %v1870 = vsel %vm1811, %v1865, %v1869
        %v1871 = vrot.slane %v635, 1
        %v1872 = vrot.slane %v631, 2
        %v1873 = vor.u32 %v1871, %v1872
        %v1874 = vsel %vm1811, %v1869, %v1873
        %v1875 = vrot.slane %v643, 1
        %v1876 = vrot.slane %v639, 2
        %v1877 = vor.u32 %v1875, %v1876
        %v1878 = vsel %vm1811, %v1873, %v1877
        %v1879 = vrot.slane %v651, 1
        %v1880 = vrot.slane %v647, 2
        %v1881 = vor.u32 %v1879, %v1880
        %v1882 = vsel %vm1811, %v1877, %v1881
        %v1883 = vrot.slane %v659, 1
        %v1884 = vrot.slane %v655, 2
        %v1885 = vor.u32 %v1883, %v1884
        %v1886 = vsel %vm1811, %v1881, %v1885
        %v1887 = vrot.slane %v667, 1
        %v1888 = vrot.slane %v663, 2
        %v1889 = vor.u32 %v1887, %v1888
        %v1890 = vsel %vm1811, %v1885, %v1889
        %v1892 = vshrl.u32 %v1551, 16
        %v1894 = vrot.slane %v1892, 1
        %v1895 = vshll.u32 %v1551, 16
        %v1897 = vrot.slane %v1895, 2
        %v1898 = vor.u32 %v1894, %v1897
        %v1899 = vsel %vm1811, %v1889, %v1898
        %v1901 = vshrl.u32 %v1552, 16
        %v1903 = vrot.slane %v1901, 1
        %v1904 = vshll.u32 %v1552, 16
        %v1906 = vrot.slane %v1904, 2
        %v1907 = vor.u32 %v1903, %v1906
        %v1908 = vsel %vm1811, %v1898, %v1907
        %v1910 = vsel %vm675, %v1818, 0
        %v1913 = vsel %vm675, %v1822, 0
        %v1916 = vsel %vm675, %v1826, 0
        %v1919 = vsel %vm675, %v1830, 0
        %v1922 = vsel %vm675, %v1834, 0
        %v1925 = vsel %vm675, %v1838, 0
        %v1928 = vsel %vm675, %v1842, 0
        %v1931 = vsel %vm675, %v1846, 0
        %v1934 = vsel %vm675, %v1850, 0
        %v1937 = vsel %vm675, %v1854, 0
        %v1940 = vsel %vm675, %v1858, 0
        %v1943 = vsel %vm675, %v1862, 0
        %v1946 = vsel %vm675, %v1866, 0
        %v1949 = vsel %vm675, %v1870, 0
        %v1952 = vsel %vm675, %v1874, 0
        %v1955 = vsel %vm675, %v1878, 0
        %v1958 = vsel %vm675, %v1882, 0
        %v1961 = vsel %vm675, %v1886, 0
        %v1964 = vsel %vm675, %v1890, 0
        %v1967 = vsel %vm675, %v1899, 0
        %v1970 = vsel %vm675, %v1908, 0
        %v1973 = vsel %vm739, %v1810, 0
        %1975 = vmatprep.subr.bf16.mxu0 0
        %1976 = vmatpush1.bf16.msra.mxu0 0
        %1977 = vmatprep.subr.bf16.mxu0 0
        %1978 = vmatpush1.bf16.msra.mxu0 0
        %1979 = vmatprep.subr.bf16.mxu0 0
        %1980 = vmatpush1.bf16.msra.mxu0 0
        %1981 = vmatprep.subr.bf16.mxu0 0
        %1982 = vmatpush1.bf16.msra.mxu0 0
        %1983 = vmatprep.subr.bf16.mxu0 0
        %1984 = vmatpush1.bf16.msra.mxu0 0
        %1985 = vmatprep.subr.bf16.mxu0 0
        %1986 = vmatpush1.bf16.msra.mxu0 0
        %1987 = vmatprep.subr.bf16.mxu0 0
        %1988 = vmatpush1.bf16.msra.mxu0 0
        %1989 = vmatprep.subr.bf16.mxu0 0
        %1990 = vmatpush1.bf16.msra.mxu0 %v1973
        %1991 = vmatprep.subr.bf16.mxu0 0
        %1992 = vmatpush2.bf16.msra.mxu0 0
        %1993 = vmatprep.subr.bf16.mxu0 0
        %1994 = vmatpush2.bf16.msra.mxu0 0
        %1995 = vmatprep.subr.bf16.mxu0 0
        %1996 = vmatpush2.bf16.msra.mxu0 0
        %1997 = vmatprep.subr.bf16.mxu0 0
        %1998 = vmatpush2.bf16.msra.mxu0 0
        %1999 = vmatprep.subr.bf16.mxu0 0
        %2000 = vmatpush2.bf16.msra.mxu0 0
        %2001 = vmatprep.subr.bf16.mxu0 0
        %2002 = vmatpush2.bf16.msra.mxu0 0
        %2003 = vmatprep.subr.bf16.mxu0 0
        %2004 = vmatpush2.bf16.msra.mxu0 0
        %2005 = vmatprep.subr.bf16.mxu0 0
        %2006 = vmatpush2.bf16.msra.mxu0 0
        %2007 = vmatprep.mubr.bf16.mxu0 0
        %2008 = vmatmul.mubr.bf16.gmra.mxu0 %v1910
        %v2009 = vpop.f32.mrf.mxu0
        %v2010 = vadd.f32 0.0, %v2009
        %v2011 = vpop.f32.mrf.mxu0
        %v2012 = vpop.f32.mrf.mxu0
        %v2013 = vadd.f32 0.0, %v2012
        %v2014 = vpop.f32.mrf.mxu0
        %2015 = vmatprep.mubr.bf16.mxu0 0
        %2016 = vmatmul.mubr.bf16.gmra.mxu0 %v1913
        %v2017 = vpop.f32.mrf.mxu0
        %v2018 = vadd.f32 0.0, %v2017
        %v2019 = vpop.f32.mrf.mxu0
        %v2020 = vpop.f32.mrf.mxu0
        %v2021 = vadd.f32 0.0, %v2020
        %v2022 = vpop.f32.mrf.mxu0
        %2023 = vmatprep.mubr.bf16.mxu0 0
        %2024 = vmatmul.mubr.bf16.gmra.mxu0 %v1916
        %v2025 = vpop.f32.mrf.mxu0
        %v2026 = vadd.f32 0.0, %v2025
        %v2027 = vpop.f32.mrf.mxu0
        %v2028 = vpop.f32.mrf.mxu0
        %v2029 = vadd.f32 0.0, %v2028
        %v2030 = vpop.f32.mrf.mxu0
        %2031 = vmatprep.mubr.bf16.mxu0 0
        %2032 = vmatmul.mubr.bf16.gmra.mxu0 %v1919
        %v2033 = vpop.f32.mrf.mxu0
        %v2034 = vadd.f32 0.0, %v2033
        %v2035 = vpop.f32.mrf.mxu0
        %v2036 = vpop.f32.mrf.mxu0
        %v2037 = vadd.f32 0.0, %v2036
        %v2038 = vpop.f32.mrf.mxu0
        %2039 = vmatprep.mubr.bf16.mxu0 0
        %2040 = vmatmul.mubr.bf16.gmra.mxu0 %v1922
        %v2041 = vpop.f32.mrf.mxu0
        %v2042 = vadd.f32 0.0, %v2041
        %v2043 = vpop.f32.mrf.mxu0
        %v2044 = vpop.f32.mrf.mxu0
        %v2045 = vadd.f32 0.0, %v2044
        %v2046 = vpop.f32.mrf.mxu0
        %2047 = vmatprep.mubr.bf16.mxu0 0
        %2048 = vmatmul.mubr.bf16.gmra.mxu0 %v1925
        %v2049 = vpop.f32.mrf.mxu0
        %v2050 = vadd.f32 0.0, %v2049
        %v2051 = vpop.f32.mrf.mxu0
        %v2052 = vpop.f32.mrf.mxu0
        %v2053 = vadd.f32 0.0, %v2052
        %v2054 = vpop.f32.mrf.mxu0
        %2055 = vmatprep.mubr.bf16.mxu0 0
        %2056 = vmatmul.mubr.bf16.gmra.mxu0 %v1928
        %v2057 = vpop.f32.mrf.mxu0
        %v2058 = vadd.f32 0.0, %v2057
        %v2059 = vpop.f32.mrf.mxu0
        %v2060 = vpop.f32.mrf.mxu0
        %v2061 = vadd.f32 0.0, %v2060
        %v2062 = vpop.f32.mrf.mxu0
        %2063 = vmatprep.mubr.bf16.mxu0 0
        %2064 = vmatmul.mubr.bf16.gmra.mxu0 %v1931
        %v2065 = vpop.f32.mrf.mxu0
        %v2066 = vadd.f32 0.0, %v2065
        %v2067 = vpop.f32.mrf.mxu0
        %v2068 = vpop.f32.mrf.mxu0
        %v2069 = vadd.f32 0.0, %v2068
        %v2070 = vpop.f32.mrf.mxu0
        %2071 = vmatprep.mubr.bf16.mxu0 0
        %2072 = vmatmul.mubr.bf16.gmra.mxu0 %v1934
        %v2073 = vpop.f32.mrf.mxu0
        %v2074 = vadd.f32 0.0, %v2073
        %v2075 = vpop.f32.mrf.mxu0
        %v2076 = vpop.f32.mrf.mxu0
        %v2077 = vadd.f32 0.0, %v2076
        %v2078 = vpop.f32.mrf.mxu0
        %2079 = vmatprep.mubr.bf16.mxu0 0
        %2080 = vmatmul.mubr.bf16.gmra.mxu0 %v1937
        %v2081 = vpop.f32.mrf.mxu0
        %v2082 = vadd.f32 0.0, %v2081
        %v2083 = vpop.f32.mrf.mxu0
        %v2084 = vpop.f32.mrf.mxu0
        %v2085 = vadd.f32 0.0, %v2084
        %v2086 = vpop.f32.mrf.mxu0
        %2087 = vmatprep.mubr.bf16.mxu0 0
        %2088 = vmatmul.mubr.bf16.gmra.mxu0 %v1940
        %v2089 = vpop.f32.mrf.mxu0
        %v2090 = vadd.f32 0.0, %v2089
        %v2091 = vpop.f32.mrf.mxu0
        %v2092 = vpop.f32.mrf.mxu0
        %v2093 = vadd.f32 0.0, %v2092
        %v2094 = vpop.f32.mrf.mxu0
        %2095 = vmatprep.mubr.bf16.mxu0 0
        %2096 = vmatmul.mubr.bf16.gmra.mxu0 %v1943
        %v2097 = vpop.f32.mrf.mxu0
        %v2098 = vadd.f32 0.0, %v2097
        %v2099 = vpop.f32.mrf.mxu0
        %v2100 = vpop.f32.mrf.mxu0
        %v2101 = vadd.f32 0.0, %v2100
        %v2102 = vpop.f32.mrf.mxu0
        %2103 = vmatprep.mubr.bf16.mxu0 0
        %2104 = vmatmul.mubr.bf16.gmra.mxu0 %v1946
        %v2105 = vpop.f32.mrf.mxu0
        %v2106 = vadd.f32 0.0, %v2105
        %v2107 = vpop.f32.mrf.mxu0
        %v2108 = vpop.f32.mrf.mxu0
        %v2109 = vadd.f32 0.0, %v2108
        %v2110 = vpop.f32.mrf.mxu0
        %2111 = vmatprep.mubr.bf16.mxu0 0
        %2112 = vmatmul.mubr.bf16.gmra.mxu0 %v1949
        %v2113 = vpop.f32.mrf.mxu0
        %v2114 = vadd.f32 0.0, %v2113
        %v2115 = vpop.f32.mrf.mxu0
        %v2116 = vpop.f32.mrf.mxu0
        %v2117 = vadd.f32 0.0, %v2116
        %v2118 = vpop.f32.mrf.mxu0
        %2119 = vmatprep.mubr.bf16.mxu0 0
        %2120 = vmatmul.mubr.bf16.gmra.mxu0 %v1952
        %v2121 = vpop.f32.mrf.mxu0
        %v2122 = vadd.f32 0.0, %v2121
        %v2123 = vpop.f32.mrf.mxu0
        %v2124 = vpop.f32.mrf.mxu0
        %v2125 = vadd.f32 0.0, %v2124
        %v2126 = vpop.f32.mrf.mxu0
        %2127 = vmatprep.mubr.bf16.mxu0 0
        %2128 = vmatmul.mubr.bf16.gmra.mxu0 %v1955
        %v2129 = vpop.f32.mrf.mxu0
        %v2130 = vadd.f32 0.0, %v2129
        %v2131 = vpop.f32.mrf.mxu0
        %v2132 = vpop.f32.mrf.mxu0
        %v2133 = vadd.f32 0.0, %v2132
        %v2134 = vpop.f32.mrf.mxu0
        %2135 = vmatprep.mubr.bf16.mxu0 0
        %2136 = vmatmul.mubr.bf16.gmra.mxu0 %v1958
        %v2137 = vpop.f32.mrf.mxu0
        %v2138 = vadd.f32 0.0, %v2137
        %v2139 = vpop.f32.mrf.mxu0
        %v2140 = vpop.f32.mrf.mxu0
        %v2141 = vadd.f32 0.0, %v2140
        %v2142 = vpop.f32.mrf.mxu0
        %2143 = vmatprep.mubr.bf16.mxu0 0
        %2144 = vmatmul.mubr.bf16.gmra.mxu0 %v1961
        %v2145 = vpop.f32.mrf.mxu0
        %v2146 = vadd.f32 0.0, %v2145
        %v2147 = vpop.f32.mrf.mxu0
        %v2148 = vpop.f32.mrf.mxu0
        %v2149 = vadd.f32 0.0, %v2148
        %v2150 = vpop.f32.mrf.mxu0
        %2151 = vmatprep.mubr.bf16.mxu0 0
        %2152 = vmatmul.mubr.bf16.gmra.mxu0 %v1964
        %v2153 = vpop.f32.mrf.mxu0
        %v2154 = vadd.f32 0.0, %v2153
        %v2155 = vpop.f32.mrf.mxu0
        %v2156 = vpop.f32.mrf.mxu0
        %v2157 = vadd.f32 0.0, %v2156
        %v2158 = vpop.f32.mrf.mxu0
        %2159 = vmatprep.mubr.bf16.mxu0 0
        %2160 = vmatmul.mubr.bf16.gmra.mxu0 %v1967
        %v2161 = vpop.f32.mrf.mxu0
        %v2162 = vadd.f32 0.0, %v2161
        %v2163 = vpop.f32.mrf.mxu0
        %v2164 = vpop.f32.mrf.mxu0
        %v2165 = vadd.f32 0.0, %v2164
        %v2166 = vpop.f32.mrf.mxu0
        %2167 = vmatprep.mubr.bf16.mxu0 0
        %2168 = vmatmul.mubr.bf16.gmra.mxu0 %v1970
        %v2169 = vpop.f32.mrf.mxu0
        %v2170 = vadd.f32 0.0, %v2169
        %v2171 = vpop.f32.mrf.mxu0
        %v2172 = vpop.f32.mrf.mxu0
        %v2173 = vadd.f32 0.0, %v2172
        %v2174 = vpop.f32.mrf.mxu0
        %2175 = vdwg.mxu0
        %v2176 = vadd.f32 %v1767, %v2010
        %v2177 = vadd.f32 %v1768, %v2013
        %v2178 = vadd.f32 %v1769, %v2018
        %v2179 = vadd.f32 %v1770, %v2021
        %v2180 = vadd.f32 %v1771, %v2026
        %v2181 = vadd.f32 %v1772, %v2029
        %v2182 = vadd.f32 %v1773, %v2034
        %v2183 = vadd.f32 %v1774, %v2037
        %v2184 = vadd.f32 %v1775, %v2042
        %v2185 = vadd.f32 %v1776, %v2045
        %v2186 = vadd.f32 %v1777, %v2050
        %v2187 = vadd.f32 %v1778, %v2053
        %v2188 = vadd.f32 %v1779, %v2058
        %v2189 = vadd.f32 %v1780, %v2061
        %v2190 = vadd.f32 %v1781, %v2066
        %v2191 = vadd.f32 %v1782, %v2069
        %v2192 = vadd.f32 %v1783, %v2074
        %v2193 = vadd.f32 %v1784, %v2077
        %v2194 = vadd.f32 %v1785, %v2082
        %v2195 = vadd.f32 %v1786, %v2085
        %v2196 = vadd.f32 %v1787, %v2090
        %v2197 = vadd.f32 %v1788, %v2093
        %v2198 = vadd.f32 %v1789, %v2098
        %v2199 = vadd.f32 %v1790, %v2101
        %v2200 = vadd.f32 %v1791, %v2106
        %v2201 = vadd.f32 %v1792, %v2109
        %v2202 = vadd.f32 %v1793, %v2114
        %v2203 = vadd.f32 %v1794, %v2117
        %v2204 = vadd.f32 %v1795, %v2122
        %v2205 = vadd.f32 %v1796, %v2125
        %v2206 = vadd.f32 %v1797, %v2130
        %v2207 = vadd.f32 %v1798, %v2133
        %v2208 = vadd.f32 %v1799, %v2138
        %v2209 = vadd.f32 %v1800, %v2141
        %v2210 = vadd.f32 %v1801, %v2146
        %v2211 = vadd.f32 %v1802, %v2149
        %v2212 = vadd.f32 %v1803, %v2154
        %v2213 = vadd.f32 %v1804, %v2157
        %v2214 = vadd.f32 %v1805, %v2162
        %v2215 = vadd.f32 %v1806, %v2165
        %v2216 = vadd.f32 %v1807, %v2170
        %v2217 = vadd.f32 %v1808, %v2173
        %s2218 = scalar_lea.vmem %s2, 10
        %v2219 = vld [vmem:[%s2218] sm:$0x3]
        %vm2220 = vcmask 1045504
        %v2221 = vrot.slane %v481, 2
        %v2222 = vrot.slane %v482, 2
        %v2223 = vsel %vm2220, %v2221, %v2222
        %v2224 = vrot.slane %v483, 2
        %v2225 = vsel %vm2220, %v2222, %v2224
        %v2226 = vrot.slane %v484, 2
        %v2227 = vsel %vm2220, %v2224, %v2226
        %v2228 = vrot.slane %v485, 2
        %v2229 = vsel %vm2220, %v2226, %v2228
        %v2230 = vrot.slane %v486, 2
        %v2231 = vsel %vm2220, %v2228, %v2230
        %v2232 = vrot.slane %v487, 2
        %v2233 = vsel %vm2220, %v2230, %v2232
        %v2234 = vrot.slane %v488, 2
        %v2235 = vsel %vm2220, %v2232, %v2234
        %v2236 = vrot.slane %v489, 2
        %v2237 = vsel %vm2220, %v2234, %v2236
        %v2238 = vrot.slane %v490, 2
        %v2239 = vsel %vm2220, %v2236, %v2238
        %v2240 = vrot.slane %v491, 2
        %v2241 = vsel %vm2220, %v2238, %v2240
        %v2242 = vrot.slane %v492, 2
        %v2243 = vsel %vm2220, %v2240, %v2242
        %v2244 = vrot.slane %v493, 2
        %v2245 = vsel %vm2220, %v2242, %v2244
        %v2246 = vrot.slane %v494, 2
        %v2247 = vsel %vm2220, %v2244, %v2246
        %v2248 = vrot.slane %v495, 2
        %v2249 = vsel %vm2220, %v2246, %v2248
        %v2250 = vrot.slane %v496, 2
        %v2251 = vsel %vm2220, %v2248, %v2250
        %v2252 = vrot.slane %v497, 2
        %v2253 = vsel %vm2220, %v2250, %v2252
        %v2254 = vrot.slane %v498, 2
        %v2255 = vsel %vm2220, %v2252, %v2254
        %v2256 = vrot.slane %v499, 2
        %v2257 = vsel %vm2220, %v2254, %v2256
        %v2258 = vrot.slane %v500, 2
        %v2259 = vsel %vm2220, %v2256, %v2258
        %v2260 = vrot.slane %v1551, 2
        %v2261 = vsel %vm2220, %v2258, %v2260
        %v2262 = vrot.slane %v1552, 2
        %v2263 = vsel %vm2220, %v2260, %v2262
        %v2265 = vsel %vm675, %v2223, 0
        %v2268 = vsel %vm675, %v2225, 0
        %v2271 = vsel %vm675, %v2227, 0
        %v2274 = vsel %vm675, %v2229, 0
        %v2277 = vsel %vm675, %v2231, 0
        %v2280 = vsel %vm675, %v2233, 0
        %v2283 = vsel %vm675, %v2235, 0
        %v2286 = vsel %vm675, %v2237, 0
        %v2289 = vsel %vm675, %v2239, 0
        %v2292 = vsel %vm675, %v2241, 0
        %v2295 = vsel %vm675, %v2243, 0
        %v2298 = vsel %vm675, %v2245, 0
        %v2301 = vsel %vm675, %v2247, 0
        %v2304 = vsel %vm675, %v2249, 0
        %v2307 = vsel %vm675, %v2251, 0
        %v2310 = vsel %vm675, %v2253, 0
        %v2313 = vsel %vm675, %v2255, 0
        %v2316 = vsel %vm675, %v2257, 0
        %v2319 = vsel %vm675, %v2259, 0
        %v2322 = vsel %vm675, %v2261, 0
        %v2325 = vsel %vm675, %v2263, 0
        %v2328 = vsel %vm739, %v2219, 0
        %2330 = vmatprep.subr.bf16.mxu0 0
        %2331 = vmatpush1.bf16.msra.mxu0 0
        %2332 = vmatprep.subr.bf16.mxu0 0
        %2333 = vmatpush1.bf16.msra.mxu0 0
        %2334 = vmatprep.subr.bf16.mxu0 0
        %2335 = vmatpush1.bf16.msra.mxu0 0
        %2336 = vmatprep.subr.bf16.mxu0 0
        %2337 = vmatpush1.bf16.msra.mxu0 0
        %2338 = vmatprep.subr.bf16.mxu0 0
        %2339 = vmatpush1.bf16.msra.mxu0 0
        %2340 = vmatprep.subr.bf16.mxu0 0
        %2341 = vmatpush1.bf16.msra.mxu0 0
        %2342 = vmatprep.subr.bf16.mxu0 0
        %2343 = vmatpush1.bf16.msra.mxu0 0
        %2344 = vmatprep.subr.bf16.mxu0 0
        %2345 = vmatpush1.bf16.msra.mxu0 %v2328
        %2346 = vmatprep.subr.bf16.mxu0 0
        %2347 = vmatpush2.bf16.msra.mxu0 0
        %2348 = vmatprep.subr.bf16.mxu0 0
        %2349 = vmatpush2.bf16.msra.mxu0 0
        %2350 = vmatprep.subr.bf16.mxu0 0
        %2351 = vmatpush2.bf16.msra.mxu0 0
        %2352 = vmatprep.subr.bf16.mxu0 0
        %2353 = vmatpush2.bf16.msra.mxu0 0
        %2354 = vmatprep.subr.bf16.mxu0 0
        %2355 = vmatpush2.bf16.msra.mxu0 0
        %2356 = vmatprep.subr.bf16.mxu0 0
        %2357 = vmatpush2.bf16.msra.mxu0 0
        %2358 = vmatprep.subr.bf16.mxu0 0
        %2359 = vmatpush2.bf16.msra.mxu0 0
        %2360 = vmatprep.subr.bf16.mxu0 0
        %2361 = vmatpush2.bf16.msra.mxu0 0
        %2362 = vmatprep.mubr.bf16.mxu0 0
        %2363 = vmatmul.mubr.bf16.gmra.mxu0 %v2265
        %v2364 = vpop.f32.mrf.mxu0
        %v2365 = vadd.f32 0.0, %v2364
        %v2366 = vpop.f32.mrf.mxu0
        %v2367 = vpop.f32.mrf.mxu0
        %v2368 = vadd.f32 0.0, %v2367
        %v2369 = vpop.f32.mrf.mxu0
        %2370 = vmatprep.mubr.bf16.mxu0 0
        %2371 = vmatmul.mubr.bf16.gmra.mxu0 %v2268
        %v2372 = vpop.f32.mrf.mxu0
        %v2373 = vadd.f32 0.0, %v2372
        %v2374 = vpop.f32.mrf.mxu0
        %v2375 = vpop.f32.mrf.mxu0
        %v2376 = vadd.f32 0.0, %v2375
        %v2377 = vpop.f32.mrf.mxu0
        %2378 = vmatprep.mubr.bf16.mxu0 0
        %2379 = vmatmul.mubr.bf16.gmra.mxu0 %v2271
        %v2380 = vpop.f32.mrf.mxu0
        %v2381 = vadd.f32 0.0, %v2380
        %v2382 = vpop.f32.mrf.mxu0
        %v2383 = vpop.f32.mrf.mxu0
        %v2384 = vadd.f32 0.0, %v2383
        %v2385 = vpop.f32.mrf.mxu0
        %2386 = vmatprep.mubr.bf16.mxu0 0
        %2387 = vmatmul.mubr.bf16.gmra.mxu0 %v2274
        %v2388 = vpop.f32.mrf.mxu0
        %v2389 = vadd.f32 0.0, %v2388
        %v2390 = vpop.f32.mrf.mxu0
        %v2391 = vpop.f32.mrf.mxu0
        %v2392 = vadd.f32 0.0, %v2391
        %v2393 = vpop.f32.mrf.mxu0
        %2394 = vmatprep.mubr.bf16.mxu0 0
        %2395 = vmatmul.mubr.bf16.gmra.mxu0 %v2277
        %v2396 = vpop.f32.mrf.mxu0
        %v2397 = vadd.f32 0.0, %v2396
        %v2398 = vpop.f32.mrf.mxu0
        %v2399 = vpop.f32.mrf.mxu0
        %v2400 = vadd.f32 0.0, %v2399
        %v2401 = vpop.f32.mrf.mxu0
        %2402 = vmatprep.mubr.bf16.mxu0 0
        %2403 = vmatmul.mubr.bf16.gmra.mxu0 %v2280
        %v2404 = vpop.f32.mrf.mxu0
        %v2405 = vadd.f32 0.0, %v2404
        %v2406 = vpop.f32.mrf.mxu0
        %v2407 = vpop.f32.mrf.mxu0
        %v2408 = vadd.f32 0.0, %v2407
        %v2409 = vpop.f32.mrf.mxu0
        %2410 = vmatprep.mubr.bf16.mxu0 0
        %2411 = vmatmul.mubr.bf16.gmra.mxu0 %v2283
        %v2412 = vpop.f32.mrf.mxu0
        %v2413 = vadd.f32 0.0, %v2412
        %v2414 = vpop.f32.mrf.mxu0
        %v2415 = vpop.f32.mrf.mxu0
        %v2416 = vadd.f32 0.0, %v2415
        %v2417 = vpop.f32.mrf.mxu0
        %2418 = vmatprep.mubr.bf16.mxu0 0
        %2419 = vmatmul.mubr.bf16.gmra.mxu0 %v2286
        %v2420 = vpop.f32.mrf.mxu0
        %v2421 = vadd.f32 0.0, %v2420
        %v2422 = vpop.f32.mrf.mxu0
        %v2423 = vpop.f32.mrf.mxu0
        %v2424 = vadd.f32 0.0, %v2423
        %v2425 = vpop.f32.mrf.mxu0
        %2426 = vmatprep.mubr.bf16.mxu0 0
        %2427 = vmatmul.mubr.bf16.gmra.mxu0 %v2289
        %v2428 = vpop.f32.mrf.mxu0
        %v2429 = vadd.f32 0.0, %v2428
        %v2430 = vpop.f32.mrf.mxu0
        %v2431 = vpop.f32.mrf.mxu0
        %v2432 = vadd.f32 0.0, %v2431
        %v2433 = vpop.f32.mrf.mxu0
        %2434 = vmatprep.mubr.bf16.mxu0 0
        %2435 = vmatmul.mubr.bf16.gmra.mxu0 %v2292
        %v2436 = vpop.f32.mrf.mxu0
        %v2437 = vadd.f32 0.0, %v2436
        %v2438 = vpop.f32.mrf.mxu0
        %v2439 = vpop.f32.mrf.mxu0
        %v2440 = vadd.f32 0.0, %v2439
        %v2441 = vpop.f32.mrf.mxu0
        %2442 = vmatprep.mubr.bf16.mxu0 0
        %2443 = vmatmul.mubr.bf16.gmra.mxu0 %v2295
        %v2444 = vpop.f32.mrf.mxu0
        %v2445 = vadd.f32 0.0, %v2444
        %v2446 = vpop.f32.mrf.mxu0
        %v2447 = vpop.f32.mrf.mxu0
        %v2448 = vadd.f32 0.0, %v2447
        %v2449 = vpop.f32.mrf.mxu0
        %2450 = vmatprep.mubr.bf16.mxu0 0
        %2451 = vmatmul.mubr.bf16.gmra.mxu0 %v2298
        %v2452 = vpop.f32.mrf.mxu0
        %v2453 = vadd.f32 0.0, %v2452
        %v2454 = vpop.f32.mrf.mxu0
        %v2455 = vpop.f32.mrf.mxu0
        %v2456 = vadd.f32 0.0, %v2455
        %v2457 = vpop.f32.mrf.mxu0
        %2458 = vmatprep.mubr.bf16.mxu0 0
        %2459 = vmatmul.mubr.bf16.gmra.mxu0 %v2301
        %v2460 = vpop.f32.mrf.mxu0
        %v2461 = vadd.f32 0.0, %v2460
        %v2462 = vpop.f32.mrf.mxu0
        %v2463 = vpop.f32.mrf.mxu0
        %v2464 = vadd.f32 0.0, %v2463
        %v2465 = vpop.f32.mrf.mxu0
        %2466 = vmatprep.mubr.bf16.mxu0 0
        %2467 = vmatmul.mubr.bf16.gmra.mxu0 %v2304
        %v2468 = vpop.f32.mrf.mxu0
        %v2469 = vadd.f32 0.0, %v2468
        %v2470 = vpop.f32.mrf.mxu0
        %v2471 = vpop.f32.mrf.mxu0
        %v2472 = vadd.f32 0.0, %v2471
        %v2473 = vpop.f32.mrf.mxu0
        %2474 = vmatprep.mubr.bf16.mxu0 0
        %2475 = vmatmul.mubr.bf16.gmra.mxu0 %v2307
        %v2476 = vpop.f32.mrf.mxu0
        %v2477 = vadd.f32 0.0, %v2476
        %v2478 = vpop.f32.mrf.mxu0
        %v2479 = vpop.f32.mrf.mxu0
        %v2480 = vadd.f32 0.0, %v2479
        %v2481 = vpop.f32.mrf.mxu0
        %2482 = vmatprep.mubr.bf16.mxu0 0
        %2483 = vmatmul.mubr.bf16.gmra.mxu0 %v2310
        %v2484 = vpop.f32.mrf.mxu0
        %v2485 = vadd.f32 0.0, %v2484
        %v2486 = vpop.f32.mrf.mxu0
        %v2487 = vpop.f32.mrf.mxu0
        %v2488 = vadd.f32 0.0, %v2487
        %v2489 = vpop.f32.mrf.mxu0
        %2490 = vmatprep.mubr.bf16.mxu0 0
        %2491 = vmatmul.mubr.bf16.gmra.mxu0 %v2313
        %v2492 = vpop.f32.mrf.mxu0
        %v2493 = vadd.f32 0.0, %v2492
        %v2494 = vpop.f32.mrf.mxu0
        %v2495 = vpop.f32.mrf.mxu0
        %v2496 = vadd.f32 0.0, %v2495
        %v2497 = vpop.f32.mrf.mxu0
        %2498 = vmatprep.mubr.bf16.mxu0 0
        %2499 = vmatmul.mubr.bf16.gmra.mxu0 %v2316
        %v2500 = vpop.f32.mrf.mxu0
        %v2501 = vadd.f32 0.0, %v2500
        %v2502 = vpop.f32.mrf.mxu0
        %v2503 = vpop.f32.mrf.mxu0
        %v2504 = vadd.f32 0.0, %v2503
        %v2505 = vpop.f32.mrf.mxu0
        %2506 = vmatprep.mubr.bf16.mxu0 0
        %2507 = vmatmul.mubr.bf16.gmra.mxu0 %v2319
        %v2508 = vpop.f32.mrf.mxu0
        %v2509 = vadd.f32 0.0, %v2508
        %v2510 = vpop.f32.mrf.mxu0
        %v2511 = vpop.f32.mrf.mxu0
        %v2512 = vadd.f32 0.0, %v2511
        %v2513 = vpop.f32.mrf.mxu0
        %2514 = vmatprep.mubr.bf16.mxu0 0
        %2515 = vmatmul.mubr.bf16.gmra.mxu0 %v2322
        %v2516 = vpop.f32.mrf.mxu0
        %v2517 = vadd.f32 0.0, %v2516
        %v2518 = vpop.f32.mrf.mxu0
        %v2519 = vpop.f32.mrf.mxu0
        %v2520 = vadd.f32 0.0, %v2519
        %v2521 = vpop.f32.mrf.mxu0
        %2522 = vmatprep.mubr.bf16.mxu0 0
        %2523 = vmatmul.mubr.bf16.gmra.mxu0 %v2325
        %v2524 = vpop.f32.mrf.mxu0
        %v2525 = vadd.f32 0.0, %v2524
        %v2526 = vpop.f32.mrf.mxu0
        %v2527 = vpop.f32.mrf.mxu0
        %v2528 = vadd.f32 0.0, %v2527
        %v2529 = vpop.f32.mrf.mxu0
        %2530 = vdwg.mxu0
        %v2531 = vadd.f32 %v2176, %v2365
        %v2532 = vadd.f32 %v2177, %v2368
        %v2533 = vadd.f32 %v2178, %v2373
        %v2534 = vadd.f32 %v2179, %v2376
        %v2535 = vadd.f32 %v2180, %v2381
        %v2536 = vadd.f32 %v2181, %v2384
        %v2537 = vadd.f32 %v2182, %v2389
        %v2538 = vadd.f32 %v2183, %v2392
        %v2539 = vadd.f32 %v2184, %v2397
        %v2540 = vadd.f32 %v2185, %v2400
        %v2541 = vadd.f32 %v2186, %v2405
        %v2542 = vadd.f32 %v2187, %v2408
        %v2543 = vadd.f32 %v2188, %v2413
        %v2544 = vadd.f32 %v2189, %v2416
        %v2545 = vadd.f32 %v2190, %v2421
        %v2546 = vadd.f32 %v2191, %v2424
        %v2547 = vadd.f32 %v2192, %v2429
        %v2548 = vadd.f32 %v2193, %v2432
        %v2549 = vadd.f32 %v2194, %v2437
        %v2550 = vadd.f32 %v2195, %v2440
        %v2551 = vadd.f32 %v2196, %v2445
        %v2552 = vadd.f32 %v2197, %v2448
        %v2553 = vadd.f32 %v2198, %v2453
        %v2554 = vadd.f32 %v2199, %v2456
        %v2555 = vadd.f32 %v2200, %v2461
        %v2556 = vadd.f32 %v2201, %v2464
        %v2557 = vadd.f32 %v2202, %v2469
        %v2558 = vadd.f32 %v2203, %v2472
        %v2559 = vadd.f32 %v2204, %v2477
        %v2560 = vadd.f32 %v2205, %v2480
        %v2561 = vadd.f32 %v2206, %v2485
        %v2562 = vadd.f32 %v2207, %v2488
        %v2563 = vadd.f32 %v2208, %v2493
        %v2564 = vadd.f32 %v2209, %v2496
        %v2565 = vadd.f32 %v2210, %v2501
        %v2566 = vadd.f32 %v2211, %v2504
        %v2567 = vadd.f32 %v2212, %v2509
        %v2568 = vadd.f32 %v2213, %v2512
        %v2569 = vadd.f32 %v2214, %v2517
        %v2570 = vadd.f32 %v2215, %v2520
        %v2571 = vadd.f32 %v2216, %v2525
        %v2572 = vadd.f32 %v2217, %v2528
        %s2573 = scalar_lea.vmem %s2, 12
        %v2574 = vld [vmem:[%s2573] sm:$0x3]
        %v2577 = vunpack.c.l.b16 %v389
        %v2578 = vunpack.c.l.b16 %v390
        %v2579 = vpack.c.b16 %v2577, %v1550
        %v2580 = vpack.c.b16 %v2578, %v2578
        %v2581 = vrot.slane %v2579, 2
        %v2582 = vsel %vm2220, %v2260, %v2581
        %v2583 = vrot.slane %v2580, 2
        %v2584 = vsel %vm2220, %v2581, %v2583
        %v2586 = vsel %vm675, %v2582, 0
        %v2589 = vsel %vm675, %v2584, 0
        %v2592 = vsel %vm739, %v2574, 0
        %2594 = vmatprep.subr.bf16.mxu0 0
        %2595 = vmatpush1.bf16.msra.mxu0 0
        %2596 = vmatprep.subr.bf16.mxu0 0
        %2597 = vmatpush1.bf16.msra.mxu0 0
        %2598 = vmatprep.subr.bf16.mxu0 0
        %2599 = vmatpush1.bf16.msra.mxu0 0
        %2600 = vmatprep.subr.bf16.mxu0 0
        %2601 = vmatpush1.bf16.msra.mxu0 0
        %2602 = vmatprep.subr.bf16.mxu0 0
        %2603 = vmatpush1.bf16.msra.mxu0 0
        %2604 = vmatprep.subr.bf16.mxu0 0
        %2605 = vmatpush1.bf16.msra.mxu0 0
        %2606 = vmatprep.subr.bf16.mxu0 0
        %2607 = vmatpush1.bf16.msra.mxu0 0
        %2608 = vmatprep.subr.bf16.mxu0 0
        %2609 = vmatpush1.bf16.msra.mxu0 %v2592
        %2610 = vmatprep.subr.bf16.mxu0 0
        %2611 = vmatpush2.bf16.msra.mxu0 0
        %2612 = vmatprep.subr.bf16.mxu0 0
        %2613 = vmatpush2.bf16.msra.mxu0 0
        %2614 = vmatprep.subr.bf16.mxu0 0
        %2615 = vmatpush2.bf16.msra.mxu0 0
        %2616 = vmatprep.subr.bf16.mxu0 0
        %2617 = vmatpush2.bf16.msra.mxu0 0
        %2618 = vmatprep.subr.bf16.mxu0 0
        %2619 = vmatpush2.bf16.msra.mxu0 0
        %2620 = vmatprep.subr.bf16.mxu0 0
        %2621 = vmatpush2.bf16.msra.mxu0 0
        %2622 = vmatprep.subr.bf16.mxu0 0
        %2623 = vmatpush2.bf16.msra.mxu0 0
        %2624 = vmatprep.subr.bf16.mxu0 0
        %2625 = vmatpush2.bf16.msra.mxu0 0
        %2626 = vmatprep.mubr.bf16.mxu0 0
        %2627 = vmatmul.mubr.bf16.gmra.mxu0 %v2268
        %v2628 = vpop.f32.mrf.mxu0
        %v2629 = vadd.f32 0.0, %v2628
        %v2630 = vpop.f32.mrf.mxu0
        %v2631 = vpop.f32.mrf.mxu0
        %v2632 = vadd.f32 0.0, %v2631
        %v2633 = vpop.f32.mrf.mxu0
        %2634 = vmatprep.mubr.bf16.mxu0 0
        %2635 = vmatmul.mubr.bf16.gmra.mxu0 %v2271
        %v2636 = vpop.f32.mrf.mxu0
        %v2637 = vadd.f32 0.0, %v2636
        %v2638 = vpop.f32.mrf.mxu0
        %v2639 = vpop.f32.mrf.mxu0
        %v2640 = vadd.f32 0.0, %v2639
        %v2641 = vpop.f32.mrf.mxu0
        %2642 = vmatprep.mubr.bf16.mxu0 0
        %2643 = vmatmul.mubr.bf16.gmra.mxu0 %v2274
        %v2644 = vpop.f32.mrf.mxu0
        %v2645 = vadd.f32 0.0, %v2644
        %v2646 = vpop.f32.mrf.mxu0
        %v2647 = vpop.f32.mrf.mxu0
        %v2648 = vadd.f32 0.0, %v2647
        %v2649 = vpop.f32.mrf.mxu0
        %2650 = vmatprep.mubr.bf16.mxu0 0
        %2651 = vmatmul.mubr.bf16.gmra.mxu0 %v2277
        %v2652 = vpop.f32.mrf.mxu0
        %v2653 = vadd.f32 0.0, %v2652
        %v2654 = vpop.f32.mrf.mxu0
        %v2655 = vpop.f32.mrf.mxu0
        %v2656 = vadd.f32 0.0, %v2655
        %v2657 = vpop.f32.mrf.mxu0
        %2658 = vmatprep.mubr.bf16.mxu0 0
        %2659 = vmatmul.mubr.bf16.gmra.mxu0 %v2280
        %v2660 = vpop.f32.mrf.mxu0
        %v2661 = vadd.f32 0.0, %v2660
        %v2662 = vpop.f32.mrf.mxu0
        %v2663 = vpop.f32.mrf.mxu0
        %v2664 = vadd.f32 0.0, %v2663
        %v2665 = vpop.f32.mrf.mxu0
        %2666 = vmatprep.mubr.bf16.mxu0 0
        %2667 = vmatmul.mubr.bf16.gmra.mxu0 %v2283
        %v2668 = vpop.f32.mrf.mxu0
        %v2669 = vadd.f32 0.0, %v2668
        %v2670 = vpop.f32.mrf.mxu0
        %v2671 = vpop.f32.mrf.mxu0
        %v2672 = vadd.f32 0.0, %v2671
        %v2673 = vpop.f32.mrf.mxu0
        %2674 = vmatprep.mubr.bf16.mxu0 0
        %2675 = vmatmul.mubr.bf16.gmra.mxu0 %v2286
        %v2676 = vpop.f32.mrf.mxu0
        %v2677 = vadd.f32 0.0, %v2676
        %v2678 = vpop.f32.mrf.mxu0
        %v2679 = vpop.f32.mrf.mxu0
        %v2680 = vadd.f32 0.0, %v2679
        %v2681 = vpop.f32.mrf.mxu0
        %2682 = vmatprep.mubr.bf16.mxu0 0
        %2683 = vmatmul.mubr.bf16.gmra.mxu0 %v2289
        %v2684 = vpop.f32.mrf.mxu0
        %v2685 = vadd.f32 0.0, %v2684
        %v2686 = vpop.f32.mrf.mxu0
        %v2687 = vpop.f32.mrf.mxu0
        %v2688 = vadd.f32 0.0, %v2687
        %v2689 = vpop.f32.mrf.mxu0
        %2690 = vmatprep.mubr.bf16.mxu0 0
        %2691 = vmatmul.mubr.bf16.gmra.mxu0 %v2292
        %v2692 = vpop.f32.mrf.mxu0
        %v2693 = vadd.f32 0.0, %v2692
        %v2694 = vpop.f32.mrf.mxu0
        %v2695 = vpop.f32.mrf.mxu0
        %v2696 = vadd.f32 0.0, %v2695
        %v2697 = vpop.f32.mrf.mxu0
        %2698 = vmatprep.mubr.bf16.mxu0 0
        %2699 = vmatmul.mubr.bf16.gmra.mxu0 %v2295
        %v2700 = vpop.f32.mrf.mxu0
        %v2701 = vadd.f32 0.0, %v2700
        %v2702 = vpop.f32.mrf.mxu0
        %v2703 = vpop.f32.mrf.mxu0
        %v2704 = vadd.f32 0.0, %v2703
        %v2705 = vpop.f32.mrf.mxu0
        %2706 = vmatprep.mubr.bf16.mxu0 0
        %2707 = vmatmul.mubr.bf16.gmra.mxu0 %v2298
        %v2708 = vpop.f32.mrf.mxu0
        %v2709 = vadd.f32 0.0, %v2708
        %v2710 = vpop.f32.mrf.mxu0
        %v2711 = vpop.f32.mrf.mxu0
        %v2712 = vadd.f32 0.0, %v2711
        %v2713 = vpop.f32.mrf.mxu0
        %2714 = vmatprep.mubr.bf16.mxu0 0
        %2715 = vmatmul.mubr.bf16.gmra.mxu0 %v2301
        %v2716 = vpop.f32.mrf.mxu0
        %v2717 = vadd.f32 0.0, %v2716
        %v2718 = vpop.f32.mrf.mxu0
        %v2719 = vpop.f32.mrf.mxu0
        %v2720 = vadd.f32 0.0, %v2719
        %v2721 = vpop.f32.mrf.mxu0
        %2722 = vmatprep.mubr.bf16.mxu0 0
        %2723 = vmatmul.mubr.bf16.gmra.mxu0 %v2304
        %v2724 = vpop.f32.mrf.mxu0
        %v2725 = vadd.f32 0.0, %v2724
        %v2726 = vpop.f32.mrf.mxu0
        %v2727 = vpop.f32.mrf.mxu0
        %v2728 = vadd.f32 0.0, %v2727
        %v2729 = vpop.f32.mrf.mxu0
        %2730 = vmatprep.mubr.bf16.mxu0 0
        %2731 = vmatmul.mubr.bf16.gmra.mxu0 %v2307
        %v2732 = vpop.f32.mrf.mxu0
        %v2733 = vadd.f32 0.0, %v2732
        %v2734 = vpop.f32.mrf.mxu0
        %v2735 = vpop.f32.mrf.mxu0
        %v2736 = vadd.f32 0.0, %v2735
        %v2737 = vpop.f32.mrf.mxu0
        %2738 = vmatprep.mubr.bf16.mxu0 0
        %2739 = vmatmul.mubr.bf16.gmra.mxu0 %v2310
        %v2740 = vpop.f32.mrf.mxu0
        %v2741 = vadd.f32 0.0, %v2740
        %v2742 = vpop.f32.mrf.mxu0
        %v2743 = vpop.f32.mrf.mxu0
        %v2744 = vadd.f32 0.0, %v2743
        %v2745 = vpop.f32.mrf.mxu0
        %2746 = vmatprep.mubr.bf16.mxu0 0
        %2747 = vmatmul.mubr.bf16.gmra.mxu0 %v2313
        %v2748 = vpop.f32.mrf.mxu0
        %v2749 = vadd.f32 0.0, %v2748
        %v2750 = vpop.f32.mrf.mxu0
        %v2751 = vpop.f32.mrf.mxu0
        %v2752 = vadd.f32 0.0, %v2751
        %v2753 = vpop.f32.mrf.mxu0
        %2754 = vmatprep.mubr.bf16.mxu0 0
        %2755 = vmatmul.mubr.bf16.gmra.mxu0 %v2316
        %v2756 = vpop.f32.mrf.mxu0
        %v2757 = vadd.f32 0.0, %v2756
        %v2758 = vpop.f32.mrf.mxu0
        %v2759 = vpop.f32.mrf.mxu0
        %v2760 = vadd.f32 0.0, %v2759
        %v2761 = vpop.f32.mrf.mxu0
        %2762 = vmatprep.mubr.bf16.mxu0 0
        %2763 = vmatmul.mubr.bf16.gmra.mxu0 %v2319
        %v2764 = vpop.f32.mrf.mxu0
        %v2765 = vadd.f32 0.0, %v2764
        %v2766 = vpop.f32.mrf.mxu0
        %v2767 = vpop.f32.mrf.mxu0
        %v2768 = vadd.f32 0.0, %v2767
        %v2769 = vpop.f32.mrf.mxu0
        %2770 = vmatprep.mubr.bf16.mxu0 0
        %2771 = vmatmul.mubr.bf16.gmra.mxu0 %v2322
        %v2772 = vpop.f32.mrf.mxu0
        %v2773 = vadd.f32 0.0, %v2772
        %v2774 = vpop.f32.mrf.mxu0
        %v2775 = vpop.f32.mrf.mxu0
        %v2776 = vadd.f32 0.0, %v2775
        %v2777 = vpop.f32.mrf.mxu0
        %2778 = vmatprep.mubr.bf16.mxu0 0
        %2779 = vmatmul.mubr.bf16.gmra.mxu0 %v2586
        %v2780 = vpop.f32.mrf.mxu0
        %v2781 = vadd.f32 0.0, %v2780
        %v2782 = vpop.f32.mrf.mxu0
        %v2783 = vpop.f32.mrf.mxu0
        %v2784 = vadd.f32 0.0, %v2783
        %v2785 = vpop.f32.mrf.mxu0
        %2786 = vmatprep.mubr.bf16.mxu0 0
        %2787 = vmatmul.mubr.bf16.gmra.mxu0 %v2589
        %v2788 = vpop.f32.mrf.mxu0
        %v2789 = vadd.f32 0.0, %v2788
        %v2790 = vpop.f32.mrf.mxu0
        %v2791 = vpop.f32.mrf.mxu0
        %v2792 = vadd.f32 0.0, %v2791
        %v2793 = vpop.f32.mrf.mxu0
        %2794 = vdwg.mxu0
        %v2795 = vadd.f32 %v2531, %v2629
        %v2796 = vadd.f32 %v2532, %v2632
        %v2797 = vadd.f32 %v2533, %v2637
        %v2798 = vadd.f32 %v2534, %v2640
        %v2799 = vadd.f32 %v2535, %v2645
        %v2800 = vadd.f32 %v2536, %v2648
        %v2801 = vadd.f32 %v2537, %v2653
        %v2802 = vadd.f32 %v2538, %v2656
        %v2803 = vadd.f32 %v2539, %v2661
        %v2804 = vadd.f32 %v2540, %v2664
        %v2805 = vadd.f32 %v2541, %v2669
        %v2806 = vadd.f32 %v2542, %v2672
        %v2807 = vadd.f32 %v2543, %v2677
        %v2808 = vadd.f32 %v2544, %v2680
        %v2809 = vadd.f32 %v2545, %v2685
        %v2810 = vadd.f32 %v2546, %v2688
        %v2811 = vadd.f32 %v2547, %v2693
        %v2812 = vadd.f32 %v2548, %v2696
        %v2813 = vadd.f32 %v2549, %v2701
        %v2814 = vadd.f32 %v2550, %v2704
        %v2815 = vadd.f32 %v2551, %v2709
        %v2816 = vadd.f32 %v2552, %v2712
        %v2817 = vadd.f32 %v2553, %v2717
        %v2818 = vadd.f32 %v2554, %v2720
        %v2819 = vadd.f32 %v2555, %v2725
        %v2820 = vadd.f32 %v2556, %v2728
        %v2821 = vadd.f32 %v2557, %v2733
        %v2822 = vadd.f32 %v2558, %v2736
        %v2823 = vadd.f32 %v2559, %v2741
        %v2824 = vadd.f32 %v2560, %v2744
        %v2825 = vadd.f32 %v2561, %v2749
        %v2826 = vadd.f32 %v2562, %v2752
        %v2827 = vadd.f32 %v2563, %v2757
        %v2828 = vadd.f32 %v2564, %v2760
        %v2829 = vadd.f32 %v2565, %v2765
        %v2830 = vadd.f32 %v2566, %v2768
        %v2831 = vadd.f32 %v2567, %v2773
        %v2832 = vadd.f32 %v2568, %v2776
        %v2833 = vadd.f32 %v2569, %v2781
        %v2834 = vadd.f32 %v2570, %v2784
        %v2835 = vadd.f32 %v2571, %v2789
        %v2836 = vadd.f32 %v2572, %v2792
        %s2837 = scalar_lea.vmem %s2, 14
        %v2838 = vld [vmem:[%s2837] sm:$0x3]
        %vm2839 = vsmask.f32 5376
        %v2840 = vrot.slane %v523, 2
        %v2841 = vrot.slane %v519, 3
        %v2842 = vor.u32 %v2840, %v2841
        %v2843 = vrot.slane %v531, 2
        %v2844 = vrot.slane %v527, 3
        %v2845 = vor.u32 %v2843, %v2844
        %v2846 = vsel %vm2839, %v2842, %v2845
        %v2847 = vrot.slane %v539, 2
        %v2848 = vrot.slane %v535, 3
        %v2849 = vor.u32 %v2847, %v2848
        %v2850 = vsel %vm2839, %v2845, %v2849
        %v2851 = vrot.slane %v547, 2
        %v2852 = vrot.slane %v543, 3
        %v2853 = vor.u32 %v2851, %v2852
        %v2854 = vsel %vm2839, %v2849, %v2853
        %v2855 = vrot.slane %v555, 2
        %v2856 = vrot.slane %v551, 3
        %v2857 = vor.u32 %v2855, %v2856
        %v2858 = vsel %vm2839, %v2853, %v2857
        %v2859 = vrot.slane %v563, 2
        %v2860 = vrot.slane %v559, 3
        %v2861 = vor.u32 %v2859, %v2860
        %v2862 = vsel %vm2839, %v2857, %v2861
        %v2863 = vrot.slane %v571, 2
        %v2864 = vrot.slane %v567, 3
        %v2865 = vor.u32 %v2863, %v2864
        %v2866 = vsel %vm2839, %v2861, %v2865
        %v2867 = vrot.slane %v579, 2
        %v2868 = vrot.slane %v575, 3
        %v2869 = vor.u32 %v2867, %v2868
        %v2870 = vsel %vm2839, %v2865, %v2869
        %v2871 = vrot.slane %v587, 2
        %v2872 = vrot.slane %v583, 3
        %v2873 = vor.u32 %v2871, %v2872
        %v2874 = vsel %vm2839, %v2869, %v2873
        %v2875 = vrot.slane %v595, 2
        %v2876 = vrot.slane %v591, 3
        %v2877 = vor.u32 %v2875, %v2876
        %v2878 = vsel %vm2839, %v2873, %v2877
        %v2879 = vrot.slane %v603, 2
        %v2880 = vrot.slane %v599, 3
        %v2881 = vor.u32 %v2879, %v2880
        %v2882 = vsel %vm2839, %v2877, %v2881
        %v2883 = vrot.slane %v611, 2
        %v2884 = vrot.slane %v607, 3
        %v2885 = vor.u32 %v2883, %v2884
        %v2886 = vsel %vm2839, %v2881, %v2885
        %v2887 = vrot.slane %v619, 2
        %v2888 = vrot.slane %v615, 3
        %v2889 = vor.u32 %v2887, %v2888
        %v2890 = vsel %vm2839, %v2885, %v2889
        %v2891 = vrot.slane %v627, 2
        %v2892 = vrot.slane %v623, 3
        %v2893 = vor.u32 %v2891, %v2892
        %v2894 = vsel %vm2839, %v2889, %v2893
        %v2895 = vrot.slane %v635, 2
        %v2896 = vrot.slane %v631, 3
        %v2897 = vor.u32 %v2895, %v2896
        %v2898 = vsel %vm2839, %v2893, %v2897
        %v2899 = vrot.slane %v643, 2
        %v2900 = vrot.slane %v639, 3
        %v2901 = vor.u32 %v2899, %v2900
        %v2902 = vsel %vm2839, %v2897, %v2901
        %v2903 = vrot.slane %v651, 2
        %v2904 = vrot.slane %v647, 3
        %v2905 = vor.u32 %v2903, %v2904
        %v2906 = vsel %vm2839, %v2901, %v2905
        %v2907 = vrot.slane %v659, 2
        %v2908 = vrot.slane %v655, 3
        %v2909 = vor.u32 %v2907, %v2908
        %v2910 = vsel %vm2839, %v2905, %v2909
        %v2911 = vrot.slane %v667, 2
        %v2912 = vrot.slane %v663, 3
        %v2913 = vor.u32 %v2911, %v2912
        %v2914 = vsel %vm2839, %v2909, %v2913
        %v2915 = vrot.slane %v1892, 2
        %v2916 = vrot.slane %v1895, 3
        %v2917 = vor.u32 %v2915, %v2916
        %v2918 = vsel %vm2839, %v2913, %v2917
        %v2920 = vshrl.u32 %v2579, 16
        %v2922 = vrot.slane %v2920, 2
        %v2923 = vshll.u32 %v2579, 16
        %v2925 = vrot.slane %v2923, 3
        %v2926 = vor.u32 %v2922, %v2925
        %v2927 = vsel %vm2839, %v2917, %v2926
        %v2929 = vshrl.u32 %v2580, 16
        %v2931 = vrot.slane %v2929, 2
        %v2932 = vshll.u32 %v2580, 16
        %v2934 = vrot.slane %v2932, 3
        %v2935 = vor.u32 %v2931, %v2934
        %v2936 = vsel %vm2839, %v2926, %v2935
        %v2938 = vsel %vm675, %v2846, 0
        %v2941 = vsel %vm675, %v2850, 0
        %v2944 = vsel %vm675, %v2854, 0
        %v2947 = vsel %vm675, %v2858, 0
        %v2950 = vsel %vm675, %v2862, 0
        %v2953 = vsel %vm675, %v2866, 0
        %v2956 = vsel %vm675, %v2870, 0
        %v2959 = vsel %vm675, %v2874, 0
        %v2962 = vsel %vm675, %v2878, 0
        %v2965 = vsel %vm675, %v2882, 0
        %v2968 = vsel %vm675, %v2886, 0
        %v2971 = vsel %vm675, %v2890, 0
        %v2974 = vsel %vm675, %v2894, 0
        %v2977 = vsel %vm675, %v2898, 0
        %v2980 = vsel %vm675, %v2902, 0
        %v2983 = vsel %vm675, %v2906, 0
        %v2986 = vsel %vm675, %v2910, 0
        %v2989 = vsel %vm675, %v2914, 0
        %v2992 = vsel %vm675, %v2918, 0
        %v2995 = vsel %vm675, %v2927, 0
        %v2998 = vsel %vm675, %v2936, 0
        %v3001 = vsel %vm739, %v2838, 0
        %3003 = vmatprep.subr.bf16.mxu0 0
        %3004 = vmatpush1.bf16.msra.mxu0 0
        %3005 = vmatprep.subr.bf16.mxu0 0
        %3006 = vmatpush1.bf16.msra.mxu0 0
        %3007 = vmatprep.subr.bf16.mxu0 0
        %3008 = vmatpush1.bf16.msra.mxu0 0
        %3009 = vmatprep.subr.bf16.mxu0 0
        %3010 = vmatpush1.bf16.msra.mxu0 0
        %3011 = vmatprep.subr.bf16.mxu0 0
        %3012 = vmatpush1.bf16.msra.mxu0 0
        %3013 = vmatprep.subr.bf16.mxu0 0
        %3014 = vmatpush1.bf16.msra.mxu0 0
        %3015 = vmatprep.subr.bf16.mxu0 0
        %3016 = vmatpush1.bf16.msra.mxu0 0
        %3017 = vmatprep.subr.bf16.mxu0 0
        %3018 = vmatpush1.bf16.msra.mxu0 %v3001
        %3019 = vmatprep.subr.bf16.mxu0 0
        %3020 = vmatpush2.bf16.msra.mxu0 0
        %3021 = vmatprep.subr.bf16.mxu0 0
        %3022 = vmatpush2.bf16.msra.mxu0 0
        %3023 = vmatprep.subr.bf16.mxu0 0
        %3024 = vmatpush2.bf16.msra.mxu0 0
        %3025 = vmatprep.subr.bf16.mxu0 0
        %3026 = vmatpush2.bf16.msra.mxu0 0
        %3027 = vmatprep.subr.bf16.mxu0 0
        %3028 = vmatpush2.bf16.msra.mxu0 0
        %3029 = vmatprep.subr.bf16.mxu0 0
        %3030 = vmatpush2.bf16.msra.mxu0 0
        %3031 = vmatprep.subr.bf16.mxu0 0
        %3032 = vmatpush2.bf16.msra.mxu0 0
        %3033 = vmatprep.subr.bf16.mxu0 0
        %3034 = vmatpush2.bf16.msra.mxu0 0
        %3035 = vmatprep.mubr.bf16.mxu0 0
        %3036 = vmatmul.mubr.bf16.gmra.mxu0 %v2938
        %v3037 = vpop.f32.mrf.mxu0
        %v3038 = vadd.f32 0.0, %v3037
        %v3039 = vpop.f32.mrf.mxu0
        %v3040 = vpop.f32.mrf.mxu0
        %v3041 = vadd.f32 0.0, %v3040
        %v3042 = vpop.f32.mrf.mxu0
        %3043 = vmatprep.mubr.bf16.mxu0 0
        %3044 = vmatmul.mubr.bf16.gmra.mxu0 %v2941
        %v3045 = vpop.f32.mrf.mxu0
        %v3046 = vadd.f32 0.0, %v3045
        %v3047 = vpop.f32.mrf.mxu0
        %v3048 = vpop.f32.mrf.mxu0
        %v3049 = vadd.f32 0.0, %v3048
        %v3050 = vpop.f32.mrf.mxu0
        %3051 = vmatprep.mubr.bf16.mxu0 0
        %3052 = vmatmul.mubr.bf16.gmra.mxu0 %v2944
        %v3053 = vpop.f32.mrf.mxu0
        %v3054 = vadd.f32 0.0, %v3053
        %v3055 = vpop.f32.mrf.mxu0
        %v3056 = vpop.f32.mrf.mxu0
        %v3057 = vadd.f32 0.0, %v3056
        %v3058 = vpop.f32.mrf.mxu0
        %3059 = vmatprep.mubr.bf16.mxu0 0
        %3060 = vmatmul.mubr.bf16.gmra.mxu0 %v2947
        %v3061 = vpop.f32.mrf.mxu0
        %v3062 = vadd.f32 0.0, %v3061
        %v3063 = vpop.f32.mrf.mxu0
        %v3064 = vpop.f32.mrf.mxu0
        %v3065 = vadd.f32 0.0, %v3064
        %v3066 = vpop.f32.mrf.mxu0
        %3067 = vmatprep.mubr.bf16.mxu0 0
        %3068 = vmatmul.mubr.bf16.gmra.mxu0 %v2950
        %v3069 = vpop.f32.mrf.mxu0
        %v3070 = vadd.f32 0.0, %v3069
        %v3071 = vpop.f32.mrf.mxu0
        %v3072 = vpop.f32.mrf.mxu0
        %v3073 = vadd.f32 0.0, %v3072
        %v3074 = vpop.f32.mrf.mxu0
        %3075 = vmatprep.mubr.bf16.mxu0 0
        %3076 = vmatmul.mubr.bf16.gmra.mxu0 %v2953
        %v3077 = vpop.f32.mrf.mxu0
        %v3078 = vadd.f32 0.0, %v3077
        %v3079 = vpop.f32.mrf.mxu0
        %v3080 = vpop.f32.mrf.mxu0
        %v3081 = vadd.f32 0.0, %v3080
        %v3082 = vpop.f32.mrf.mxu0
        %3083 = vmatprep.mubr.bf16.mxu0 0
        %3084 = vmatmul.mubr.bf16.gmra.mxu0 %v2956
        %v3085 = vpop.f32.mrf.mxu0
        %v3086 = vadd.f32 0.0, %v3085
        %v3087 = vpop.f32.mrf.mxu0
        %v3088 = vpop.f32.mrf.mxu0
        %v3089 = vadd.f32 0.0, %v3088
        %v3090 = vpop.f32.mrf.mxu0
        %3091 = vmatprep.mubr.bf16.mxu0 0
        %3092 = vmatmul.mubr.bf16.gmra.mxu0 %v2959
        %v3093 = vpop.f32.mrf.mxu0
        %v3094 = vadd.f32 0.0, %v3093
        %v3095 = vpop.f32.mrf.mxu0
        %v3096 = vpop.f32.mrf.mxu0
        %v3097 = vadd.f32 0.0, %v3096
        %v3098 = vpop.f32.mrf.mxu0
        %3099 = vmatprep.mubr.bf16.mxu0 0
        %3100 = vmatmul.mubr.bf16.gmra.mxu0 %v2962
        %v3101 = vpop.f32.mrf.mxu0
        %v3102 = vadd.f32 0.0, %v3101
        %v3103 = vpop.f32.mrf.mxu0
        %v3104 = vpop.f32.mrf.mxu0
        %v3105 = vadd.f32 0.0, %v3104
        %v3106 = vpop.f32.mrf.mxu0
        %3107 = vmatprep.mubr.bf16.mxu0 0
        %3108 = vmatmul.mubr.bf16.gmra.mxu0 %v2965
        %v3109 = vpop.f32.mrf.mxu0
        %v3110 = vadd.f32 0.0, %v3109
        %v3111 = vpop.f32.mrf.mxu0
        %v3112 = vpop.f32.mrf.mxu0
        %v3113 = vadd.f32 0.0, %v3112
        %v3114 = vpop.f32.mrf.mxu0
        %3115 = vmatprep.mubr.bf16.mxu0 0
        %3116 = vmatmul.mubr.bf16.gmra.mxu0 %v2968
        %v3117 = vpop.f32.mrf.mxu0
        %v3118 = vadd.f32 0.0, %v3117
        %v3119 = vpop.f32.mrf.mxu0
        %v3120 = vpop.f32.mrf.mxu0
        %v3121 = vadd.f32 0.0, %v3120
        %v3122 = vpop.f32.mrf.mxu0
        %3123 = vmatprep.mubr.bf16.mxu0 0
        %3124 = vmatmul.mubr.bf16.gmra.mxu0 %v2971
        %v3125 = vpop.f32.mrf.mxu0
        %v3126 = vadd.f32 0.0, %v3125
        %v3127 = vpop.f32.mrf.mxu0
        %v3128 = vpop.f32.mrf.mxu0
        %v3129 = vadd.f32 0.0, %v3128
        %v3130 = vpop.f32.mrf.mxu0
        %3131 = vmatprep.mubr.bf16.mxu0 0
        %3132 = vmatmul.mubr.bf16.gmra.mxu0 %v2974
        %v3133 = vpop.f32.mrf.mxu0
        %v3134 = vadd.f32 0.0, %v3133
        %v3135 = vpop.f32.mrf.mxu0
        %v3136 = vpop.f32.mrf.mxu0
        %v3137 = vadd.f32 0.0, %v3136
        %v3138 = vpop.f32.mrf.mxu0
        %3139 = vmatprep.mubr.bf16.mxu0 0
        %3140 = vmatmul.mubr.bf16.gmra.mxu0 %v2977
        %v3141 = vpop.f32.mrf.mxu0
        %v3142 = vadd.f32 0.0, %v3141
        %v3143 = vpop.f32.mrf.mxu0
        %v3144 = vpop.f32.mrf.mxu0
        %v3145 = vadd.f32 0.0, %v3144
        %v3146 = vpop.f32.mrf.mxu0
        %3147 = vmatprep.mubr.bf16.mxu0 0
        %3148 = vmatmul.mubr.bf16.gmra.mxu0 %v2980
        %v3149 = vpop.f32.mrf.mxu0
        %v3150 = vadd.f32 0.0, %v3149
        %v3151 = vpop.f32.mrf.mxu0
        %v3152 = vpop.f32.mrf.mxu0
        %v3153 = vadd.f32 0.0, %v3152
        %v3154 = vpop.f32.mrf.mxu0
        %3155 = vmatprep.mubr.bf16.mxu0 0
        %3156 = vmatmul.mubr.bf16.gmra.mxu0 %v2983
        %v3157 = vpop.f32.mrf.mxu0
        %v3158 = vadd.f32 0.0, %v3157
        %v3159 = vpop.f32.mrf.mxu0
        %v3160 = vpop.f32.mrf.mxu0
        %v3161 = vadd.f32 0.0, %v3160
        %v3162 = vpop.f32.mrf.mxu0
        %3163 = vmatprep.mubr.bf16.mxu0 0
        %3164 = vmatmul.mubr.bf16.gmra.mxu0 %v2986
        %v3165 = vpop.f32.mrf.mxu0
        %v3166 = vadd.f32 0.0, %v3165
        %v3167 = vpop.f32.mrf.mxu0
        %v3168 = vpop.f32.mrf.mxu0
        %v3169 = vadd.f32 0.0, %v3168
        %v3170 = vpop.f32.mrf.mxu0
        %3171 = vmatprep.mubr.bf16.mxu0 0
        %3172 = vmatmul.mubr.bf16.gmra.mxu0 %v2989
        %v3173 = vpop.f32.mrf.mxu0
        %v3174 = vadd.f32 0.0, %v3173
        %v3175 = vpop.f32.mrf.mxu0
        %v3176 = vpop.f32.mrf.mxu0
        %v3177 = vadd.f32 0.0, %v3176
        %v3178 = vpop.f32.mrf.mxu0
        %3179 = vmatprep.mubr.bf16.mxu0 0
        %3180 = vmatmul.mubr.bf16.gmra.mxu0 %v2992
        %v3181 = vpop.f32.mrf.mxu0
        %v3182 = vadd.f32 0.0, %v3181
        %v3183 = vpop.f32.mrf.mxu0
        %v3184 = vpop.f32.mrf.mxu0
        %v3185 = vadd.f32 0.0, %v3184
        %v3186 = vpop.f32.mrf.mxu0
        %3187 = vmatprep.mubr.bf16.mxu0 0
        %3188 = vmatmul.mubr.bf16.gmra.mxu0 %v2995
        %v3189 = vpop.f32.mrf.mxu0
        %v3190 = vadd.f32 0.0, %v3189
        %v3191 = vpop.f32.mrf.mxu0
        %v3192 = vpop.f32.mrf.mxu0
        %v3193 = vadd.f32 0.0, %v3192
        %v3194 = vpop.f32.mrf.mxu0
        %3195 = vmatprep.mubr.bf16.mxu0 0
        %3196 = vmatmul.mubr.bf16.gmra.mxu0 %v2998
        %v3197 = vpop.f32.mrf.mxu0
        %v3198 = vadd.f32 0.0, %v3197
        %v3199 = vpop.f32.mrf.mxu0
        %v3200 = vpop.f32.mrf.mxu0
        %v3201 = vadd.f32 0.0, %v3200
        %v3202 = vpop.f32.mrf.mxu0
        %3203 = vdwg.mxu0
        %v3204 = vadd.f32 %v2795, %v3038
        %v3205 = vadd.f32 %v2796, %v3041
        %v3206 = vadd.f32 %v2797, %v3046
        %v3207 = vadd.f32 %v2798, %v3049
        %v3208 = vadd.f32 %v2799, %v3054
        %v3209 = vadd.f32 %v2800, %v3057
        %v3210 = vadd.f32 %v2801, %v3062
        %v3211 = vadd.f32 %v2802, %v3065
        %v3212 = vadd.f32 %v2803, %v3070
        %v3213 = vadd.f32 %v2804, %v3073
        %v3214 = vadd.f32 %v2805, %v3078
        %v3215 = vadd.f32 %v2806, %v3081
        %v3216 = vadd.f32 %v2807, %v3086
        %v3217 = vadd.f32 %v2808, %v3089
        %v3218 = vadd.f32 %v2809, %v3094
        %v3219 = vadd.f32 %v2810, %v3097
        %v3220 = vadd.f32 %v2811, %v3102
        %v3221 = vadd.f32 %v2812, %v3105
        %v3222 = vadd.f32 %v2813, %v3110
        %v3223 = vadd.f32 %v2814, %v3113
        %v3224 = vadd.f32 %v2815, %v3118
        %v3225 = vadd.f32 %v2816, %v3121
        %v3226 = vadd.f32 %v2817, %v3126
        %v3227 = vadd.f32 %v2818, %v3129
        %v3228 = vadd.f32 %v2819, %v3134
        %v3229 = vadd.f32 %v2820, %v3137
        %v3230 = vadd.f32 %v2821, %v3142
        %v3231 = vadd.f32 %v2822, %v3145
        %v3232 = vadd.f32 %v2823, %v3150
        %v3233 = vadd.f32 %v2824, %v3153
        %v3234 = vadd.f32 %v2825, %v3158
        %v3235 = vadd.f32 %v2826, %v3161
        %v3236 = vadd.f32 %v2827, %v3166
        %v3237 = vadd.f32 %v2828, %v3169
        %v3238 = vadd.f32 %v2829, %v3174
        %v3239 = vadd.f32 %v2830, %v3177
        %v3240 = vadd.f32 %v2831, %v3182
        %v3241 = vadd.f32 %v2832, %v3185
        %v3242 = vadd.f32 %v2833, %v3190
        %v3243 = vadd.f32 %v2834, %v3193
        %v3244 = vadd.f32 %v2835, %v3198
        %v3245 = vadd.f32 %v2836, %v3201
        %s3246 = scalar_lea.vmem %s2, 16
        %v3247 = vld [vmem:[%s3246] sm:$0x3]
        %vm3248 = vcmask 1044480
        %v3249 = vrot.slane %v482, 3
        %v3250 = vrot.slane %v483, 3
        %v3251 = vsel %vm3248, %v3249, %v3250
        %v3252 = vrot.slane %v484, 3
        %v3253 = vsel %vm3248, %v3250, %v3252
        %v3254 = vrot.slane %v485, 3
        %v3255 = vsel %vm3248, %v3252, %v3254
        %v3256 = vrot.slane %v486, 3
        %v3257 = vsel %vm3248, %v3254, %v3256
        %v3258 = vrot.slane %v487, 3
        %v3259 = vsel %vm3248, %v3256, %v3258
        %v3260 = vrot.slane %v488, 3
        %v3261 = vsel %vm3248, %v3258, %v3260
        %v3262 = vrot.slane %v489, 3
        %v3263 = vsel %vm3248, %v3260, %v3262
        %v3264 = vrot.slane %v490, 3
        %v3265 = vsel %vm3248, %v3262, %v3264
        %v3266 = vrot.slane %v491, 3
        %v3267 = vsel %vm3248, %v3264, %v3266
        %v3268 = vrot.slane %v492, 3
        %v3269 = vsel %vm3248, %v3266, %v3268
        %v3270 = vrot.slane %v493, 3
        %v3271 = vsel %vm3248, %v3268, %v3270
        %v3272 = vrot.slane %v494, 3
        %v3273 = vsel %vm3248, %v3270, %v3272
        %v3274 = vrot.slane %v495, 3
        %v3275 = vsel %vm3248, %v3272, %v3274
        %v3276 = vrot.slane %v496, 3
        %v3277 = vsel %vm3248, %v3274, %v3276
        %v3278 = vrot.slane %v497, 3
        %v3279 = vsel %vm3248, %v3276, %v3278
        %v3280 = vrot.slane %v498, 3
        %v3281 = vsel %vm3248, %v3278, %v3280
        %v3282 = vrot.slane %v499, 3
        %v3283 = vsel %vm3248, %v3280, %v3282
        %v3284 = vrot.slane %v500, 3
        %v3285 = vsel %vm3248, %v3282, %v3284
        %v3286 = vrot.slane %v1551, 3
        %v3287 = vsel %vm3248, %v3284, %v3286
        %v3288 = vrot.slane %v2579, 3
        %v3289 = vsel %vm3248, %v3286, %v3288
        %v3290 = vrot.slane %v2580, 3
        %v3291 = vsel %vm3248, %v3288, %v3290
        %v3293 = vsel %vm675, %v3251, 0
        %v3296 = vsel %vm675, %v3253, 0
        %v3299 = vsel %vm675, %v3255, 0
        %v3302 = vsel %vm675, %v3257, 0
        %v3305 = vsel %vm675, %v3259, 0
        %v3308 = vsel %vm675, %v3261, 0
        %v3311 = vsel %vm675, %v3263, 0
        %v3314 = vsel %vm675, %v3265, 0
        %v3317 = vsel %vm675, %v3267, 0
        %v3320 = vsel %vm675, %v3269, 0
        %v3323 = vsel %vm675, %v3271, 0
        %v3326 = vsel %vm675, %v3273, 0
        %v3329 = vsel %vm675, %v3275, 0
        %v3332 = vsel %vm675, %v3277, 0
        %v3335 = vsel %vm675, %v3279, 0
        %v3338 = vsel %vm675, %v3281, 0
        %v3341 = vsel %vm675, %v3283, 0
        %v3344 = vsel %vm675, %v3285, 0
        %v3347 = vsel %vm675, %v3287, 0
        %v3350 = vsel %vm675, %v3289, 0
        %v3353 = vsel %vm675, %v3291, 0
        %v3356 = vsel %vm739, %v3247, 0
        %3358 = vmatprep.subr.bf16.mxu0 0
        %3359 = vmatpush1.bf16.msra.mxu0 0
        %3360 = vmatprep.subr.bf16.mxu0 0
        %3361 = vmatpush1.bf16.msra.mxu0 0
        %3362 = vmatprep.subr.bf16.mxu0 0
        %3363 = vmatpush1.bf16.msra.mxu0 0
        %3364 = vmatprep.subr.bf16.mxu0 0
        %3365 = vmatpush1.bf16.msra.mxu0 0
        %3366 = vmatprep.subr.bf16.mxu0 0
        %3367 = vmatpush1.bf16.msra.mxu0 0
        %3368 = vmatprep.subr.bf16.mxu0 0
        %3369 = vmatpush1.bf16.msra.mxu0 0
        %3370 = vmatprep.subr.bf16.mxu0 0
        %3371 = vmatpush1.bf16.msra.mxu0 0
        %3372 = vmatprep.subr.bf16.mxu0 0
        %3373 = vmatpush1.bf16.msra.mxu0 %v3356
        %3374 = vmatprep.subr.bf16.mxu0 0
        %3375 = vmatpush2.bf16.msra.mxu0 0
        %3376 = vmatprep.subr.bf16.mxu0 0
        %3377 = vmatpush2.bf16.msra.mxu0 0
        %3378 = vmatprep.subr.bf16.mxu0 0
        %3379 = vmatpush2.bf16.msra.mxu0 0
        %3380 = vmatprep.subr.bf16.mxu0 0
        %3381 = vmatpush2.bf16.msra.mxu0 0
        %3382 = vmatprep.subr.bf16.mxu0 0
        %3383 = vmatpush2.bf16.msra.mxu0 0
        %3384 = vmatprep.subr.bf16.mxu0 0
        %3385 = vmatpush2.bf16.msra.mxu0 0
        %3386 = vmatprep.subr.bf16.mxu0 0
        %3387 = vmatpush2.bf16.msra.mxu0 0
        %3388 = vmatprep.subr.bf16.mxu0 0
        %3389 = vmatpush2.bf16.msra.mxu0 0
        %3390 = vmatprep.mubr.bf16.mxu0 0
        %3391 = vmatmul.mubr.bf16.gmra.mxu0 %v3293
        %v3392 = vpop.f32.mrf.mxu0
        %v3393 = vadd.f32 0.0, %v3392
        %v3394 = vpop.f32.mrf.mxu0
        %v3395 = vpop.f32.mrf.mxu0
        %v3396 = vadd.f32 0.0, %v3395
        %v3397 = vpop.f32.mrf.mxu0
        %3398 = vmatprep.mubr.bf16.mxu0 0
        %3399 = vmatmul.mubr.bf16.gmra.mxu0 %v3296
        %v3400 = vpop.f32.mrf.mxu0
        %v3401 = vadd.f32 0.0, %v3400
        %v3402 = vpop.f32.mrf.mxu0
        %v3403 = vpop.f32.mrf.mxu0
        %v3404 = vadd.f32 0.0, %v3403
        %v3405 = vpop.f32.mrf.mxu0
        %3406 = vmatprep.mubr.bf16.mxu0 0
        %3407 = vmatmul.mubr.bf16.gmra.mxu0 %v3299
        %v3408 = vpop.f32.mrf.mxu0
        %v3409 = vadd.f32 0.0, %v3408
        %v3410 = vpop.f32.mrf.mxu0
        %v3411 = vpop.f32.mrf.mxu0
        %v3412 = vadd.f32 0.0, %v3411
        %v3413 = vpop.f32.mrf.mxu0
        %3414 = vmatprep.mubr.bf16.mxu0 0
        %3415 = vmatmul.mubr.bf16.gmra.mxu0 %v3302
        %v3416 = vpop.f32.mrf.mxu0
        %v3417 = vadd.f32 0.0, %v3416
        %v3418 = vpop.f32.mrf.mxu0
        %v3419 = vpop.f32.mrf.mxu0
        %v3420 = vadd.f32 0.0, %v3419
        %v3421 = vpop.f32.mrf.mxu0
        %3422 = vmatprep.mubr.bf16.mxu0 0
        %3423 = vmatmul.mubr.bf16.gmra.mxu0 %v3305
        %v3424 = vpop.f32.mrf.mxu0
        %v3425 = vadd.f32 0.0, %v3424
        %v3426 = vpop.f32.mrf.mxu0
        %v3427 = vpop.f32.mrf.mxu0
        %v3428 = vadd.f32 0.0, %v3427
        %v3429 = vpop.f32.mrf.mxu0
        %3430 = vmatprep.mubr.bf16.mxu0 0
        %3431 = vmatmul.mubr.bf16.gmra.mxu0 %v3308
        %v3432 = vpop.f32.mrf.mxu0
        %v3433 = vadd.f32 0.0, %v3432
        %v3434 = vpop.f32.mrf.mxu0
        %v3435 = vpop.f32.mrf.mxu0
        %v3436 = vadd.f32 0.0, %v3435
        %v3437 = vpop.f32.mrf.mxu0
        %3438 = vmatprep.mubr.bf16.mxu0 0
        %3439 = vmatmul.mubr.bf16.gmra.mxu0 %v3311
        %v3440 = vpop.f32.mrf.mxu0
        %v3441 = vadd.f32 0.0, %v3440
        %v3442 = vpop.f32.mrf.mxu0
        %v3443 = vpop.f32.mrf.mxu0
        %v3444 = vadd.f32 0.0, %v3443
        %v3445 = vpop.f32.mrf.mxu0
        %3446 = vmatprep.mubr.bf16.mxu0 0
        %3447 = vmatmul.mubr.bf16.gmra.mxu0 %v3314
        %v3448 = vpop.f32.mrf.mxu0
        %v3449 = vadd.f32 0.0, %v3448
        %v3450 = vpop.f32.mrf.mxu0
        %v3451 = vpop.f32.mrf.mxu0
        %v3452 = vadd.f32 0.0, %v3451
        %v3453 = vpop.f32.mrf.mxu0
        %3454 = vmatprep.mubr.bf16.mxu0 0
        %3455 = vmatmul.mubr.bf16.gmra.mxu0 %v3317
        %v3456 = vpop.f32.mrf.mxu0
        %v3457 = vadd.f32 0.0, %v3456
        %v3458 = vpop.f32.mrf.mxu0
        %v3459 = vpop.f32.mrf.mxu0
        %v3460 = vadd.f32 0.0, %v3459
        %v3461 = vpop.f32.mrf.mxu0
        %3462 = vmatprep.mubr.bf16.mxu0 0
        %3463 = vmatmul.mubr.bf16.gmra.mxu0 %v3320
        %v3464 = vpop.f32.mrf.mxu0
        %v3465 = vadd.f32 0.0, %v3464
        %v3466 = vpop.f32.mrf.mxu0
        %v3467 = vpop.f32.mrf.mxu0
        %v3468 = vadd.f32 0.0, %v3467
        %v3469 = vpop.f32.mrf.mxu0
        %3470 = vmatprep.mubr.bf16.mxu0 0
        %3471 = vmatmul.mubr.bf16.gmra.mxu0 %v3323
        %v3472 = vpop.f32.mrf.mxu0
        %v3473 = vadd.f32 0.0, %v3472
        %v3474 = vpop.f32.mrf.mxu0
        %v3475 = vpop.f32.mrf.mxu0
        %v3476 = vadd.f32 0.0, %v3475
        %v3477 = vpop.f32.mrf.mxu0
        %3478 = vmatprep.mubr.bf16.mxu0 0
        %3479 = vmatmul.mubr.bf16.gmra.mxu0 %v3326
        %v3480 = vpop.f32.mrf.mxu0
        %v3481 = vadd.f32 0.0, %v3480
        %v3482 = vpop.f32.mrf.mxu0
        %v3483 = vpop.f32.mrf.mxu0
        %v3484 = vadd.f32 0.0, %v3483
        %v3485 = vpop.f32.mrf.mxu0
        %3486 = vmatprep.mubr.bf16.mxu0 0
        %3487 = vmatmul.mubr.bf16.gmra.mxu0 %v3329
        %v3488 = vpop.f32.mrf.mxu0
        %v3489 = vadd.f32 0.0, %v3488
        %v3490 = vpop.f32.mrf.mxu0
        %v3491 = vpop.f32.mrf.mxu0
        %v3492 = vadd.f32 0.0, %v3491
        %v3493 = vpop.f32.mrf.mxu0
        %3494 = vmatprep.mubr.bf16.mxu0 0
        %3495 = vmatmul.mubr.bf16.gmra.mxu0 %v3332
        %v3496 = vpop.f32.mrf.mxu0
        %v3497 = vadd.f32 0.0, %v3496
        %v3498 = vpop.f32.mrf.mxu0
        %v3499 = vpop.f32.mrf.mxu0
        %v3500 = vadd.f32 0.0, %v3499
        %v3501 = vpop.f32.mrf.mxu0
        %3502 = vmatprep.mubr.bf16.mxu0 0
        %3503 = vmatmul.mubr.bf16.gmra.mxu0 %v3335
        %v3504 = vpop.f32.mrf.mxu0
        %v3505 = vadd.f32 0.0, %v3504
        %v3506 = vpop.f32.mrf.mxu0
        %v3507 = vpop.f32.mrf.mxu0
        %v3508 = vadd.f32 0.0, %v3507
        %v3509 = vpop.f32.mrf.mxu0
        %3510 = vmatprep.mubr.bf16.mxu0 0
        %3511 = vmatmul.mubr.bf16.gmra.mxu0 %v3338
        %v3512 = vpop.f32.mrf.mxu0
        %v3513 = vadd.f32 0.0, %v3512
        %v3514 = vpop.f32.mrf.mxu0
        %v3515 = vpop.f32.mrf.mxu0
        %v3516 = vadd.f32 0.0, %v3515
        %v3517 = vpop.f32.mrf.mxu0
        %3518 = vmatprep.mubr.bf16.mxu0 0
        %3519 = vmatmul.mubr.bf16.gmra.mxu0 %v3341
        %v3520 = vpop.f32.mrf.mxu0
        %v3521 = vadd.f32 0.0, %v3520
        %v3522 = vpop.f32.mrf.mxu0
        %v3523 = vpop.f32.mrf.mxu0
        %v3524 = vadd.f32 0.0, %v3523
        %v3525 = vpop.f32.mrf.mxu0
        %3526 = vmatprep.mubr.bf16.mxu0 0
        %3527 = vmatmul.mubr.bf16.gmra.mxu0 %v3344
        %v3528 = vpop.f32.mrf.mxu0
        %v3529 = vadd.f32 0.0, %v3528
        %v3530 = vpop.f32.mrf.mxu0
        %v3531 = vpop.f32.mrf.mxu0
        %v3532 = vadd.f32 0.0, %v3531
        %v3533 = vpop.f32.mrf.mxu0
        %3534 = vmatprep.mubr.bf16.mxu0 0
        %3535 = vmatmul.mubr.bf16.gmra.mxu0 %v3347
        %v3536 = vpop.f32.mrf.mxu0
        %v3537 = vadd.f32 0.0, %v3536
        %v3538 = vpop.f32.mrf.mxu0
        %v3539 = vpop.f32.mrf.mxu0
        %v3540 = vadd.f32 0.0, %v3539
        %v3541 = vpop.f32.mrf.mxu0
        %3542 = vmatprep.mubr.bf16.mxu0 0
        %3543 = vmatmul.mubr.bf16.gmra.mxu0 %v3350
        %v3544 = vpop.f32.mrf.mxu0
        %v3545 = vadd.f32 0.0, %v3544
        %v3546 = vpop.f32.mrf.mxu0
        %v3547 = vpop.f32.mrf.mxu0
        %v3548 = vadd.f32 0.0, %v3547
        %v3549 = vpop.f32.mrf.mxu0
        %3550 = vmatprep.mubr.bf16.mxu0 0
        %3551 = vmatmul.mubr.bf16.gmra.mxu0 %v3353
        %v3552 = vpop.f32.mrf.mxu0
        %v3553 = vadd.f32 0.0, %v3552
        %v3554 = vpop.f32.mrf.mxu0
        %v3555 = vpop.f32.mrf.mxu0
        %v3556 = vadd.f32 0.0, %v3555
        %v3557 = vpop.f32.mrf.mxu0
        %3558 = vdwg.mxu0
        %v3559 = vadd.f32 %v3204, %v3393
        %v3560 = vadd.f32 %v3205, %v3396
        %v3561 = vadd.f32 %v3206, %v3401
        %v3562 = vadd.f32 %v3207, %v3404
        %v3563 = vadd.f32 %v3208, %v3409
        %v3564 = vadd.f32 %v3209, %v3412
        %v3565 = vadd.f32 %v3210, %v3417
        %v3566 = vadd.f32 %v3211, %v3420
        %v3567 = vadd.f32 %v3212, %v3425
        %v3568 = vadd.f32 %v3213, %v3428
        %v3569 = vadd.f32 %v3214, %v3433
        %v3570 = vadd.f32 %v3215, %v3436
        %v3571 = vadd.f32 %v3216, %v3441
        %v3572 = vadd.f32 %v3217, %v3444
        %v3573 = vadd.f32 %v3218, %v3449
        %v3574 = vadd.f32 %v3219, %v3452
        %v3575 = vadd.f32 %v3220, %v3457
        %v3576 = vadd.f32 %v3221, %v3460
        %v3577 = vadd.f32 %v3222, %v3465
        %v3578 = vadd.f32 %v3223, %v3468
        %v3579 = vadd.f32 %v3224, %v3473
        %v3580 = vadd.f32 %v3225, %v3476
        %v3581 = vadd.f32 %v3226, %v3481
        %v3582 = vadd.f32 %v3227, %v3484
        %v3583 = vadd.f32 %v3228, %v3489
        %v3584 = vadd.f32 %v3229, %v3492
        %v3585 = vadd.f32 %v3230, %v3497
        %v3586 = vadd.f32 %v3231, %v3500
        %v3587 = vadd.f32 %v3232, %v3505
        %v3588 = vadd.f32 %v3233, %v3508
        %v3589 = vadd.f32 %v3234, %v3513
        %v3590 = vadd.f32 %v3235, %v3516
        %v3591 = vadd.f32 %v3236, %v3521
        %v3592 = vadd.f32 %v3237, %v3524
        %v3593 = vadd.f32 %v3238, %v3529
        %v3594 = vadd.f32 %v3239, %v3532
        %v3595 = vadd.f32 %v3240, %v3537
        %v3596 = vadd.f32 %v3241, %v3540
        %v3597 = vadd.f32 %v3242, %v3545
        %v3598 = vadd.f32 %v3243, %v3548
        %v3599 = vadd.f32 %v3244, %v3553
        %v3600 = vadd.f32 %v3245, %v3556
        %v3601 = vld [vmem:[%s3] sm:$0x1]
        %v3603 = vlaneseq
        %v3604 = vshrl.u32 %v3603, 7
        %v3605 = vsub.s32 0, %v3604
        %v3606 = vrot.slane %v3601, %v3605
        %v3608 = vadd.f32 %v3559, %v3606
        %v3609 = vadd.f32 %v3560, %v3606
        %v3610 = vadd.f32 %v3561, %v3606
        %v3611 = vadd.f32 %v3562, %v3606
        %v3612 = vadd.f32 %v3563, %v3606
        %v3613 = vadd.f32 %v3564, %v3606
        %v3614 = vadd.f32 %v3565, %v3606
        %v3615 = vadd.f32 %v3566, %v3606
        %v3616 = vadd.f32 %v3567, %v3606
        %v3617 = vadd.f32 %v3568, %v3606
        %v3618 = vadd.f32 %v3569, %v3606
        %v3619 = vadd.f32 %v3570, %v3606
        %v3620 = vadd.f32 %v3571, %v3606
        %v3621 = vadd.f32 %v3572, %v3606
        %v3622 = vadd.f32 %v3573, %v3606
        %v3623 = vadd.f32 %v3574, %v3606
        %v3624 = vadd.f32 %v3575, %v3606
        %v3625 = vadd.f32 %v3576, %v3606
        %v3626 = vadd.f32 %v3577, %v3606
        %v3627 = vadd.f32 %v3578, %v3606
        %v3628 = vadd.f32 %v3579, %v3606
        %v3629 = vadd.f32 %v3580, %v3606
        %v3630 = vadd.f32 %v3581, %v3606
        %v3631 = vadd.f32 %v3582, %v3606
        %v3632 = vadd.f32 %v3583, %v3606
        %v3633 = vadd.f32 %v3584, %v3606
        %v3634 = vadd.f32 %v3585, %v3606
        %v3635 = vadd.f32 %v3586, %v3606
        %v3636 = vadd.f32 %v3587, %v3606
        %v3637 = vadd.f32 %v3588, %v3606
        %v3638 = vadd.f32 %v3589, %v3606
        %v3639 = vadd.f32 %v3590, %v3606
        %v3640 = vadd.f32 %v3591, %v3606
        %v3641 = vadd.f32 %v3592, %v3606
        %v3642 = vadd.f32 %v3593, %v3606
        %v3643 = vadd.f32 %v3594, %v3606
        %v3644 = vadd.f32 %v3595, %v3606
        %v3645 = vadd.f32 %v3596, %v3606
        %v3646 = vadd.f32 %v3597, %v3606
        %v3647 = vadd.f32 %v3598, %v3606
        %v3648 = vadd.f32 %v3599, %v3606
        %v3649 = vadd.f32 %v3600, %v3606
        %v3650 = vmax.f32 %v3608, 0.0
        %v3651 = vmax.f32 %v3609, 0.0
        %v3652 = vmax.f32 %v3610, 0.0
        %v3653 = vmax.f32 %v3611, 0.0
        %v3654 = vmax.f32 %v3612, 0.0
        %v3655 = vmax.f32 %v3613, 0.0
        %v3656 = vmax.f32 %v3614, 0.0
        %v3657 = vmax.f32 %v3615, 0.0
        %v3658 = vmax.f32 %v3616, 0.0
        %v3659 = vmax.f32 %v3617, 0.0
        %v3660 = vmax.f32 %v3618, 0.0
        %v3661 = vmax.f32 %v3619, 0.0
        %v3662 = vmax.f32 %v3620, 0.0
        %v3663 = vmax.f32 %v3621, 0.0
        %v3664 = vmax.f32 %v3622, 0.0
        %v3665 = vmax.f32 %v3623, 0.0
        %v3666 = vmax.f32 %v3624, 0.0
        %v3667 = vmax.f32 %v3625, 0.0
        %v3668 = vmax.f32 %v3626, 0.0
        %v3669 = vmax.f32 %v3627, 0.0
        %v3670 = vmax.f32 %v3628, 0.0
        %v3671 = vmax.f32 %v3629, 0.0
        %v3672 = vmax.f32 %v3630, 0.0
        %v3673 = vmax.f32 %v3631, 0.0
        %v3674 = vmax.f32 %v3632, 0.0
        %v3675 = vmax.f32 %v3633, 0.0
        %v3676 = vmax.f32 %v3634, 0.0
        %v3677 = vmax.f32 %v3635, 0.0
        %v3678 = vmax.f32 %v3636, 0.0
        %v3679 = vmax.f32 %v3637, 0.0
        %v3680 = vmax.f32 %v3638, 0.0
        %v3681 = vmax.f32 %v3639, 0.0
        %v3682 = vmax.f32 %v3640, 0.0
        %v3683 = vmax.f32 %v3641, 0.0
        %v3684 = vmax.f32 %v3642, 0.0
        %v3685 = vmax.f32 %v3643, 0.0
        %v3686 = vmax.f32 %v3644, 0.0
        %v3687 = vmax.f32 %v3645, 0.0
        %v3688 = vmax.f32 %v3646, 0.0
        %v3689 = vmax.f32 %v3647, 0.0
        %v3690 = vmax.f32 %v3648, 0.0
        %v3691 = vmax.f32 %v3649, 0.0
        %v3692 = vld [vmem:[%s333] sm:$0xff]
        %v3693 = vld [vmem:[%s333 + $0x8] sm:$0xff]
        %v3694 = vld [vmem:[%s333 + $0x10] sm:$0xff]
        %v3695 = vld [vmem:[%s333 + $0x18] sm:$0xff]
        %v3696 = vld [vmem:[%s333 + $0x20] sm:$0xff]
        %v3697 = vld [vmem:[%s333 + $0x28] sm:$0xff]
        %v3698 = vld [vmem:[%s333 + $0x30] sm:$0xff]
        %v3699 = vld [vmem:[%s333 + $0x38] sm:$0xff]
        %v3700 = vld [vmem:[%s333 + $0x40] sm:$0xff]
        %v3701 = vld [vmem:[%s333 + $0x48] sm:$0xff]
        %v3702 = vld [vmem:[%s333 + $0x50] sm:$0xff]
        %v3703 = vld [vmem:[%s333 + $0x58] sm:$0xff]
        %v3704 = vld [vmem:[%s333 + $0x60] sm:$0xff]
        %v3705 = vld [vmem:[%s333 + $0x68] sm:$0xff]
        %v3706 = vld [vmem:[%s333 + $0x70] sm:$0xff]
        %v3707 = vld [vmem:[%s333 + $0x78] sm:$0xff]
        %v3708 = vld [vmem:[%s333 + $0x80] sm:$0xff]
        %v3709 = vld [vmem:[%s333 + $0x88] sm:$0xff]
        %v3710 = vld [vmem:[%s333 + $0x90] sm:$0xff]
        %v3711 = vld [vmem:[%s333 + $0x98] sm:$0xff]
        %v3712 = vld [vmem:[%s333 + $0xa0] sm:$0xff]
        %v3713 = vld [vmem:[%s333 + $0xa8] sm:$0xff]
        %v3714 = vld [vmem:[%s333 + $0xb0] sm:$0xff]
        %v3715 = vld [vmem:[%s333 + $0xb8] sm:$0xff]
        %v3716 = vld [vmem:[%s333 + $0xc0] sm:$0xff]
        %v3717 = vld [vmem:[%s333 + $0xc8] sm:$0xff]
        %v3718 = vld [vmem:[%s333 + $0xd0] sm:$0xff]
        %v3719 = vld [vmem:[%s333 + $0xd8] sm:$0xff]
        %v3720 = vld [vmem:[%s333 + $0xe0] sm:$0xff]
        %v3721 = vld [vmem:[%s333 + $0xe8] sm:$0xff]
        %v3722 = vld [vmem:[%s333 + $0xf0] sm:$0xff]
        %v3723 = vld [vmem:[%s333 + $0xf8] sm:$0xff]
        %v3724 = vld [vmem:[%s333 + $0x100] sm:$0xff]
        %v3725 = vld [vmem:[%s333 + $0x108] sm:$0xff]
        %v3726 = vld [vmem:[%s333 + $0x110] sm:$0xff]
        %v3727 = vld [vmem:[%s333 + $0x118] sm:$0xff]
        %v3728 = vld [vmem:[%s333 + $0x120] sm:$0xff]
        %v3729 = vld [vmem:[%s333 + $0x128] sm:$0xff]
        %v3730 = vld [vmem:[%s333 + $0x130] sm:$0xff]
        %v3731 = vld [vmem:[%s333 + $0x138] sm:$0xff]
        %v3732 = vld [vmem:[%s333 + $0x140] sm:$0xff]
        %v3733 = vld [vmem:[%s333 + $0x148] sm:$0xff]
        %3735 = vset.pattern.permute.xlu0 0
        %3736 = vperm.xlu0 %3735, %v3692
        %v3737 = vpop.permute.xlu0 %3736
        %3740 = vset.pattern.permute.xlu0 0
        %3741 = vperm.xlu0 %3740, %v3693
        %v3742 = vpop.permute.xlu0 %3741
        %3745 = vset.pattern.permute.xlu0 0
        %3746 = vperm.xlu0 %3745, %v3694
        %v3747 = vpop.permute.xlu0 %3746
        %3750 = vset.pattern.permute.xlu0 0
        %3751 = vperm.xlu0 %3750, %v3695
        %v3752 = vpop.permute.xlu0 %3751
        %3755 = vset.pattern.permute.xlu0 0
        %3756 = vperm.xlu0 %3755, %v3696
        %v3757 = vpop.permute.xlu0 %3756
        %3760 = vset.pattern.permute.xlu0 0
        %3761 = vperm.xlu0 %3760, %v3697
        %v3762 = vpop.permute.xlu0 %3761
        %3765 = vset.pattern.permute.xlu0 0
        %3766 = vperm.xlu0 %3765, %v3698
        %v3767 = vpop.permute.xlu0 %3766
        %3770 = vset.pattern.permute.xlu0 0
        %3771 = vperm.xlu0 %3770, %v3699
        %v3772 = vpop.permute.xlu0 %3771
        %3775 = vset.pattern.permute.xlu0 0
        %3776 = vperm.xlu0 %3775, %v3700
        %v3777 = vpop.permute.xlu0 %3776
        %3780 = vset.pattern.permute.xlu0 0
        %3781 = vperm.xlu0 %3780, %v3701
        %v3782 = vpop.permute.xlu0 %3781
        %3785 = vset.pattern.permute.xlu0 0
        %3786 = vperm.xlu0 %3785, %v3702
        %v3787 = vpop.permute.xlu0 %3786
        %3790 = vset.pattern.permute.xlu0 0
        %3791 = vperm.xlu0 %3790, %v3703
        %v3792 = vpop.permute.xlu0 %3791
        %3795 = vset.pattern.permute.xlu0 0
        %3796 = vperm.xlu0 %3795, %v3704
        %v3797 = vpop.permute.xlu0 %3796
        %3800 = vset.pattern.permute.xlu0 0
        %3801 = vperm.xlu0 %3800, %v3705
        %v3802 = vpop.permute.xlu0 %3801
        %3805 = vset.pattern.permute.xlu0 0
        %3806 = vperm.xlu0 %3805, %v3706
        %v3807 = vpop.permute.xlu0 %3806
        %3810 = vset.pattern.permute.xlu0 0
        %3811 = vperm.xlu0 %3810, %v3707
        %v3812 = vpop.permute.xlu0 %3811
        %3815 = vset.pattern.permute.xlu0 0
        %3816 = vperm.xlu0 %3815, %v3708
        %v3817 = vpop.permute.xlu0 %3816
        %3820 = vset.pattern.permute.xlu0 0
        %3821 = vperm.xlu0 %3820, %v3709
        %v3822 = vpop.permute.xlu0 %3821
        %3825 = vset.pattern.permute.xlu0 0
        %3826 = vperm.xlu0 %3825, %v3710
        %v3827 = vpop.permute.xlu0 %3826
        %3830 = vset.pattern.permute.xlu0 0
        %3831 = vperm.xlu0 %3830, %v3711
        %v3832 = vpop.permute.xlu0 %3831
        %3835 = vset.pattern.permute.xlu0 0
        %3836 = vperm.xlu0 %3835, %v3712
        %v3837 = vpop.permute.xlu0 %3836
        %3840 = vset.pattern.permute.xlu0 0
        %3841 = vperm.xlu0 %3840, %v3713
        %v3842 = vpop.permute.xlu0 %3841
        %3845 = vset.pattern.permute.xlu0 0
        %3846 = vperm.xlu0 %3845, %v3714
        %v3847 = vpop.permute.xlu0 %3846
        %3850 = vset.pattern.permute.xlu0 0
        %3851 = vperm.xlu0 %3850, %v3715
        %v3852 = vpop.permute.xlu0 %3851
        %3855 = vset.pattern.permute.xlu0 0
        %3856 = vperm.xlu0 %3855, %v3716
        %v3857 = vpop.permute.xlu0 %3856
        %3860 = vset.pattern.permute.xlu0 0
        %3861 = vperm.xlu0 %3860, %v3717
        %v3862 = vpop.permute.xlu0 %3861
        %3865 = vset.pattern.permute.xlu0 0
        %3866 = vperm.xlu0 %3865, %v3718
        %v3867 = vpop.permute.xlu0 %3866
        %3870 = vset.pattern.permute.xlu0 0
        %3871 = vperm.xlu0 %3870, %v3719
        %v3872 = vpop.permute.xlu0 %3871
        %3875 = vset.pattern.permute.xlu0 0
        %3876 = vperm.xlu0 %3875, %v3720
        %v3877 = vpop.permute.xlu0 %3876
        %3880 = vset.pattern.permute.xlu0 0
        %3881 = vperm.xlu0 %3880, %v3721
        %v3882 = vpop.permute.xlu0 %3881
        %3885 = vset.pattern.permute.xlu0 0
        %3886 = vperm.xlu0 %3885, %v3722
        %v3887 = vpop.permute.xlu0 %3886
        %3890 = vset.pattern.permute.xlu0 0
        %3891 = vperm.xlu0 %3890, %v3723
        %v3892 = vpop.permute.xlu0 %3891
        %3895 = vset.pattern.permute.xlu0 0
        %3896 = vperm.xlu0 %3895, %v3724
        %v3897 = vpop.permute.xlu0 %3896
        %3900 = vset.pattern.permute.xlu0 0
        %3901 = vperm.xlu0 %3900, %v3725
        %v3902 = vpop.permute.xlu0 %3901
        %3905 = vset.pattern.permute.xlu0 0
        %3906 = vperm.xlu0 %3905, %v3726
        %v3907 = vpop.permute.xlu0 %3906
        %3910 = vset.pattern.permute.xlu0 0
        %3911 = vperm.xlu0 %3910, %v3727
        %v3912 = vpop.permute.xlu0 %3911
        %3915 = vset.pattern.permute.xlu0 0
        %3916 = vperm.xlu0 %3915, %v3728
        %v3917 = vpop.permute.xlu0 %3916
        %3920 = vset.pattern.permute.xlu0 0
        %3921 = vperm.xlu0 %3920, %v3729
        %v3922 = vpop.permute.xlu0 %3921
        %3925 = vset.pattern.permute.xlu0 0
        %3926 = vperm.xlu0 %3925, %v3730
        %v3927 = vpop.permute.xlu0 %3926
        %3930 = vset.pattern.permute.xlu0 0
        %3931 = vperm.xlu0 %3930, %v3731
        %v3932 = vpop.permute.xlu0 %3931
        %3935 = vset.pattern.permute.xlu0 0
        %3936 = vperm.xlu0 %3935, %v3732
        %v3937 = vpop.permute.xlu0 %3936
        %3940 = vset.pattern.permute.xlu0 0
        %3941 = vperm.xlu0 %3940, %v3733
        %v3942 = vpop.permute.xlu0 %3941
        %v3944 = vmul.f32 %v3650, %v3737
        %v3945 = vmul.f32 %v3651, %v3742
        %v3946 = vmul.f32 %v3652, %v3747
        %v3947 = vmul.f32 %v3653, %v3752
        %v3948 = vmul.f32 %v3654, %v3757
        %v3949 = vmul.f32 %v3655, %v3762
        %v3950 = vmul.f32 %v3656, %v3767
        %v3951 = vmul.f32 %v3657, %v3772
        %v3952 = vmul.f32 %v3658, %v3777
        %v3953 = vmul.f32 %v3659, %v3782
        %v3954 = vmul.f32 %v3660, %v3787
        %v3955 = vmul.f32 %v3661, %v3792
        %v3956 = vmul.f32 %v3662, %v3797
        %v3957 = vmul.f32 %v3663, %v3802
        %v3958 = vmul.f32 %v3664, %v3807
        %v3959 = vmul.f32 %v3665, %v3812
        %v3960 = vmul.f32 %v3666, %v3817
        %v3961 = vmul.f32 %v3667, %v3822
        %v3962 = vmul.f32 %v3668, %v3827
        %v3963 = vmul.f32 %v3669, %v3832
        %v3964 = vmul.f32 %v3670, %v3837
        %v3965 = vmul.f32 %v3671, %v3842
        %v3966 = vmul.f32 %v3672, %v3847
        %v3967 = vmul.f32 %v3673, %v3852
        %v3968 = vmul.f32 %v3674, %v3857
        %v3969 = vmul.f32 %v3675, %v3862
        %v3970 = vmul.f32 %v3676, %v3867
        %v3971 = vmul.f32 %v3677, %v3872
        %v3972 = vmul.f32 %v3678, %v3877
        %v3973 = vmul.f32 %v3679, %v3882
        %v3974 = vmul.f32 %v3680, %v3887
        %v3975 = vmul.f32 %v3681, %v3892
        %v3976 = vmul.f32 %v3682, %v3897
        %v3977 = vmul.f32 %v3683, %v3902
        %v3978 = vmul.f32 %v3684, %v3907
        %v3979 = vmul.f32 %v3685, %v3912
        %v3980 = vmul.f32 %v3686, %v3917
        %v3981 = vmul.f32 %v3687, %v3922
        %v3982 = vmul.f32 %v3688, %v3927
        %v3983 = vmul.f32 %v3689, %v3932
        %v3984 = vmul.f32 %v3690, %v3937
        %v3985 = vmul.f32 %v3691, %v3942
        %v3986 = vld [vmem:[#allocation2] sm:$0xff]
        %v3987 = vadd.f32 %v3944, %v3945
        %v3988 = vadd.f32 %v3987, %v3946
        %v3989 = vadd.f32 %v3988, %v3947
        %v3990 = vadd.f32 %v3989, %v3948
        %v3991 = vadd.f32 %v3990, %v3949
        %v3992 = vadd.f32 %v3991, %v3950
        %v3993 = vadd.f32 %v3992, %v3951
        %v3994 = vadd.f32 %v3993, %v3952
        %v3995 = vadd.f32 %v3994, %v3953
        %v3996 = vadd.f32 %v3995, %v3954
        %v3997 = vadd.f32 %v3996, %v3955
        %v3998 = vadd.f32 %v3997, %v3956
        %v3999 = vadd.f32 %v3998, %v3957
        %v4000 = vadd.f32 %v3999, %v3958
        %v4001 = vadd.f32 %v4000, %v3959
        %v4002 = vadd.f32 %v4001, %v3960
        %v4003 = vadd.f32 %v4002, %v3961
        %v4004 = vadd.f32 %v4003, %v3962
        %v4005 = vadd.f32 %v4004, %v3963
        %v4006 = vadd.f32 %v4005, %v3964
        %v4007 = vadd.f32 %v4006, %v3965
        %v4008 = vadd.f32 %v4007, %v3966
        %v4009 = vadd.f32 %v4008, %v3967
        %v4010 = vadd.f32 %v4009, %v3968
        %v4011 = vadd.f32 %v4010, %v3969
        %v4012 = vadd.f32 %v4011, %v3970
        %v4013 = vadd.f32 %v4012, %v3971
        %v4014 = vadd.f32 %v4013, %v3972
        %v4015 = vadd.f32 %v4014, %v3973
        %v4016 = vadd.f32 %v4015, %v3974
        %v4017 = vadd.f32 %v4016, %v3975
        %v4018 = vadd.f32 %v4017, %v3976
        %v4019 = vadd.f32 %v4018, %v3977
        %v4020 = vadd.f32 %v4019, %v3978
        %v4021 = vadd.f32 %v4020, %v3979
        %v4022 = vadd.f32 %v4021, %v3980
        %v4023 = vadd.f32 %v4022, %v3981
        %v4024 = vadd.f32 %v4023, %v3982
        %v4025 = vadd.f32 %v4024, %v3983
        %v4026 = vadd.f32 %v4025, %v3984
        %v4027 = vadd.f32 %v4026, %v3985
        %v4028 = vadd.f32 %v3986, %v4027
        %4029 = vst [vmem:[#allocation2] sm:$0xff] %v4028
        // Predicated region
        $region53: #{tpu_custom_call.1} parent=47 // pred_check
          %p4030 = pneg %p339
        $region54: #{tpu_custom_call.1} parent=47 // pred_check_branch
          %4032 = sbr.rel (%p4030) target = $region56
        $region55: #{tpu_custom_call.1} parent=47 // pred_region
          %v4033 = vld [vmem:[%s337] sm:$0x1]
          %v4034 = vld [vmem:[%s5] sm:$0xf]
          %v4035 = vld [vmem:[%s6] sm:$0x1]
          %v4037 = vsel %vm675, %v4033, 0
          %vm4039 = vcmask 1043456
          %v4041 = vsel %vm4039, %v4034, 0
          %4043 = vmatprep.subr.mxu0 0.0
          %4044 = vmatpush1.msra.mxu0 0.0
          %4045 = vmatprep.subr.mxu0 0.0
          %4046 = vmatpush1.msra.mxu0 0.0
          %4047 = vmatprep.subr.mxu0 0.0
          %4048 = vmatpush1.msra.mxu0 0.0
          %4049 = vmatprep.subr.mxu0 0.0
          %4050 = vmatpush1.msra.mxu0 0.0
          %4051 = vmatprep.subr.mxu0 0.0
          %4052 = vmatpush1.msra.mxu0 0.0
          %4053 = vmatprep.subr.mxu0 0.0
          %4054 = vmatpush1.msra.mxu0 0.0
          %4055 = vmatprep.subr.mxu0 0.0
          %4056 = vmatpush1.msra.mxu0 0.0
          %4057 = vmatprep.subr.mxu0 0.0
          %4058 = vmatpush1.msra.mxu0 0.0
          %4059 = vmatprep.subr.mxu0 0.0
          %4060 = vmatpush1.msra.mxu0 0.0
          %4061 = vmatprep.subr.mxu0 0.0
          %4062 = vmatpush1.msra.mxu0 0.0
          %4063 = vmatprep.subr.mxu0 0.0
          %4064 = vmatpush1.msra.mxu0 0.0
          %4065 = vmatprep.subr.mxu0 0.0
          %4066 = vmatpush1.msra.mxu0 0.0
          %4067 = vmatprep.subr.mxu0 0.0
          %4068 = vmatpush1.msra.mxu0 0.0
          %4069 = vmatprep.subr.mxu0 0.0
          %4070 = vmatpush1.msra.mxu0 0.0
          %4071 = vmatprep.subr.mxu0 0.0
          %4072 = vmatpush1.msra.mxu0 0.0
          %4073 = vmatprep.subr.mxu0 0.0
          %4074 = vmatpush1.msra.mxu0 %v4041
          %4075 = vmatprep.subr.mxu0 0.0
          %4076 = vmatpush2.msra.mxu0 0.0
          %4077 = vmatprep.subr.mxu0 0.0
          %4078 = vmatpush2.msra.mxu0 0.0
          %4079 = vmatprep.subr.mxu0 0.0
          %4080 = vmatpush2.msra.mxu0 0.0
          %4081 = vmatprep.subr.mxu0 0.0
          %4082 = vmatpush2.msra.mxu0 0.0
          %4083 = vmatprep.subr.mxu0 0.0
          %4084 = vmatpush2.msra.mxu0 0.0
          %4085 = vmatprep.subr.mxu0 0.0
          %4086 = vmatpush2.msra.mxu0 0.0
          %4087 = vmatprep.subr.mxu0 0.0
          %4088 = vmatpush2.msra.mxu0 0.0
          %4089 = vmatprep.subr.mxu0 0.0
          %4090 = vmatpush2.msra.mxu0 0.0
          %4091 = vmatprep.subr.mxu0 0.0
          %4092 = vmatpush2.msra.mxu0 0.0
          %4093 = vmatprep.subr.mxu0 0.0
          %4094 = vmatpush2.msra.mxu0 0.0
          %4095 = vmatprep.subr.mxu0 0.0
          %4096 = vmatpush2.msra.mxu0 0.0
          %4097 = vmatprep.subr.mxu0 0.0
          %4098 = vmatpush2.msra.mxu0 0.0
          %4099 = vmatprep.subr.mxu0 0.0
          %4100 = vmatpush2.msra.mxu0 0.0
          %4101 = vmatprep.subr.mxu0 0.0
          %4102 = vmatpush2.msra.mxu0 0.0
          %4103 = vmatprep.subr.mxu0 0.0
          %4104 = vmatpush2.msra.mxu0 0.0
          %4105 = vmatprep.subr.mxu0 0.0
          %4106 = vmatpush2.msra.mxu0 0.0
          %4107 = vmatprep.mubr.f32.mxu0 0.0
          %4108 = vmatmul.mubr.f32.gmra.mxu0 %v4037
          %v4109 = vpop.f32.mrf.mxu0
          %v4110 = vadd.f32 %v4035, %v4109
          %v4111 = vpop.f32.mrf.mxu0
          %4112 = vdwg.mxu0
          %vm4113 = vcmask 24576
          %v4114 = vsel %vm4113, %v4110, -inf
          %4115 = vmax.xlane.f32.xlu0 %v4114
          %v4116 = vpop.xlane.xlu0 %4115
          %v4117 = vsub.f32 %v4110, %v4116
          %v4118 = vmul.f32 %v4117, 1.442695
          %v4119 = vpow.pop %v4118
          %v4120 = vsel %vm4113, %v4119, 0.0
          %4121 = vadd.xlane.f32.xlu0 %v4120
          %v4122 = vpop.xlane.xlu0 %4121
          %v4123 = vrcp.pop %v4122
          %v4124 = vmul.f32 %v4119, %v4123
          %v4125 = vld [vmem:[#allocation2] sm:$0xff]
          %v4126 = vrot.slane %v4125, 4
          %v4127 = vadd.f32 %v4125, %v4126
          %v4128 = vrot.slane %v4127, 2
          %v4129 = vadd.f32 %v4127, %v4128
          %v4130 = vrot.slane %v4129, 1
          %v4131 = vadd.f32 %v4129, %v4130
          %v4132 = vmul.f32 %v4131, 0.00390625
          %4134 = vset.pattern.permute.xlu0 0
          %4135 = vperm.xlu0 %4134, %v4124
          %v4136 = vpop.permute.xlu0 %4135
          %v4138 = vmul.f32 %v4136, %v4132
          %v4139 = vadd.f32 %v4138, 0.0
          %4140 = vset.pattern.permute.xlu0 1
          %4141 = vperm.xlu0 %4140, %v4124
          %v4142 = vpop.permute.xlu0 %4141
          %v4144 = vmul.f32 %v4142, %v4132
          %4146 = vrot.lane.b32.xlu0 %v4144, 96
          %v4147 = vpop.permute.xlu0 %4146
          %v4149 = vadd.f32 %v4139, %v4147
          %4150 = vset.pattern.permute.xlu0 2
          %4151 = vperm.xlu0 %4150, %v4124
          %v4152 = vpop.permute.xlu0 %4151
          %v4154 = vmul.f32 %v4152, %v4132
          %4156 = vrot.lane.b32.xlu0 %v4154, 64
          %v4157 = vpop.permute.xlu0 %4156
          %v4159 = vadd.f32 %v4149, %v4157
          %4160 = vset.pattern.permute.xlu0 3
          %4161 = vperm.xlu0 %4160, %v4124
          %v4162 = vpop.permute.xlu0 %4161
          %v4164 = vmul.f32 %v4162, %v4132
          %4166 = vrot.lane.b32.xlu0 %v4164, 32
          %v4167 = vpop.permute.xlu0 %4166
          %v4169 = vadd.f32 %v4159, %v4167
          %4170 = vst [vmem:[%s319] sm:$0x1] 0.0
          %vm4171 = vcmask 253952
          %4172 = vst.msk [vmem:[%s319] sm:$0x1] %vm4171, %v4169
          %4173 = vrot.lane.b32.xlu0 %v4124, 32
          %v4174 = vpop.permute.xlu0 %4173
          %vm4176 = vcmask 286976
          %4177 = vst.msk [vmem:[%s319] sm:$0x1] %vm4176, %v4174
        $region56: #{tpu_custom_call.1} parent=47 // pred_fallthru
          _
        %s4178 = sand.u32 %s205, 1
        %s4179 = scalar_lea.sflag [#allocation4], %s4178
        %s4180 = sand.u32 %s205, 1
        %s4181 = scalar_lea.vmem [#allocation3], %s4180
        // Predicated region
        $region57: #{tpu_custom_call.1} parent=47 // pred_check
          %p4182 = pneg %p215
        $region58: #{tpu_custom_call.1} parent=47 // pred_check_branch
          %4184 = sbr.rel (%p4182) target = $region60
        $region59: #{tpu_custom_call.1} parent=47 // pred_region
          %s4186 = ssub.s32 16, 16
          %4187 = vsyncadd %s4179, %s4186
          %s4188 = smul.addr %s25, 16
          %s4189 = scalar_lea.hbm %s7, %s4188
          %s4191 = sshll.u32 %s4181, 4
          %s4192 = int_to_ptr.vmem [resolvable:$true] %s4191
          %4194 = dma.vmem_to_hbm [thread:$0]  %s4192, 16, %s4189, %s4179
        $region60: #{tpu_custom_call.1} parent=47 // pred_fallthru
          _
      $region48: #{tpu_custom_call.1} parent=5 // pred_fallthru
        _
      %p4195 = scmp.le.s32.totalorder 2, %s16
      // Predicated region
      $region61: #{tpu_custom_call.1} parent=5 // pred_check
        %p4196 = pneg %p4195
      $region62: #{tpu_custom_call.1} parent=5 // pred_check_branch
        %4198 = sbr.rel (%p4196) target = $region64
      $region63: #{tpu_custom_call.1} parent=5 // pred_region
        %s4199 = ssub.s32 %s16, 2
        // Predicated region
        $region65: #{tpu_custom_call.1} parent=63 // pred_check
          %p4200 = pneg %p221
        $region66: #{tpu_custom_call.1} parent=63 // pred_check_branch
          %4202 = sbr.rel (%p4200) target = $region68
        $region67: #{tpu_custom_call.1} parent=63 // pred_region
          %s4203 = sand.u32 %s206, 1
          %s4204 = scalar_lea.sflag [#allocation4], %s4203
          %s4205 = sand.u32 %s206, 1
          %s4206 = scalar_lea.vmem [#allocation3], %s4205
          %4207 = dma.done %s4204, 16
        $region68: #{tpu_custom_call.1} parent=63 // pred_fallthru
          _
      $region64: #{tpu_custom_call.1} parent=5 // pred_fallthru
        _
    $region6: #{tpu_custom_call.1} parent=1 // loop_footer
      %s20 = sadd.s32 1, %s16
    $region7: #{tpu_custom_call.1} parent=1 // loop_footer_branch
      %15 = sbr.rel target = $region3
    $region8: #{tpu_custom_call.1} parent=1 // loop_exit
      _
    %4208 = vsyncpa [#allocation4], 1
    %s4209 = scalar_lea.sflag [#allocation4], 1
    %4210 = vsyncpa %s4209, 1

</llo_original>
